<compile_context>
chip_gen: v6e
topology: v6e:2x2x1
jax: 0.10.0
libtpu: 0.0.40
codegen_flags: <defaults>
</compile_context>

<pallas_src>
import numpy as np
from itertools import chain, combinations
from itertools import combinations_with_replacement as combinations_w_r

import jax
import jax.numpy as jnp
from jax.experimental import pallas as pl
from jax.experimental.pallas import tpu as pltpu

# Module hyper-parameters (defaults of the PyTorch module).
N_T = 178
N_COMMON = 200
N_HIDDEN = 100
DEGREE = 0
INTERACTION_ONLY = True
TB = 256  # batch tile: multiple of 128 (v5e MXU rows) and 256 (v6e/v7x MXU rows)


def _combinations(n_features, degree, interaction_only):
    comb = combinations if interaction_only else combinations_w_r
    return chain.from_iterable(comb(range(n_features), i) for i in range(0, degree + 1))


def _elu(v):
    # ELU(alpha=1): x if x > 0 else exp(x) - 1   (exp goes to the EUP slot)
    return jnp.where(v > 0, v, jnp.exp(v) - 1.0)


def _bf16(a):
    return a.astype(jnp.bfloat16)


# --------------------------------------------------------------------------
# Kernel: one batch tile of the whole forward pass.
# --------------------------------------------------------------------------
def learner_kernel(x_ref,
                   w1, w2, w3, wh1, wh2, wh3,     # bf16 weights (fused heads)
                   b1, b2, b3, bh1, bh2, bh3,     # f32 biases (poly consts folded in)
                   out_ref):
    x = x_ref[...]                                 # (TB, n_t) f32

    # common MLP (dropout p=0 -> identity); bf16 MXU inputs, f32 accumulation.
    h = _elu(jnp.dot(_bf16(x), w1[...], preferred_element_type=jnp.float32) + b1[...])
    h = _elu(jnp.dot(_bf16(h), w2[...], preferred_element_type=jnp.float32) + b2[...])
    feats = _elu(jnp.dot(_bf16(h), w3[...], preferred_element_type=jnp.float32) + b3[...])

    # fused head layer 1: columns = [riesz | reg0_h1 | reg1_h1]  -> (TB, 201)
    z1 = jnp.dot(_bf16(feats), wh1[...], preferred_element_type=jnp.float32) + bh1[...]
    riesz = z1[:, 0:1]            # pre-activation riesz head (+ folded riesz_poly const)
    h1 = _elu(z1)                 # riesz column hits a zero row of wh2 -> no effect

    # fused head layer 2: blockdiag(w0b, w1b) (+ zero riesz row)  -> (TB, 200)
    z2 = jnp.dot(_bf16(h1), wh2[...], preferred_element_type=jnp.float32) + bh2[...]
    h2 = _elu(z2)

    # fused head layer 3: blockdiag(w0c, w1c) -> (TB, 2): col0 = reg_nn0, col1 = reg_nn1
    z3 = jnp.dot(_bf16(h2), wh3[...], preferred_element_type=jnp.float32) + bh3[...]

    # treatment-gated mixture (reg_poly const already folded into both cols of bh3)
    x0 = x[:, 0:1]
    reg = z3[:, 0:1] * (1.0 - x0) + z3[:, 1:2] * x0

    out_ref[:, 0:1] = reg
    out_ref[:, 1:2] = riesz


# --------------------------------------------------------------------------
# Parameter fusion (done once, outside the pallas_call).
# --------------------------------------------------------------------------
def fuse_params(params):
    (w1, b1, w2, b2, w3, b3, wr, br, wp, bp,
     w0a, b0a, w0b, b0b, w0c, b0c,
     w1a, b1a, w1b, b1b, w1c, b1c, wq, bq) = params

    n_common = w1.shape[1]
    n_hidden = w0a.shape[1]

    # Head layer 1: [riesz | reg0 | reg1]  (n_common, 1 + 2*n_hidden)
    Wh1 = jnp.concatenate([wr, w0a, w1a], axis=1)
    Bh1 = jnp.concatenate([br, b0a, b1a], axis=1)

    # Head layer 2: zero row for the riesz column, then blockdiag(w0b, w1b).
    Wh2 = jnp.zeros((1 + 2 * n_hidden, 2 * n_hidden), jnp.float32)
    Wh2 = Wh2.at[1:1 + n_hidden, :n_hidden].set(w0b)
    Wh2 = Wh2.at[1 + n_hidden:, n_hidden:].set(w1b)
    Bh2 = jnp.concatenate([b0b, b1b], axis=1)

    # Head layer 3: blockdiag(w0c, w1c) -> (2*n_hidden, 2)
    Wh3 = jnp.zeros((2 * n_hidden, 2), jnp.float32)
    Wh3 = Wh3.at[:n_hidden, 0:1].set(w0c)
    Wh3 = Wh3.at[n_hidden:, 1:2].set(w1c)
    Bh3 = jnp.concatenate([b0c, b1c], axis=1)

    # degree = 0: poly == column of ones, so the poly heads are scalar constants.
    #   riesz_poly(1) = wp[0,0] + bp  -> fold into the riesz column of Bh1
    #   reg_poly(1)   = wq[0,0] + bq  -> fold into BOTH columns of Bh3, since
    #   (r0+c)(1-t) + (r1+c)t == r0(1-t) + r1 t + c.
    # TODO(synk): for degree > 0 the poly heads are data-dependent; compute
    # `poly @ wp + bp` / `poly @ wq + bq` in the wrapper and add them to the
    # kernel's output columns (not needed for the default degree = 0).
    assert wp.shape == (1, 1) and wq.shape == (1, 1), "only degree=0 is fused"
    Bh1 = Bh1.at[0, 0].add(wp[0, 0] + bp[0, 0])
    Bh3 = Bh3 + (wq[0, 0] + bq[0, 0])

    weights = tuple(_bf16(w) for w in (w1, w2, w3, Wh1, Wh2, Wh3))
    biases = (b1, b2, b3, Bh1, Bh2, Bh3)
    return weights + biases


# --------------------------------------------------------------------------
# Wrapper: pad batch to a multiple of TB, tile over batch.
# --------------------------------------------------------------------------
def learner_forward(x, fused_params, *, tb=TB):
    B, n_t = x.shape
    Bp = pl.cdiv(B, tb) * tb
    if Bp != B:
        x = jnp.pad(x, ((0, Bp - B), (0, 0)))

    weights = fused_params[:6]
    biases = fused_params[6:]

    def full_spec(arr):
        nd = arr.ndim
        return pl.BlockSpec(arr.shape, lambda i, nd=nd: (0,) * nd)

    in_specs = ([pl.BlockSpec((tb, n_t), lambda i: (i, 0))]
                + [full_spec(p) for p in weights]
                + [full_spec(p) for p in biases])

    out = pl.pallas_call(
        learner_kernel,
        out_shape=jax.ShapeDtypeStruct((Bp, 2), jnp.float32),
        grid=(Bp // tb,),
        in_specs=in_specs,
        out_specs=pl.BlockSpec((tb, 2), lambda i: (i, 0)),
        compiler_params=pltpu.CompilerParams(dimension_semantics=("parallel",)),
    )(x, *weights, *biases)
    return out[:B]


# --------------------------------------------------------------------------
# Reference (pure JAX, mirrors the PyTorch module). `dot` selects precision.
# --------------------------------------------------------------------------
def reference_forward(x, poly, params, dot):
    (w1, b1, w2, b2, w3, b3, wr, br, wp, bp,
     w0a, b0a, w0b, b0b, w0c, b0c,
     w1a, b1a, w1b, b1b, w1c, b1c, wq, bq) = params
    h = _elu(dot(x, w1) + b1)
    h = _elu(dot(h, w2) + b2)
    feats = _elu(dot(h, w3) + b3)
    riesz = dot(feats, wr) + br + poly @ wp + bp
    r0 = _elu(dot(feats, w0a) + b0a)
    r0 = _elu(dot(r0, w0b) + b0b)
    r0 = dot(r0, w0c) + b0c
    r1 = _elu(dot(feats, w1a) + b1a)
    r1 = _elu(dot(r1, w1b) + b1b)
    r1 = dot(r1, w1c) + b1c
    x0 = x[:, 0:1]
    reg = r0 * (1.0 - x0) + r1 * x0 + poly @ wq + bq
    return jnp.concatenate([reg, riesz], axis=1)


def compute_poly(x, monomials):
    cols = []
    for t in monomials:
        if len(t) == 0:
            cols.append(jnp.ones((x.shape[0], 1), jnp.float32))
        else:
            cols.append(jnp.prod(x[:, list(t)], axis=1, keepdims=True))
    return jnp.concatenate(cols, axis=1)


def init_params(key, n_t, n_common, n_hidden, n_mono):
    """PyTorch-style uniform(+/- 1/sqrt(fan_in)) init; biases kept 2D (1, out)."""
    shapes = [
        (n_t, n_common), (n_common, n_common), (n_common, n_common),  # common
        (n_common, 1),                                                # riesz_nn
        (n_mono, 1),                                                  # riesz_poly
        (n_common, n_hidden), (n_hidden, n_hidden), (n_hidden, 1),    # reg_nn0
        (n_common, n_hidden), (n_hidden, n_hidden), (n_hidden, 1),    # reg_nn1
        (n_mono, 1),                                                  # reg_poly
    ]
    keys = jax.random.split(key, len(shapes))
    params = []
    for k, (fi, fo) in zip(keys, shapes):
        kw, kb = jax.random.split(k)
        bound = 1.0 / np.sqrt(fi)
        params.append(jax.random.uniform(kw, (fi, fo), jnp.float32, -bound, bound))
        params.append(jax.random.uniform(kb, (1, fo), jnp.float32, -bound, bound))
    return tuple(params)


if __name__ == "__main__":
    key = jax.random.PRNGKey(0)
    kx, kp = jax.random.split(key)

    # B = 384 -> padded to 512 -> 2 parallel grid steps of 256 rows
    # (exercises the padding path and keeps both v7x TensorCores busy).
    B = 384
    x = jax.random.normal(kx, (B, N_T), dtype=jnp.float32)

    monomials = list(_combinations(N_T, DEGREE, INTERACTION_ONLY))  # [()] for degree=0
    poly = compute_poly(x, monomials)                               # (B, 1) of ones

    params = init_params(kp, N_T, N_COMMON, N_HIDDEN, len(monomials))
    fused = fuse_params(params)                                     # concat/blockdiag once

    out = jax.jit(learner_forward)(x, fused)
    out = jax.block_until_ready(out)
    out = np.asarray(out)

    # Tight check: reference with the same matmul precision (bf16 inputs, f32 acc).
    bf16_dot = lambda a, b: jnp.dot(_bf16(a), _bf16(b), preferred_element_type=jnp.float32)
    ref_bf16 = np.asarray(reference_forward(x, poly, params, dot=bf16_dot))
    np.testing.assert_allclose(out, ref_bf16, rtol=2e-3, atol=2e-3)

    # Loose sanity check against the full-f32 module semantics
    # (slack only accounts for bf16 matmul-input rounding).
    f32_dot = lambda a, b: jnp.dot(a, b, preferred_element_type=jnp.float32)
    ref_f32 = np.asarray(reference_forward(x, poly, params, dot=f32_dot))
    np.testing.assert_allclose(out, ref_f32, rtol=1e-1, atol=5e-2)

    print("KERNEL_OK")
</pallas_src>

<mosaic_0001>
module attributes {stable_mosaic.version = 11 : i64} {
  func.func @learner_kernel(%arg0: i32, %arg1: memref<256x178xf32, #tpu.memory_space<vmem>>, %arg2: memref<178x200xbf16, #tpu.memory_space<vmem>>, %arg3: memref<200x200xbf16, #tpu.memory_space<vmem>>, %arg4: memref<200x200xbf16, #tpu.memory_space<vmem>>, %arg5: memref<200x201xbf16, #tpu.memory_space<vmem>>, %arg6: memref<201x200xbf16, #tpu.memory_space<vmem>>, %arg7: memref<200x2xbf16, #tpu.memory_space<vmem>>, %arg8: memref<1x200xf32, #tpu.memory_space<vmem>>, %arg9: memref<1x200xf32, #tpu.memory_space<vmem>>, %arg10: memref<1x200xf32, #tpu.memory_space<vmem>>, %arg11: memref<1x201xf32, #tpu.memory_space<vmem>>, %arg12: memref<1x200xf32, #tpu.memory_space<vmem>>, %arg13: memref<1x2xf32, #tpu.memory_space<vmem>>, %arg14: memref<256x2xf32, #tpu.memory_space<vmem>>) attributes {dimension_semantics = [#tpu.dimension_semantics<parallel>], iteration_bounds = array<i64: 2>, scalar_prefetch = 0 : i64, scratch_operands = 0 : i64, tpu.core_type = #tpu.core_type<tc>, window_params = [{transform_indices = @transform_0, window_bounds = array<i64: 256, 178>}, {pipeline_mode = #tpu.pipeline_mode<synchronous>, transform_indices = @transform_1, window_bounds = array<i64: 178, 200>}, {pipeline_mode = #tpu.pipeline_mode<synchronous>, transform_indices = @transform_2, window_bounds = array<i64: 200, 200>}, {pipeline_mode = #tpu.pipeline_mode<synchronous>, transform_indices = @transform_3, window_bounds = array<i64: 200, 200>}, {pipeline_mode = #tpu.pipeline_mode<synchronous>, transform_indices = @transform_4, window_bounds = array<i64: 200, 201>}, {pipeline_mode = #tpu.pipeline_mode<synchronous>, transform_indices = @transform_5, window_bounds = array<i64: 201, 200>}, {pipeline_mode = #tpu.pipeline_mode<synchronous>, transform_indices = @transform_6, window_bounds = array<i64: 200, 2>}, {pipeline_mode = #tpu.pipeline_mode<synchronous>, transform_indices = @transform_7, window_bounds = array<i64: 1, 200>}, {pipeline_mode = #tpu.pipeline_mode<synchronous>, transform_indices = @transform_8, window_bounds = array<i64: 1, 200>}, {pipeline_mode = #tpu.pipeline_mode<synchronous>, transform_indices = @transform_9, window_bounds = array<i64: 1, 200>}, {pipeline_mode = #tpu.pipeline_mode<synchronous>, transform_indices = @transform_10, window_bounds = array<i64: 1, 201>}, {pipeline_mode = #tpu.pipeline_mode<synchronous>, transform_indices = @transform_11, window_bounds = array<i64: 1, 200>}, {pipeline_mode = #tpu.pipeline_mode<synchronous>, transform_indices = @transform_12, window_bounds = array<i64: 1, 2>}, {transform_indices = @transform_13, window_bounds = array<i64: 256, 2>}]} {
    %c0 = arith.constant 0 : index
    %c0_0 = arith.constant 0 : index
    %0 = vector.load %arg1[%c0, %c0_0] : memref<256x178xf32, #tpu.memory_space<vmem>>, vector<256x178xf32>
    %1 = arith.truncf %0 : vector<256x178xf32> to vector<256x178xbf16>
    %c0_1 = arith.constant 0 : index
    %c0_2 = arith.constant 0 : index
    %2 = vector.load %arg2[%c0_1, %c0_2] : memref<178x200xbf16, #tpu.memory_space<vmem>>, vector<178x200xbf16>
    %cst = arith.constant dense<0.000000e+00> : vector<256x200xf32>
    %3 = tpu.matmul %1, %2, %cst {dimension_numbers = #tpu.dot_dimension_numbers<[1], [0], [0], [1], [0, 0, 1, 1], [], []>} : vector<256x178xbf16>, vector<178x200xbf16>, vector<256x200xf32> -> vector<256x200xf32>
    %c0_3 = arith.constant 0 : index
    %c0_4 = arith.constant 0 : index
    %4 = vector.load %arg8[%c0_3, %c0_4] : memref<1x200xf32, #tpu.memory_space<vmem>>, vector<1x200xf32>
    %5 = vector.broadcast %4 : vector<1x200xf32> to vector<256x200xf32>
    %6 = arith.addf %3, %5 : vector<256x200xf32>
    %cst_5 = arith.constant 0.000000e+00 : f32
    %7 = vector.broadcast %cst_5 : f32 to vector<256x200xf32>
    %8 = arith.cmpf ogt, %6, %7 : vector<256x200xf32>
    %9 = math.exp %6 : vector<256x200xf32>
    %cst_6 = arith.constant 1.000000e+00 : f32
    %10 = vector.broadcast %cst_6 : f32 to vector<256x200xf32>
    %11 = arith.subf %9, %10 : vector<256x200xf32>
    %12 = arith.select %8, %6, %11 : vector<256x200xi1>, vector<256x200xf32>
    %13 = arith.truncf %12 : vector<256x200xf32> to vector<256x200xbf16>
    %c0_7 = arith.constant 0 : index
    %c0_8 = arith.constant 0 : index
    %14 = vector.load %arg3[%c0_7, %c0_8] : memref<200x200xbf16, #tpu.memory_space<vmem>>, vector<200x200xbf16>
    %cst_9 = arith.constant dense<0.000000e+00> : vector<256x200xf32>
    %15 = tpu.matmul %13, %14, %cst_9 {dimension_numbers = #tpu.dot_dimension_numbers<[1], [0], [0], [1], [0, 0, 1, 1], [], []>} : vector<256x200xbf16>, vector<200x200xbf16>, vector<256x200xf32> -> vector<256x200xf32>
    %c0_10 = arith.constant 0 : index
    %c0_11 = arith.constant 0 : index
    %16 = vector.load %arg9[%c0_10, %c0_11] : memref<1x200xf32, #tpu.memory_space<vmem>>, vector<1x200xf32>
    %17 = vector.broadcast %16 : vector<1x200xf32> to vector<256x200xf32>
    %18 = arith.addf %15, %17 : vector<256x200xf32>
    %cst_12 = arith.constant 0.000000e+00 : f32
    %19 = vector.broadcast %cst_12 : f32 to vector<256x200xf32>
    %20 = arith.cmpf ogt, %18, %19 : vector<256x200xf32>
    %21 = math.exp %18 : vector<256x200xf32>
    %cst_13 = arith.constant 1.000000e+00 : f32
    %22 = vector.broadcast %cst_13 : f32 to vector<256x200xf32>
    %23 = arith.subf %21, %22 : vector<256x200xf32>
    %24 = arith.select %20, %18, %23 : vector<256x200xi1>, vector<256x200xf32>
    %25 = arith.truncf %24 : vector<256x200xf32> to vector<256x200xbf16>
    %c0_14 = arith.constant 0 : index
    %c0_15 = arith.constant 0 : index
    %26 = vector.load %arg4[%c0_14, %c0_15] : memref<200x200xbf16, #tpu.memory_space<vmem>>, vector<200x200xbf16>
    %cst_16 = arith.constant dense<0.000000e+00> : vector<256x200xf32>
    %27 = tpu.matmul %25, %26, %cst_16 {dimension_numbers = #tpu.dot_dimension_numbers<[1], [0], [0], [1], [0, 0, 1, 1], [], []>} : vector<256x200xbf16>, vector<200x200xbf16>, vector<256x200xf32> -> vector<256x200xf32>
    %c0_17 = arith.constant 0 : index
    %c0_18 = arith.constant 0 : index
    %28 = vector.load %arg10[%c0_17, %c0_18] : memref<1x200xf32, #tpu.memory_space<vmem>>, vector<1x200xf32>
    %29 = vector.broadcast %28 : vector<1x200xf32> to vector<256x200xf32>
    %30 = arith.addf %27, %29 : vector<256x200xf32>
    %cst_19 = arith.constant 0.000000e+00 : f32
    %31 = vector.broadcast %cst_19 : f32 to vector<256x200xf32>
    %32 = arith.cmpf ogt, %30, %31 : vector<256x200xf32>
    %33 = math.exp %30 : vector<256x200xf32>
    %cst_20 = arith.constant 1.000000e+00 : f32
    %34 = vector.broadcast %cst_20 : f32 to vector<256x200xf32>
    %35 = arith.subf %33, %34 : vector<256x200xf32>
    %36 = arith.select %32, %30, %35 : vector<256x200xi1>, vector<256x200xf32>
    %37 = arith.truncf %36 : vector<256x200xf32> to vector<256x200xbf16>
    %c0_21 = arith.constant 0 : index
    %c0_22 = arith.constant 0 : index
    %38 = vector.load %arg5[%c0_21, %c0_22] : memref<200x201xbf16, #tpu.memory_space<vmem>>, vector<200x201xbf16>
    %cst_23 = arith.constant dense<0.000000e+00> : vector<256x201xf32>
    %39 = tpu.matmul %37, %38, %cst_23 {dimension_numbers = #tpu.dot_dimension_numbers<[1], [0], [0], [1], [0, 0, 1, 1], [], []>} : vector<256x200xbf16>, vector<200x201xbf16>, vector<256x201xf32> -> vector<256x201xf32>
    %c0_24 = arith.constant 0 : index
    %c0_25 = arith.constant 0 : index
    %40 = vector.load %arg11[%c0_24, %c0_25] : memref<1x201xf32, #tpu.memory_space<vmem>>, vector<1x201xf32>
    %41 = vector.broadcast %40 : vector<1x201xf32> to vector<256x201xf32>
    %42 = arith.addf %39, %41 : vector<256x201xf32>
    %43 = vector.extract_strided_slice %42 {offsets = [0, 0], sizes = [256, 1], strides = [1, 1]} : vector<256x201xf32> to vector<256x1xf32>
    %cst_26 = arith.constant 0.000000e+00 : f32
    %44 = vector.broadcast %cst_26 : f32 to vector<256x201xf32>
    %45 = arith.cmpf ogt, %42, %44 : vector<256x201xf32>
    %46 = math.exp %42 : vector<256x201xf32>
    %cst_27 = arith.constant 1.000000e+00 : f32
    %47 = vector.broadcast %cst_27 : f32 to vector<256x201xf32>
    %48 = arith.subf %46, %47 : vector<256x201xf32>
    %49 = arith.select %45, %42, %48 : vector<256x201xi1>, vector<256x201xf32>
    %50 = arith.truncf %49 : vector<256x201xf32> to vector<256x201xbf16>
    %c0_28 = arith.constant 0 : index
    %c0_29 = arith.constant 0 : index
    %51 = vector.load %arg6[%c0_28, %c0_29] : memref<201x200xbf16, #tpu.memory_space<vmem>>, vector<201x200xbf16>
    %cst_30 = arith.constant dense<0.000000e+00> : vector<256x200xf32>
    %52 = tpu.matmul %50, %51, %cst_30 {dimension_numbers = #tpu.dot_dimension_numbers<[1], [0], [0], [1], [0, 0, 1, 1], [], []>} : vector<256x201xbf16>, vector<201x200xbf16>, vector<256x200xf32> -> vector<256x200xf32>
    %c0_31 = arith.constant 0 : index
    %c0_32 = arith.constant 0 : index
    %53 = vector.load %arg12[%c0_31, %c0_32] : memref<1x200xf32, #tpu.memory_space<vmem>>, vector<1x200xf32>
    %54 = vector.broadcast %53 : vector<1x200xf32> to vector<256x200xf32>
    %55 = arith.addf %52, %54 : vector<256x200xf32>
    %cst_33 = arith.constant 0.000000e+00 : f32
    %56 = vector.broadcast %cst_33 : f32 to vector<256x200xf32>
    %57 = arith.cmpf ogt, %55, %56 : vector<256x200xf32>
    %58 = math.exp %55 : vector<256x200xf32>
    %cst_34 = arith.constant 1.000000e+00 : f32
    %59 = vector.broadcast %cst_34 : f32 to vector<256x200xf32>
    %60 = arith.subf %58, %59 : vector<256x200xf32>
    %61 = arith.select %57, %55, %60 : vector<256x200xi1>, vector<256x200xf32>
    %62 = arith.truncf %61 : vector<256x200xf32> to vector<256x200xbf16>
    %c0_35 = arith.constant 0 : index
    %c0_36 = arith.constant 0 : index
    %63 = vector.load %arg7[%c0_35, %c0_36] : memref<200x2xbf16, #tpu.memory_space<vmem>>, vector<200x2xbf16>
    %cst_37 = arith.constant dense<0.000000e+00> : vector<256x2xf32>
    %64 = tpu.matmul %62, %63, %cst_37 {dimension_numbers = #tpu.dot_dimension_numbers<[1], [0], [0], [1], [0, 0, 1, 1], [], []>} : vector<256x200xbf16>, vector<200x2xbf16>, vector<256x2xf32> -> vector<256x2xf32>
    %c0_38 = arith.constant 0 : index
    %c0_39 = arith.constant 0 : index
    %65 = vector.load %arg13[%c0_38, %c0_39] : memref<1x2xf32, #tpu.memory_space<vmem>>, vector<1x2xf32>
    %66 = vector.broadcast %65 : vector<1x2xf32> to vector<256x2xf32>
    %67 = arith.addf %64, %66 : vector<256x2xf32>
    %68 = vector.extract_strided_slice %0 {offsets = [0, 0], sizes = [256, 1], strides = [1, 1]} : vector<256x178xf32> to vector<256x1xf32>
    %69 = vector.extract_strided_slice %67 {offsets = [0, 0], sizes = [256, 1], strides = [1, 1]} : vector<256x2xf32> to vector<256x1xf32>
    %cst_40 = arith.constant 1.000000e+00 : f32
    %70 = vector.broadcast %cst_40 : f32 to vector<256x1xf32>
    %71 = arith.subf %70, %68 : vector<256x1xf32>
    %72 = arith.mulf %69, %71 : vector<256x1xf32>
    %73 = vector.extract_strided_slice %67 {offsets = [0, 1], sizes = [256, 1], strides = [1, 1]} : vector<256x2xf32> to vector<256x1xf32>
    %74 = arith.mulf %73, %68 : vector<256x1xf32>
    %75 = arith.addf %72, %74 : vector<256x1xf32>
    %c0_41 = arith.constant 0 : index
    %c0_42 = arith.constant 0 : index
    %76 = vector.load %arg14[%c0_41, %c0_42] : memref<256x2xf32, #tpu.memory_space<vmem>>, vector<256x1xf32>
    tpu.vector_store %arg14[%c0_41, %c0_42], %75 {strides = array<i32>} : memref<256x2xf32, #tpu.memory_space<vmem>>, vector<256x1xf32>,
    %c0_43 = arith.constant 0 : index
    %c1 = arith.constant 1 : index
    %77 = vector.load %arg14[%c0_43, %c1] : memref<256x2xf32, #tpu.memory_space<vmem>>, vector<256x1xf32>
    tpu.vector_store %arg14[%c0_43, %c1], %43 {strides = array<i32>} : memref<256x2xf32, #tpu.memory_space<vmem>>, vector<256x1xf32>,
    return
  }
  func.func @transform_0(%arg0: i32) -> (i32, i32) {
    %c0_i32 = arith.constant 0 : i32
    %c0_i32_0 = arith.constant 0 : i32
    return %arg0, %c0_i32 : i32, i32
  }
  func.func @transform_1(%arg0: i32) -> (i32, i32) {
    %c0_i32 = arith.constant 0 : i32
    %c0_i32_0 = arith.constant 0 : i32
    %c0_i32_1 = arith.constant 0 : i32
    return %c0_i32, %c0_i32_0 : i32, i32
  }
  func.func @transform_2(%arg0: i32) -> (i32, i32) {
    %c0_i32 = arith.constant 0 : i32
    %c0_i32_0 = arith.constant 0 : i32
    %c0_i32_1 = arith.constant 0 : i32
    return %c0_i32, %c0_i32_0 : i32, i32
  }
  func.func @transform_3(%arg0: i32) -> (i32, i32) {
    %c0_i32 = arith.constant 0 : i32
    %c0_i32_0 = arith.constant 0 : i32
    %c0_i32_1 = arith.constant 0 : i32
    return %c0_i32, %c0_i32_0 : i32, i32
  }
  func.func @transform_4(%arg0: i32) -> (i32, i32) {
    %c0_i32 = arith.constant 0 : i32
    %c0_i32_0 = arith.constant 0 : i32
    %c0_i32_1 = arith.constant 0 : i32
    return %c0_i32, %c0_i32_0 : i32, i32
  }
  func.func @transform_5(%arg0: i32) -> (i32, i32) {
    %c0_i32 = arith.constant 0 : i32
    %c0_i32_0 = arith.constant 0 : i32
    %c0_i32_1 = arith.constant 0 : i32
    return %c0_i32, %c0_i32_0 : i32, i32
  }
  func.func @transform_6(%arg0: i32) -> (i32, i32) {
    %c0_i32 = arith.constant 0 : i32
    %c0_i32_0 = arith.constant 0 : i32
    %c0_i32_1 = arith.constant 0 : i32
    return %c0_i32, %c0_i32_0 : i32, i32
  }
  func.func @transform_7(%arg0: i32) -> (i32, i32) {
    %c0_i32 = arith.constant 0 : i32
    %c0_i32_0 = arith.constant 0 : i32
    %c0_i32_1 = arith.constant 0 : i32
    return %c0_i32, %c0_i32_0 : i32, i32
  }
  func.func @transform_8(%arg0: i32) -> (i32, i32) {
    %c0_i32 = arith.constant 0 : i32
    %c0_i32_0 = arith.constant 0 : i32
    %c0_i32_1 = arith.constant 0 : i32
    return %c0_i32, %c0_i32_0 : i32, i32
  }
  func.func @transform_9(%arg0: i32) -> (i32, i32) {
    %c0_i32 = arith.constant 0 : i32
    %c0_i32_0 = arith.constant 0 : i32
    %c0_i32_1 = arith.constant 0 : i32
    return %c0_i32, %c0_i32_0 : i32, i32
  }
  func.func @transform_10(%arg0: i32) -> (i32, i32) {
    %c0_i32 = arith.constant 0 : i32
    %c0_i32_0 = arith.constant 0 : i32
    %c0_i32_1 = arith.constant 0 : i32
    return %c0_i32, %c0_i32_0 : i32, i32
  }
  func.func @transform_11(%arg0: i32) -> (i32, i32) {
    %c0_i32 = arith.constant 0 : i32
    %c0_i32_0 = arith.constant 0 : i32
    %c0_i32_1 = arith.constant 0 : i32
    return %c0_i32, %c0_i32_0 : i32, i32
  }
  func.func @transform_12(%arg0: i32) -> (i32, i32) {
    %c0_i32 = arith.constant 0 : i32
    %c0_i32_0 = arith.constant 0 : i32
    %c0_i32_1 = arith.constant 0 : i32
    return %c0_i32, %c0_i32_0 : i32, i32
  }
  func.func @transform_13(%arg0: i32) -> (i32, i32) {
    %c0_i32 = arith.constant 0 : i32
    %c0_i32_0 = arith.constant 0 : i32
    return %arg0, %c0_i32 : i32, i32
  }
}

</mosaic_0001>

<llo_original>
// kernel: learner_forward.1
$region0: #{learner_forward.1}
  #allocation0 [shape = 'u32[]', space=smem, size = 0x4, offset = 0x4, fixed_abs, tag = 'smem constant byte address 0x4 - core index']
  #allocation1 [shape = 'u32[144,128]{1,0:T(1,128)}', space=vmem, size = 0x12000, scoped, tag = 'internal scratch']
  %s0 = inlined_call_operand.vmem [shape: f32[512,178], index: 0, kind: input, shape index: {}]
  %s1 = inlined_call_operand.vmem [shape: bf16[178,200], index: 1, kind: input, shape index: {}]
  %s2 = inlined_call_operand.vmem [shape: bf16[200,200], index: 2, kind: input, shape index: {}]
  %s3 = inlined_call_operand.vmem [shape: bf16[200,200], index: 3, kind: input, shape index: {}]
  %s4 = inlined_call_operand.vmem [shape: bf16[200,201], index: 4, kind: input, shape index: {}]
  %s5 = inlined_call_operand.vmem [shape: bf16[201,200], index: 5, kind: input, shape index: {}]
  %s6 = inlined_call_operand.vmem [shape: bf16[200,2], index: 6, kind: input, shape index: {}]
  %s7 = inlined_call_operand.vmem [shape: f32[1,200], index: 7, kind: input, shape index: {}]
  %s8 = inlined_call_operand.vmem [shape: f32[1,200], index: 8, kind: input, shape index: {}]
  %s9 = inlined_call_operand.vmem [shape: f32[1,200], index: 9, kind: input, shape index: {}]
  %s10 = inlined_call_operand.vmem [shape: f32[1,201], index: 10, kind: input, shape index: {}]
  %s11 = inlined_call_operand.vmem [shape: f32[1,200], index: 11, kind: input, shape index: {}]
  %s12 = inlined_call_operand.vmem [shape: f32[1,2], index: 12, kind: input, shape index: {}]
  %s13 = inlined_call_operand.vmem [shape: f32[512,2], index: 13, kind: output, shape index: {}]
  %s14 = sld [smem:[#allocation0]]
  $region85: #{learner_forward.1} parent=0
    _
  %s16 = ssub.s32 1, %s14
  %s17 = scalar_select 0, %s16, %s14
  loop: start=0, step=1, limit=4
  $region2: #{learner_forward.1} parent=0 // loop_pre_header
    _
  $region3: #{learner_forward.1} parent=0 // loop_header
    %s19 = sphi 0, %s23
    %p20 = scmp.ge.s32.totalorder %s19, 4
    %s29 = sphi 0, %s31
    %s32 = sphi 0, %s29
    %s33 = sphi 0, %s32
    %s49 = sphi 0, %s33
    %s53 = sphi 0, %s53
    %s55 = sphi 0, %s53
    %s56 = sphi 0, %s55
    %s70 = sphi 0, %s56
    %s74 = sphi 0, %s74
    %s76 = sphi 0, %s74
    %s77 = sphi 0, %s76
    %s91 = sphi 0, %s77
    %s95 = sphi 0, %s95
    %s97 = sphi 0, %s95
    %s98 = sphi 0, %s97
    %s112 = sphi 0, %s98
    %s116 = sphi 0, %s116
    %s118 = sphi 0, %s116
    %s119 = sphi 0, %s118
    %s133 = sphi 0, %s119
    %s137 = sphi 0, %s137
    %s139 = sphi 0, %s137
    %s140 = sphi 0, %s139
    %s154 = sphi 0, %s140
    %s158 = sphi 0, %s158
    %s160 = sphi 0, %s158
    %s161 = sphi 0, %s160
    %s175 = sphi 0, %s161
    %s179 = sphi 0, %s179
    %s181 = sphi 0, %s179
    %s182 = sphi 0, %s181
    %s196 = sphi 0, %s182
    %s200 = sphi 0, %s200
    %s202 = sphi 0, %s200
    %s203 = sphi 0, %s202
    %s217 = sphi 0, %s203
    %s221 = sphi 0, %s221
    %s223 = sphi 0, %s221
    %s224 = sphi 0, %s223
    %s238 = sphi 0, %s224
    %s242 = sphi 0, %s242
    %s244 = sphi 0, %s242
    %s245 = sphi 0, %s244
    %s259 = sphi 0, %s245
    %s263 = sphi 0, %s263
    %s265 = sphi 0, %s263
    %s266 = sphi 0, %s265
    %s280 = sphi 0, %s266
    %s284 = sphi 0, %s284
    %s286 = sphi 0, %s284
    %s287 = sphi 0, %s286
    %s301 = sphi 0, %s287
    %s307 = sphi 0, %s309
    %s310 = sphi 0, %s307
    %s311 = sphi 0, %s310
    %s327 = sphi 0, %s311
  $region4: #{learner_forward.1} parent=0 // loop_header_branch
    %22 = sbr.rel (%p20) target = $region8
  $region5: #{learner_forward.1} parent=0 // loop_body
    %s24 = ssub.s32 %s19, 1
    %s25 = ssub.s32 %s19, 2
    %s26 = sadd.s32 %s19, 1
    %s27 = ssub.s32 %s19, %s26
    %p28 = scmp.eq.s32.totalorder %s27, 0
    %s30 = sadd.s32 %s29, 1
    %s31 = scalar_select %p28, %s29, %s30
    %p34 = pneg %p28
    %p35 = scmp.eq.s32.totalorder %s19, 1
    %p36 = por %p34, %p35
    %p37 = scmp.ne.s32.totalorder %s29, %s32
    %p38 = scmp.eq.s32.totalorder %s19, 0
    %p39 = por %p37, %p38
    %p40 = scmp.ne.s32.totalorder %s29, %s32
    %p41 = scmp.eq.s32.totalorder %s24, 1
    %p42 = por %p40, %p41
    %p43 = scmp.ne.s32.totalorder %s32, %s33
    %p44 = scmp.eq.s32.totalorder %s24, 0
    %p45 = por %p43, %p44
    %p46 = scmp.ne.s32.totalorder %s32, %s33
    %p47 = scmp.eq.s32.totalorder %s25, 1
    %p48 = por %p46, %p47
    %p50 = scmp.ne.s32.totalorder %s33, %s49
    %p51 = scmp.eq.s32.totalorder %s25, 0
    %p52 = por %p50, %p51
    %s54 = sadd.s32 %s53, 1
    %p57 = scmp.eq.s32.totalorder %s19, 1
    %p58 = scmp.ne.s32.totalorder %s53, %s55
    %p59 = scmp.eq.s32.totalorder %s19, 0
    %p60 = por %p58, %p59
    %p61 = scmp.ne.s32.totalorder %s53, %s55
    %p62 = scmp.eq.s32.totalorder %s24, 1
    %p63 = por %p61, %p62
    %p64 = scmp.ne.s32.totalorder %s55, %s56
    %p65 = scmp.eq.s32.totalorder %s24, 0
    %p66 = por %p64, %p65
    %p67 = scmp.ne.s32.totalorder %s55, %s56
    %p68 = scmp.eq.s32.totalorder %s25, 1
    %p69 = por %p67, %p68
    %p71 = scmp.ne.s32.totalorder %s56, %s70
    %p72 = scmp.eq.s32.totalorder %s25, 0
    %p73 = por %p71, %p72
    %s75 = sadd.s32 %s74, 1
    %p78 = scmp.eq.s32.totalorder %s19, 1
    %p79 = scmp.ne.s32.totalorder %s74, %s76
    %p80 = scmp.eq.s32.totalorder %s19, 0
    %p81 = por %p79, %p80
    %p82 = scmp.ne.s32.totalorder %s74, %s76
    %p83 = scmp.eq.s32.totalorder %s24, 1
    %p84 = por %p82, %p83
    %p85 = scmp.ne.s32.totalorder %s76, %s77
    %p86 = scmp.eq.s32.totalorder %s24, 0
    %p87 = por %p85, %p86
    %p88 = scmp.ne.s32.totalorder %s76, %s77
    %p89 = scmp.eq.s32.totalorder %s25, 1
    %p90 = por %p88, %p89
    %p92 = scmp.ne.s32.totalorder %s77, %s91
    %p93 = scmp.eq.s32.totalorder %s25, 0
    %p94 = por %p92, %p93
    %s96 = sadd.s32 %s95, 1
    %p99 = scmp.eq.s32.totalorder %s19, 1
    %p100 = scmp.ne.s32.totalorder %s95, %s97
    %p101 = scmp.eq.s32.totalorder %s19, 0
    %p102 = por %p100, %p101
    %p103 = scmp.ne.s32.totalorder %s95, %s97
    %p104 = scmp.eq.s32.totalorder %s24, 1
    %p105 = por %p103, %p104
    %p106 = scmp.ne.s32.totalorder %s97, %s98
    %p107 = scmp.eq.s32.totalorder %s24, 0
    %p108 = por %p106, %p107
    %p109 = scmp.ne.s32.totalorder %s97, %s98
    %p110 = scmp.eq.s32.totalorder %s25, 1
    %p111 = por %p109, %p110
    %p113 = scmp.ne.s32.totalorder %s98, %s112
    %p114 = scmp.eq.s32.totalorder %s25, 0
    %p115 = por %p113, %p114
    %s117 = sadd.s32 %s116, 1
    %p120 = scmp.eq.s32.totalorder %s19, 1
    %p121 = scmp.ne.s32.totalorder %s116, %s118
    %p122 = scmp.eq.s32.totalorder %s19, 0
    %p123 = por %p121, %p122
    %p124 = scmp.ne.s32.totalorder %s116, %s118
    %p125 = scmp.eq.s32.totalorder %s24, 1
    %p126 = por %p124, %p125
    %p127 = scmp.ne.s32.totalorder %s118, %s119
    %p128 = scmp.eq.s32.totalorder %s24, 0
    %p129 = por %p127, %p128
    %p130 = scmp.ne.s32.totalorder %s118, %s119
    %p131 = scmp.eq.s32.totalorder %s25, 1
    %p132 = por %p130, %p131
    %p134 = scmp.ne.s32.totalorder %s119, %s133
    %p135 = scmp.eq.s32.totalorder %s25, 0
    %p136 = por %p134, %p135
    %s138 = sadd.s32 %s137, 1
    %p141 = scmp.eq.s32.totalorder %s19, 1
    %p142 = scmp.ne.s32.totalorder %s137, %s139
    %p143 = scmp.eq.s32.totalorder %s19, 0
    %p144 = por %p142, %p143
    %p145 = scmp.ne.s32.totalorder %s137, %s139
    %p146 = scmp.eq.s32.totalorder %s24, 1
    %p147 = por %p145, %p146
    %p148 = scmp.ne.s32.totalorder %s139, %s140
    %p149 = scmp.eq.s32.totalorder %s24, 0
    %p150 = por %p148, %p149
    %p151 = scmp.ne.s32.totalorder %s139, %s140
    %p152 = scmp.eq.s32.totalorder %s25, 1
    %p153 = por %p151, %p152
    %p155 = scmp.ne.s32.totalorder %s140, %s154
    %p156 = scmp.eq.s32.totalorder %s25, 0
    %p157 = por %p155, %p156
    %s159 = sadd.s32 %s158, 1
    %p162 = scmp.eq.s32.totalorder %s19, 1
    %p163 = scmp.ne.s32.totalorder %s158, %s160
    %p164 = scmp.eq.s32.totalorder %s19, 0
    %p165 = por %p163, %p164
    %p166 = scmp.ne.s32.totalorder %s158, %s160
    %p167 = scmp.eq.s32.totalorder %s24, 1
    %p168 = por %p166, %p167
    %p169 = scmp.ne.s32.totalorder %s160, %s161
    %p170 = scmp.eq.s32.totalorder %s24, 0
    %p171 = por %p169, %p170
    %p172 = scmp.ne.s32.totalorder %s160, %s161
    %p173 = scmp.eq.s32.totalorder %s25, 1
    %p174 = por %p172, %p173
    %p176 = scmp.ne.s32.totalorder %s161, %s175
    %p177 = scmp.eq.s32.totalorder %s25, 0
    %p178 = por %p176, %p177
    %s180 = sadd.s32 %s179, 1
    %p183 = scmp.eq.s32.totalorder %s19, 1
    %p184 = scmp.ne.s32.totalorder %s179, %s181
    %p185 = scmp.eq.s32.totalorder %s19, 0
    %p186 = por %p184, %p185
    %p187 = scmp.ne.s32.totalorder %s179, %s181
    %p188 = scmp.eq.s32.totalorder %s24, 1
    %p189 = por %p187, %p188
    %p190 = scmp.ne.s32.totalorder %s181, %s182
    %p191 = scmp.eq.s32.totalorder %s24, 0
    %p192 = por %p190, %p191
    %p193 = scmp.ne.s32.totalorder %s181, %s182
    %p194 = scmp.eq.s32.totalorder %s25, 1
    %p195 = por %p193, %p194
    %p197 = scmp.ne.s32.totalorder %s182, %s196
    %p198 = scmp.eq.s32.totalorder %s25, 0
    %p199 = por %p197, %p198
    %s201 = sadd.s32 %s200, 1
    %p204 = scmp.eq.s32.totalorder %s19, 1
    %p205 = scmp.ne.s32.totalorder %s200, %s202
    %p206 = scmp.eq.s32.totalorder %s19, 0
    %p207 = por %p205, %p206
    %p208 = scmp.ne.s32.totalorder %s200, %s202
    %p209 = scmp.eq.s32.totalorder %s24, 1
    %p210 = por %p208, %p209
    %p211 = scmp.ne.s32.totalorder %s202, %s203
    %p212 = scmp.eq.s32.totalorder %s24, 0
    %p213 = por %p211, %p212
    %p214 = scmp.ne.s32.totalorder %s202, %s203
    %p215 = scmp.eq.s32.totalorder %s25, 1
    %p216 = por %p214, %p215
    %p218 = scmp.ne.s32.totalorder %s203, %s217
    %p219 = scmp.eq.s32.totalorder %s25, 0
    %p220 = por %p218, %p219
    %s222 = sadd.s32 %s221, 1
    %p225 = scmp.eq.s32.totalorder %s19, 1
    %p226 = scmp.ne.s32.totalorder %s221, %s223
    %p227 = scmp.eq.s32.totalorder %s19, 0
    %p228 = por %p226, %p227
    %p229 = scmp.ne.s32.totalorder %s221, %s223
    %p230 = scmp.eq.s32.totalorder %s24, 1
    %p231 = por %p229, %p230
    %p232 = scmp.ne.s32.totalorder %s223, %s224
    %p233 = scmp.eq.s32.totalorder %s24, 0
    %p234 = por %p232, %p233
    %p235 = scmp.ne.s32.totalorder %s223, %s224
    %p236 = scmp.eq.s32.totalorder %s25, 1
    %p237 = por %p235, %p236
    %p239 = scmp.ne.s32.totalorder %s224, %s238
    %p240 = scmp.eq.s32.totalorder %s25, 0
    %p241 = por %p239, %p240
    %s243 = sadd.s32 %s242, 1
    %p246 = scmp.eq.s32.totalorder %s19, 1
    %p247 = scmp.ne.s32.totalorder %s242, %s244
    %p248 = scmp.eq.s32.totalorder %s19, 0
    %p249 = por %p247, %p248
    %p250 = scmp.ne.s32.totalorder %s242, %s244
    %p251 = scmp.eq.s32.totalorder %s24, 1
    %p252 = por %p250, %p251
    %p253 = scmp.ne.s32.totalorder %s244, %s245
    %p254 = scmp.eq.s32.totalorder %s24, 0
    %p255 = por %p253, %p254
    %p256 = scmp.ne.s32.totalorder %s244, %s245
    %p257 = scmp.eq.s32.totalorder %s25, 1
    %p258 = por %p256, %p257
    %p260 = scmp.ne.s32.totalorder %s245, %s259
    %p261 = scmp.eq.s32.totalorder %s25, 0
    %p262 = por %p260, %p261
    %s264 = sadd.s32 %s263, 1
    %p267 = scmp.eq.s32.totalorder %s19, 1
    %p268 = scmp.ne.s32.totalorder %s263, %s265
    %p269 = scmp.eq.s32.totalorder %s19, 0
    %p270 = por %p268, %p269
    %p271 = scmp.ne.s32.totalorder %s263, %s265
    %p272 = scmp.eq.s32.totalorder %s24, 1
    %p273 = por %p271, %p272
    %p274 = scmp.ne.s32.totalorder %s265, %s266
    %p275 = scmp.eq.s32.totalorder %s24, 0
    %p276 = por %p274, %p275
    %p277 = scmp.ne.s32.totalorder %s265, %s266
    %p278 = scmp.eq.s32.totalorder %s25, 1
    %p279 = por %p277, %p278
    %p281 = scmp.ne.s32.totalorder %s266, %s280
    %p282 = scmp.eq.s32.totalorder %s25, 0
    %p283 = por %p281, %p282
    %s285 = sadd.s32 %s284, 1
    %p288 = scmp.eq.s32.totalorder %s19, 1
    %p289 = scmp.ne.s32.totalorder %s284, %s286
    %p290 = scmp.eq.s32.totalorder %s19, 0
    %p291 = por %p289, %p290
    %p292 = scmp.ne.s32.totalorder %s284, %s286
    %p293 = scmp.eq.s32.totalorder %s24, 1
    %p294 = por %p292, %p293
    %p295 = scmp.ne.s32.totalorder %s286, %s287
    %p296 = scmp.eq.s32.totalorder %s24, 0
    %p297 = por %p295, %p296
    %p298 = scmp.ne.s32.totalorder %s286, %s287
    %p299 = scmp.eq.s32.totalorder %s25, 1
    %p300 = por %p298, %p299
    %p302 = scmp.ne.s32.totalorder %s287, %s301
    %p303 = scmp.eq.s32.totalorder %s25, 0
    %p304 = por %p302, %p303
    %s305 = ssub.s32 %s19, %s26
    %p306 = scmp.eq.s32.totalorder %s305, 0
    %s308 = sadd.s32 %s307, 1
    %s309 = scalar_select %p306, %s307, %s308
    %p312 = pneg %p306
    %p313 = scmp.eq.s32.totalorder %s19, 1
    %p314 = por %p312, %p313
    %p315 = scmp.ne.s32.totalorder %s307, %s310
    %p316 = scmp.eq.s32.totalorder %s19, 0
    %p317 = por %p315, %p316
    %p318 = scmp.ne.s32.totalorder %s307, %s310
    %p319 = scmp.eq.s32.totalorder %s24, 1
    %p320 = por %p318, %p319
    %p321 = scmp.ne.s32.totalorder %s310, %s311
    %p322 = scmp.eq.s32.totalorder %s24, 0
    %p323 = por %p321, %p322
    %p324 = scmp.ne.s32.totalorder %s310, %s311
    %p325 = scmp.eq.s32.totalorder %s25, 1
    %p326 = por %p324, %p325
    %p328 = scmp.ne.s32.totalorder %s311, %s327
    %p329 = scmp.eq.s32.totalorder %s25, 0
    %p330 = por %p328, %p329
    %p331 = scmp.le.s32.totalorder 1, %s19
    %p332 = scmp.lt.s32.totalorder %s19, 3
    %p333 = pnand %p331, %p332
    %p334 = pneg %p333
    // Predicated region
    $region9: #{learner_forward.1} parent=5 // pred_check
      _
    $region10: #{learner_forward.1} parent=5 // pred_check_branch
      %336 = sbr.rel (%p333) target = $region12
    $region11: #{learner_forward.1} parent=5 // pred_region
      %s337 = ssub.s32 %s19, 1
      // Predicated region
      $region13: #{learner_forward.1} parent=11 // pred_check
        %p338 = pneg %p66
      $region14: #{learner_forward.1} parent=11 // pred_check_branch
        %340 = sbr.rel (%p338) target = $region16
      $region15: #{learner_forward.1} parent=11 // pred_region
        _
      $region16: #{learner_forward.1} parent=11 // pred_fallthru
        _
      // Predicated region
      $region17: #{learner_forward.1} parent=11 // pred_check
        %p341 = pneg %p87
      $region18: #{learner_forward.1} parent=11 // pred_check_branch
        %343 = sbr.rel (%p341) target = $region20
      $region19: #{learner_forward.1} parent=11 // pred_region
        _
      $region20: #{learner_forward.1} parent=11 // pred_fallthru
        _
      // Predicated region
      $region21: #{learner_forward.1} parent=11 // pred_check
        %p344 = pneg %p108
      $region22: #{learner_forward.1} parent=11 // pred_check_branch
        %346 = sbr.rel (%p344) target = $region24
      $region23: #{learner_forward.1} parent=11 // pred_region
        _
      $region24: #{learner_forward.1} parent=11 // pred_fallthru
        _
      // Predicated region
      $region25: #{learner_forward.1} parent=11 // pred_check
        %p347 = pneg %p129
      $region26: #{learner_forward.1} parent=11 // pred_check_branch
        %349 = sbr.rel (%p347) target = $region28
      $region27: #{learner_forward.1} parent=11 // pred_region
        _
      $region28: #{learner_forward.1} parent=11 // pred_fallthru
        _
      // Predicated region
      $region29: #{learner_forward.1} parent=11 // pred_check
        %p350 = pneg %p150
      $region30: #{learner_forward.1} parent=11 // pred_check_branch
        %352 = sbr.rel (%p350) target = $region32
      $region31: #{learner_forward.1} parent=11 // pred_region
        _
      $region32: #{learner_forward.1} parent=11 // pred_fallthru
        _
      // Predicated region
      $region33: #{learner_forward.1} parent=11 // pred_check
        %p353 = pneg %p171
      $region34: #{learner_forward.1} parent=11 // pred_check_branch
        %355 = sbr.rel (%p353) target = $region36
      $region35: #{learner_forward.1} parent=11 // pred_region
        _
      $region36: #{learner_forward.1} parent=11 // pred_fallthru
        _
      // Predicated region
      $region37: #{learner_forward.1} parent=11 // pred_check
        %p356 = pneg %p192
      $region38: #{learner_forward.1} parent=11 // pred_check_branch
        %358 = sbr.rel (%p356) target = $region40
      $region39: #{learner_forward.1} parent=11 // pred_region
        _
      $region40: #{learner_forward.1} parent=11 // pred_fallthru
        _
      // Predicated region
      $region41: #{learner_forward.1} parent=11 // pred_check
        %p359 = pneg %p213
      $region42: #{learner_forward.1} parent=11 // pred_check_branch
        %361 = sbr.rel (%p359) target = $region44
      $region43: #{learner_forward.1} parent=11 // pred_region
        _
      $region44: #{learner_forward.1} parent=11 // pred_fallthru
        _
      // Predicated region
      $region45: #{learner_forward.1} parent=11 // pred_check
        %p362 = pneg %p234
      $region46: #{learner_forward.1} parent=11 // pred_check_branch
        %364 = sbr.rel (%p362) target = $region48
      $region47: #{learner_forward.1} parent=11 // pred_region
        _
      $region48: #{learner_forward.1} parent=11 // pred_fallthru
        _
      // Predicated region
      $region49: #{learner_forward.1} parent=11 // pred_check
        %p365 = pneg %p255
      $region50: #{learner_forward.1} parent=11 // pred_check_branch
        %367 = sbr.rel (%p365) target = $region52
      $region51: #{learner_forward.1} parent=11 // pred_region
        _
      $region52: #{learner_forward.1} parent=11 // pred_fallthru
        _
      // Predicated region
      $region53: #{learner_forward.1} parent=11 // pred_check
        %p368 = pneg %p276
      $region54: #{learner_forward.1} parent=11 // pred_check_branch
        %370 = sbr.rel (%p368) target = $region56
      $region55: #{learner_forward.1} parent=11 // pred_region
        _
      $region56: #{learner_forward.1} parent=11 // pred_fallthru
        _
      // Predicated region
      $region57: #{learner_forward.1} parent=11 // pred_check
        %p371 = pneg %p297
      $region58: #{learner_forward.1} parent=11 // pred_check_branch
        %373 = sbr.rel (%p371) target = $region60
      $region59: #{learner_forward.1} parent=11 // pred_region
        _
      $region60: #{learner_forward.1} parent=11 // pred_fallthru
        _
    $region12: #{learner_forward.1} parent=5 // pred_fallthru
      _
    %p374 = scmp.lt.s32.totalorder %s19, 2
    // Predicated region
    $region61: #{learner_forward.1} parent=5 // pred_check
      %p375 = pneg %p374
    $region62: #{learner_forward.1} parent=5 // pred_check_branch
      %377 = sbr.rel (%p375) target = $region64
    $region63: #{learner_forward.1} parent=5 // pred_region
      // Predicated region
      $region65: #{learner_forward.1} parent=63 // pred_check
        %p378 = pneg %p39
      $region66: #{learner_forward.1} parent=63 // pred_check_branch
        %380 = sbr.rel (%p378) target = $region68
      $region67: #{learner_forward.1} parent=63 // pred_region
        %s381 = smul.u32 32, %s19
        %p382 = scmp.lt.s32.totalorder %s381, 63
        %s383 = scalar_select %p382, %s381, 63
        %s384 = smul.addr %s383, 2
        %s385 = smul.addr %s384, 8
        %s386 = scalar_lea.vmem %s0, %s385
        %s387 = smul.u32 32, %s19
      $region68: #{learner_forward.1} parent=63 // pred_fallthru
        _
    $region64: #{learner_forward.1} parent=5 // pred_fallthru
      _
    %p388 = scmp.le.s32.totalorder 1, %s19
    %p389 = scmp.lt.s32.totalorder %s19, 3
    %p390 = pnand %p388, %p389
    %p391 = pneg %p390
    // Predicated region
    $region69: #{learner_forward.1} parent=5 // pred_check
      _
    $region70: #{learner_forward.1} parent=5 // pred_check_branch
      %393 = sbr.rel (%p390) target = $region72
    $region71: #{learner_forward.1} parent=5 // pred_region
      %s394 = ssub.s32 %s19, 1
      %s395 = smul.u32 32, %s24
      %p396 = scmp.lt.s32.totalorder %s395, 63
      %s397 = scalar_select %p396, %s395, 63
      %s398 = smul.addr %s397, 2
      %s399 = smul.addr %s398, 8
      %s400 = scalar_lea.vmem %s0, %s399
      %p401 = pneg %p45
      %p402 = pneg %p42
      %p403 = pneg %p66
      %p404 = pneg %p63
      %p405 = pneg %p87
      %p406 = pneg %p84
      %p407 = pneg %p108
      %p408 = pneg %p105
      %p409 = pneg %p129
      %p410 = pneg %p126
      %p411 = pneg %p150
      %p412 = pneg %p147
      %p413 = pneg %p171
      %p414 = pneg %p168
      %p415 = pneg %p192
      %p416 = pneg %p189
      %p417 = pneg %p213
      %p418 = pneg %p210
      %p419 = pneg %p234
      %p420 = pneg %p231
      %p421 = pneg %p255
      %p422 = pneg %p252
      %p423 = pneg %p276
      %p424 = pneg %p273
      %p425 = pneg %p297
      %p426 = pneg %p294
      %p427 = pneg %p323
      %p428 = pneg %p320
      %s429 = smul.u32 32, %s24
      %p430 = scmp.lt.s32.totalorder %s429, 63
      %s431 = scalar_select %p430, %s429, 63
      %s432 = smul.addr %s431, 8
      %s433 = scalar_lea.vmem %s13, %s432
      %s434 = smul.u32 32, %s24
      %p435 = scmp.lt.s32.totalorder %s434, 63
      %s436 = scalar_select %p435, %s434, 63
      %s437 = smul.addr %s436, 2
      %s438 = smul.addr %s437, 8
      %s439 = scalar_lea.vmem %s0, %s438
      %s440 = smul.u32 32, %s24
      %s441 = smul.u32 32, %s24
      %p442 = scmp.lt.s32.totalorder %s441, 63
      %s443 = scalar_select %p442, %s441, 63
      %s444 = smul.addr %s443, 8
      %s445 = scalar_lea.vmem %s13, %s444
      %s446 = smul.u32 32, %s24
      %v448 = vld [vmem:[%s439] sm:$0xff]
      %v449 = vld [vmem:[%s439 + $0x8] sm:$0xff]
      %v450 = vld [vmem:[%s439 + $0x10] sm:$0xff]
      %v451 = vld [vmem:[%s439 + $0x18] sm:$0xff]
      %v452 = vld [vmem:[%s439 + $0x20] sm:$0xff]
      %v453 = vld [vmem:[%s439 + $0x28] sm:$0xff]
      %v454 = vld [vmem:[%s439 + $0x30] sm:$0xff]
      %v455 = vld [vmem:[%s439 + $0x38] sm:$0xff]
      %v456 = vld [vmem:[%s439 + $0x40] sm:$0xff]
      %v457 = vld [vmem:[%s439 + $0x48] sm:$0xff]
      %v458 = vld [vmem:[%s439 + $0x50] sm:$0xff]
      %v459 = vld [vmem:[%s439 + $0x58] sm:$0xff]
      %v460 = vld [vmem:[%s439 + $0x60] sm:$0xff]
      %v461 = vld [vmem:[%s439 + $0x68] sm:$0xff]
      %v462 = vld [vmem:[%s439 + $0x70] sm:$0xff]
      %v463 = vld [vmem:[%s439 + $0x78] sm:$0xff]
      %v464 = vld [vmem:[%s439 + $0x80] sm:$0xff]
      %v465 = vld [vmem:[%s439 + $0x88] sm:$0xff]
      %v466 = vld [vmem:[%s439 + $0x90] sm:$0xff]
      %v467 = vld [vmem:[%s439 + $0x98] sm:$0xff]
      %v468 = vld [vmem:[%s439 + $0xa0] sm:$0xff]
      %v469 = vld [vmem:[%s439 + $0xa8] sm:$0xff]
      %v470 = vld [vmem:[%s439 + $0xb0] sm:$0xff]
      %v471 = vld [vmem:[%s439 + $0xb8] sm:$0xff]
      %v472 = vld [vmem:[%s439 + $0xc0] sm:$0xff]
      %v473 = vld [vmem:[%s439 + $0xc8] sm:$0xff]
      %v474 = vld [vmem:[%s439 + $0xd0] sm:$0xff]
      %v475 = vld [vmem:[%s439 + $0xd8] sm:$0xff]
      %v476 = vld [vmem:[%s439 + $0xe0] sm:$0xff]
      %v477 = vld [vmem:[%s439 + $0xe8] sm:$0xff]
      %v478 = vld [vmem:[%s439 + $0xf0] sm:$0xff]
      %v479 = vld [vmem:[%s439 + $0xf8] sm:$0xff]
      %v480 = vld [vmem:[%s439 + $0x100] sm:$0xff]
      %v481 = vld [vmem:[%s439 + $0x108] sm:$0xff]
      %v482 = vld [vmem:[%s439 + $0x110] sm:$0xff]
      %v483 = vld [vmem:[%s439 + $0x118] sm:$0xff]
      %v484 = vld [vmem:[%s439 + $0x120] sm:$0xff]
      %v485 = vld [vmem:[%s439 + $0x128] sm:$0xff]
      %v486 = vld [vmem:[%s439 + $0x130] sm:$0xff]
      %v487 = vld [vmem:[%s439 + $0x138] sm:$0xff]
      %v488 = vld [vmem:[%s439 + $0x140] sm:$0xff]
      %v489 = vld [vmem:[%s439 + $0x148] sm:$0xff]
      %v490 = vld [vmem:[%s439 + $0x150] sm:$0xff]
      %v491 = vld [vmem:[%s439 + $0x158] sm:$0xff]
      %v492 = vld [vmem:[%s439 + $0x160] sm:$0xff]
      %v493 = vld [vmem:[%s439 + $0x168] sm:$0xff]
      %v494 = vld [vmem:[%s439 + $0x170] sm:$0xff]
      %v495 = vld [vmem:[%s439 + $0x178] sm:$0xff]
      %v496 = vld [vmem:[%s439 + $0x180] sm:$0xff]
      %v497 = vld [vmem:[%s439 + $0x188] sm:$0xff]
      %v498 = vld [vmem:[%s439 + $0x190] sm:$0xff]
      %v499 = vld [vmem:[%s439 + $0x198] sm:$0xff]
      %v500 = vld [vmem:[%s439 + $0x1a0] sm:$0xff]
      %v501 = vld [vmem:[%s439 + $0x1a8] sm:$0xff]
      %v502 = vld [vmem:[%s439 + $0x1b0] sm:$0xff]
      %v503 = vld [vmem:[%s439 + $0x1b8] sm:$0xff]
      %v504 = vld [vmem:[%s439 + $0x1c0] sm:$0xff]
      %v505 = vld [vmem:[%s439 + $0x1c8] sm:$0xff]
      %v506 = vld [vmem:[%s439 + $0x1d0] sm:$0xff]
      %v507 = vld [vmem:[%s439 + $0x1d8] sm:$0xff]
      %v508 = vld [vmem:[%s439 + $0x1e0] sm:$0xff]
      %v509 = vld [vmem:[%s439 + $0x1e8] sm:$0xff]
      %v510 = vld [vmem:[%s439 + $0x1f0] sm:$0xff]
      %v511 = vld [vmem:[%s439 + $0x1f8] sm:$0xff]
      %v512 = vpack.c.bf16 %v450, %v448
      %v513 = vpack.c.bf16 %v451, %v449
      %v514 = vpack.c.bf16 %v454, %v452
      %v515 = vpack.c.bf16 %v455, %v453
      %v516 = vpack.c.bf16 %v458, %v456
      %v517 = vpack.c.bf16 %v459, %v457
      %v518 = vpack.c.bf16 %v462, %v460
      %v519 = vpack.c.bf16 %v463, %v461
      %v520 = vpack.c.bf16 %v466, %v464
      %v521 = vpack.c.bf16 %v467, %v465
      %v522 = vpack.c.bf16 %v470, %v468
      %v523 = vpack.c.bf16 %v471, %v469
      %v524 = vpack.c.bf16 %v474, %v472
      %v525 = vpack.c.bf16 %v475, %v473
      %v526 = vpack.c.bf16 %v478, %v476
      %v527 = vpack.c.bf16 %v479, %v477
      %v528 = vpack.c.bf16 %v482, %v480
      %v529 = vpack.c.bf16 %v483, %v481
      %v530 = vpack.c.bf16 %v486, %v484
      %v531 = vpack.c.bf16 %v487, %v485
      %v532 = vpack.c.bf16 %v490, %v488
      %v533 = vpack.c.bf16 %v491, %v489
      %v534 = vpack.c.bf16 %v494, %v492
      %v535 = vpack.c.bf16 %v495, %v493
      %v536 = vpack.c.bf16 %v498, %v496
      %v537 = vpack.c.bf16 %v499, %v497
      %v538 = vpack.c.bf16 %v502, %v500
      %v539 = vpack.c.bf16 %v503, %v501
      %v540 = vpack.c.bf16 %v506, %v504
      %v541 = vpack.c.bf16 %v507, %v505
      %v542 = vpack.c.bf16 %v510, %v508
      %v543 = vpack.c.bf16 %v511, %v509
      %v544 = vld [vmem:[%s1] sm:$0xff]
      %v545 = vld [vmem:[%s1 + $0x8] sm:$0xff]
      %v546 = vld [vmem:[%s1 + $0x10] sm:$0xff]
      %v547 = vld [vmem:[%s1 + $0x18] sm:$0xff]
      %v548 = vld [vmem:[%s1 + $0x20] sm:$0xff]
      %v549 = vld [vmem:[%s1 + $0x28] sm:$0xff]
      %v550 = vld [vmem:[%s1 + $0x30] sm:$0xff]
      %v551 = vld [vmem:[%s1 + $0x38] sm:$0xff]
      %v552 = vld [vmem:[%s1 + $0x40] sm:$0xff]
      %v553 = vld [vmem:[%s1 + $0x48] sm:$0xff]
      %v554 = vld [vmem:[%s1 + $0x50] sm:$0xff]
      %v555 = vld [vmem:[%s1 + $0x58] sm:$0xff]
      %v556 = vld [vmem:[%s1 + $0x60] sm:$0xff]
      %v557 = vld [vmem:[%s1 + $0x68] sm:$0xff]
      %v558 = vld [vmem:[%s1 + $0x70] sm:$0xff]
      %v559 = vld [vmem:[%s1 + $0x78] sm:$0xff]
      %v560 = vld [vmem:[%s1 + $0x80] sm:$0xff]
      %v561 = vld [vmem:[%s1 + $0x88] sm:$0xff]
      %v562 = vld [vmem:[%s1 + $0x90] sm:$0xff]
      %v563 = vld [vmem:[%s1 + $0x98] sm:$0xff]
      %v564 = vld [vmem:[%s1 + $0xa0] sm:$0xff]
      %v565 = vld [vmem:[%s1 + $0xa8] sm:$0xff]
      %v566 = vld [vmem:[%s1 + $0xb0] sm:$0x11]
      %v567 = vld [vmem:[%s7] sm:$0x3]
      %v569 = vlaneseq
      %v570 = vshrl.u32 %v569, 7
      %v571 = vsub.s32 0, %v570
      %v572 = vrot.slane %v567, %v571
      %v573 = vlaneseq
      %v574 = vshrl.u32 %v573, 7
      %v575 = vsub.s32 1, %v574
      %v576 = vrot.slane %v567, %v575
      %v602 = vunpack.c.l.b16 %v544
      %v603 = vunpack.c.h.b16 %v544
      %v604 = vunpack.c.l.b16 %v545
      %v605 = vunpack.c.h.b16 %v545
      %v606 = vunpack.c.l.b16 %v546
      %v607 = vunpack.c.h.b16 %v546
      %v608 = vunpack.c.l.b16 %v547
      %v609 = vunpack.c.h.b16 %v547
      %v610 = vunpack.c.l.b16 %v548
      %v611 = vunpack.c.h.b16 %v548
      %v612 = vunpack.c.l.b16 %v549
      %v613 = vunpack.c.h.b16 %v549
      %v614 = vunpack.c.l.b16 %v550
      %v615 = vunpack.c.h.b16 %v550
      %v616 = vunpack.c.l.b16 %v551
      %v617 = vunpack.c.h.b16 %v551
      %v618 = vunpack.c.l.b16 %v552
      %v619 = vunpack.c.h.b16 %v552
      %v620 = vunpack.c.l.b16 %v553
      %v621 = vunpack.c.h.b16 %v553
      %v622 = vunpack.c.l.b16 %v554
      %v623 = vunpack.c.h.b16 %v554
      %v624 = vunpack.c.l.b16 %v555
      %v625 = vunpack.c.h.b16 %v555
      %v626 = vunpack.c.l.b16 %v556
      %v627 = vunpack.c.h.b16 %v556
      %v628 = vunpack.c.l.b16 %v557
      %v629 = vunpack.c.h.b16 %v557
      %v630 = vunpack.c.l.b16 %v558
      %v631 = vunpack.c.h.b16 %v558
      %v632 = vunpack.c.l.b16 %v559
      %v633 = vunpack.c.h.b16 %v559
      %v634 = vunpack.c.l.b16 %v560
      %v635 = vunpack.c.h.b16 %v560
      %v636 = vunpack.c.l.b16 %v561
      %v637 = vunpack.c.h.b16 %v561
      %v638 = vunpack.c.l.b16 %v562
      %v639 = vunpack.c.h.b16 %v562
      %v640 = vunpack.c.l.b16 %v563
      %v641 = vunpack.c.h.b16 %v563
      %v642 = vunpack.c.l.b16 %v564
      %v643 = vunpack.c.h.b16 %v564
      %v644 = vunpack.c.l.b16 %v565
      %v645 = vunpack.c.h.b16 %v565
      %v646 = vunpack.c.l.b16 %v566
      %v647 = vunpack.c.h.b16 %v566
      %v648 = vpack.c.b16 %v604, %v602
      %v649 = vpack.c.b16 %v605, %v603
      %v650 = vpack.c.b16 %v608, %v606
      %v651 = vpack.c.b16 %v609, %v607
      %v652 = vpack.c.b16 %v612, %v610
      %v653 = vpack.c.b16 %v613, %v611
      %v654 = vpack.c.b16 %v616, %v614
      %v655 = vpack.c.b16 %v617, %v615
      %v656 = vpack.c.b16 %v620, %v618
      %v657 = vpack.c.b16 %v621, %v619
      %v658 = vpack.c.b16 %v624, %v622
      %v659 = vpack.c.b16 %v625, %v623
      %v660 = vpack.c.b16 %v628, %v626
      %v661 = vpack.c.b16 %v629, %v627
      %v662 = vpack.c.b16 %v632, %v630
      %v663 = vpack.c.b16 %v633, %v631
      %v664 = vpack.c.b16 %v636, %v634
      %v665 = vpack.c.b16 %v637, %v635
      %v666 = vpack.c.b16 %v640, %v638
      %v667 = vpack.c.b16 %v641, %v639
      %v668 = vpack.c.b16 %v644, %v642
      %v669 = vpack.c.b16 %v645, %v643
      %v670 = vpack.c.b16 %v646, %v646
      %v671 = vpack.c.b16 %v647, %v647
      %vm694 = vcmask 408576
      %v696 = vsel %vm694, %v513, 0
      %v699 = vsel %vm694, %v515, 0
      %v702 = vsel %vm694, %v517, 0
      %v705 = vsel %vm694, %v519, 0
      %v708 = vsel %vm694, %v521, 0
      %v711 = vsel %vm694, %v523, 0
      %v714 = vsel %vm694, %v525, 0
      %v717 = vsel %vm694, %v527, 0
      %v720 = vsel %vm694, %v529, 0
      %v723 = vsel %vm694, %v531, 0
      %v726 = vsel %vm694, %v533, 0
      %v729 = vsel %vm694, %v535, 0
      %v732 = vsel %vm694, %v537, 0
      %v735 = vsel %vm694, %v539, 0
      %v738 = vsel %vm694, %v541, 0
      %v741 = vsel %vm694, %v543, 0
      %vm743 = vcmask 1040384
      %v745 = vsel %vm743, %v670, 0
      %v748 = vsel %vm743, %v671, 0
      %750 = vmatprep.subr.bf16.mxu0 %v663
      %751 = vmatpush1.bf16.msra.mxu0 %v662
      %752 = vmatprep.subr.bf16.mxu0 %v661
      %753 = vmatpush1.bf16.msra.mxu0 %v660
      %754 = vmatprep.subr.bf16.mxu0 %v659
      %755 = vmatpush1.bf16.msra.mxu0 %v658
      %756 = vmatprep.subr.bf16.mxu0 %v657
      %757 = vmatpush1.bf16.msra.mxu0 %v656
      %758 = vmatprep.subr.bf16.mxu0 %v655
      %759 = vmatpush1.bf16.msra.mxu0 %v654
      %760 = vmatprep.subr.bf16.mxu0 %v653
      %761 = vmatpush1.bf16.msra.mxu0 %v652
      %762 = vmatprep.subr.bf16.mxu0 %v651
      %763 = vmatpush1.bf16.msra.mxu0 %v650
      %764 = vmatprep.subr.bf16.mxu0 %v649
      %765 = vmatpush1.bf16.msra.mxu0 %v648
      %766 = vmatprep.subr.bf16.mxu0 0
      %767 = vmatpush2.bf16.msra.mxu0 0
      %768 = vmatprep.subr.bf16.mxu0 0
      %769 = vmatpush2.bf16.msra.mxu0 0
      %770 = vmatprep.subr.bf16.mxu0 0
      %771 = vmatpush2.bf16.msra.mxu0 0
      %772 = vmatprep.subr.bf16.mxu0 0
      %773 = vmatpush2.bf16.msra.mxu0 0
      %774 = vmatprep.subr.bf16.mxu0 %v748
      %775 = vmatpush2.bf16.msra.mxu0 %v745
      %776 = vmatprep.subr.bf16.mxu0 %v669
      %777 = vmatpush2.bf16.msra.mxu0 %v668
      %778 = vmatprep.subr.bf16.mxu0 %v667
      %779 = vmatpush2.bf16.msra.mxu0 %v666
      %780 = vmatprep.subr.bf16.mxu0 %v665
      %781 = vmatpush2.bf16.msra.mxu0 %v664
      %782 = vmatprep.mubr.bf16.mxu0 %v696
      %783 = vmatmul.mubr.bf16.gmra.mxu0 %v512
      %v784 = vpop.f32.mrf.mxu0
      %v785 = vadd.f32 %v572, %v784
      %v786 = vpop.f32.mrf.mxu0
      %v787 = vadd.f32 %v576, %v786
      %v788 = vpop.f32.mrf.mxu0
      %v789 = vadd.f32 %v572, %v788
      %v790 = vpop.f32.mrf.mxu0
      %v791 = vadd.f32 %v576, %v790
      %792 = vmatprep.mubr.bf16.mxu0 %v699
      %793 = vmatmul.mubr.bf16.gmra.mxu0 %v514
      %v794 = vpop.f32.mrf.mxu0
      %v795 = vadd.f32 %v572, %v794
      %v796 = vpop.f32.mrf.mxu0
      %v797 = vadd.f32 %v576, %v796
      %v798 = vpop.f32.mrf.mxu0
      %v799 = vadd.f32 %v572, %v798
      %v800 = vpop.f32.mrf.mxu0
      %v801 = vadd.f32 %v576, %v800
      %802 = vmatprep.mubr.bf16.mxu0 %v702
      %803 = vmatmul.mubr.bf16.gmra.mxu0 %v516
      %v804 = vpop.f32.mrf.mxu0
      %v805 = vadd.f32 %v572, %v804
      %v806 = vpop.f32.mrf.mxu0
      %v807 = vadd.f32 %v576, %v806
      %v808 = vpop.f32.mrf.mxu0
      %v809 = vadd.f32 %v572, %v808
      %v810 = vpop.f32.mrf.mxu0
      %v811 = vadd.f32 %v576, %v810
      %812 = vmatprep.mubr.bf16.mxu0 %v705
      %813 = vmatmul.mubr.bf16.gmra.mxu0 %v518
      %v814 = vpop.f32.mrf.mxu0
      %v815 = vadd.f32 %v572, %v814
      %v816 = vpop.f32.mrf.mxu0
      %v817 = vadd.f32 %v576, %v816
      %v818 = vpop.f32.mrf.mxu0
      %v819 = vadd.f32 %v572, %v818
      %v820 = vpop.f32.mrf.mxu0
      %v821 = vadd.f32 %v576, %v820
      %822 = vmatprep.mubr.bf16.mxu0 %v708
      %823 = vmatmul.mubr.bf16.gmra.mxu0 %v520
      %v824 = vpop.f32.mrf.mxu0
      %v825 = vadd.f32 %v572, %v824
      %v826 = vpop.f32.mrf.mxu0
      %v827 = vadd.f32 %v576, %v826
      %v828 = vpop.f32.mrf.mxu0
      %v829 = vadd.f32 %v572, %v828
      %v830 = vpop.f32.mrf.mxu0
      %v831 = vadd.f32 %v576, %v830
      %832 = vmatprep.mubr.bf16.mxu0 %v711
      %833 = vmatmul.mubr.bf16.gmra.mxu0 %v522
      %v834 = vpop.f32.mrf.mxu0
      %v835 = vadd.f32 %v572, %v834
      %v836 = vpop.f32.mrf.mxu0
      %v837 = vadd.f32 %v576, %v836
      %v838 = vpop.f32.mrf.mxu0
      %v839 = vadd.f32 %v572, %v838
      %v840 = vpop.f32.mrf.mxu0
      %v841 = vadd.f32 %v576, %v840
      %842 = vmatprep.mubr.bf16.mxu0 %v714
      %843 = vmatmul.mubr.bf16.gmra.mxu0 %v524
      %v844 = vpop.f32.mrf.mxu0
      %v845 = vadd.f32 %v572, %v844
      %v846 = vpop.f32.mrf.mxu0
      %v847 = vadd.f32 %v576, %v846
      %v848 = vpop.f32.mrf.mxu0
      %v849 = vadd.f32 %v572, %v848
      %v850 = vpop.f32.mrf.mxu0
      %v851 = vadd.f32 %v576, %v850
      %852 = vmatprep.mubr.bf16.mxu0 %v717
      %853 = vmatmul.mubr.bf16.gmra.mxu0 %v526
      %v854 = vpop.f32.mrf.mxu0
      %v855 = vadd.f32 %v572, %v854
      %v856 = vpop.f32.mrf.mxu0
      %v857 = vadd.f32 %v576, %v856
      %v858 = vpop.f32.mrf.mxu0
      %v859 = vadd.f32 %v572, %v858
      %v860 = vpop.f32.mrf.mxu0
      %v861 = vadd.f32 %v576, %v860
      %862 = vmatprep.mubr.bf16.mxu0 %v720
      %863 = vmatmul.mubr.bf16.gmra.mxu0 %v528
      %v864 = vpop.f32.mrf.mxu0
      %v865 = vadd.f32 %v572, %v864
      %v866 = vpop.f32.mrf.mxu0
      %v867 = vadd.f32 %v576, %v866
      %v868 = vpop.f32.mrf.mxu0
      %v869 = vadd.f32 %v572, %v868
      %v870 = vpop.f32.mrf.mxu0
      %v871 = vadd.f32 %v576, %v870
      %872 = vmatprep.mubr.bf16.mxu0 %v723
      %873 = vmatmul.mubr.bf16.gmra.mxu0 %v530
      %v874 = vpop.f32.mrf.mxu0
      %v875 = vadd.f32 %v572, %v874
      %v876 = vpop.f32.mrf.mxu0
      %v877 = vadd.f32 %v576, %v876
      %v878 = vpop.f32.mrf.mxu0
      %v879 = vadd.f32 %v572, %v878
      %v880 = vpop.f32.mrf.mxu0
      %v881 = vadd.f32 %v576, %v880
      %882 = vmatprep.mubr.bf16.mxu0 %v726
      %883 = vmatmul.mubr.bf16.gmra.mxu0 %v532
      %v884 = vpop.f32.mrf.mxu0
      %v885 = vadd.f32 %v572, %v884
      %v886 = vpop.f32.mrf.mxu0
      %v887 = vadd.f32 %v576, %v886
      %v888 = vpop.f32.mrf.mxu0
      %v889 = vadd.f32 %v572, %v888
      %v890 = vpop.f32.mrf.mxu0
      %v891 = vadd.f32 %v576, %v890
      %892 = vmatprep.mubr.bf16.mxu0 %v729
      %893 = vmatmul.mubr.bf16.gmra.mxu0 %v534
      %v894 = vpop.f32.mrf.mxu0
      %v895 = vadd.f32 %v572, %v894
      %v896 = vpop.f32.mrf.mxu0
      %v897 = vadd.f32 %v576, %v896
      %v898 = vpop.f32.mrf.mxu0
      %v899 = vadd.f32 %v572, %v898
      %v900 = vpop.f32.mrf.mxu0
      %v901 = vadd.f32 %v576, %v900
      %902 = vmatprep.mubr.bf16.mxu0 %v732
      %903 = vmatmul.mubr.bf16.gmra.mxu0 %v536
      %v904 = vpop.f32.mrf.mxu0
      %v905 = vadd.f32 %v572, %v904
      %v906 = vpop.f32.mrf.mxu0
      %v907 = vadd.f32 %v576, %v906
      %v908 = vpop.f32.mrf.mxu0
      %v909 = vadd.f32 %v572, %v908
      %v910 = vpop.f32.mrf.mxu0
      %v911 = vadd.f32 %v576, %v910
      %912 = vmatprep.mubr.bf16.mxu0 %v735
      %913 = vmatmul.mubr.bf16.gmra.mxu0 %v538
      %v914 = vpop.f32.mrf.mxu0
      %v915 = vadd.f32 %v572, %v914
      %v916 = vpop.f32.mrf.mxu0
      %v917 = vadd.f32 %v576, %v916
      %v918 = vpop.f32.mrf.mxu0
      %v919 = vadd.f32 %v572, %v918
      %v920 = vpop.f32.mrf.mxu0
      %v921 = vadd.f32 %v576, %v920
      %922 = vmatprep.mubr.bf16.mxu0 %v738
      %923 = vmatmul.mubr.bf16.gmra.mxu0 %v540
      %v924 = vpop.f32.mrf.mxu0
      %v925 = vadd.f32 %v572, %v924
      %v926 = vpop.f32.mrf.mxu0
      %v927 = vadd.f32 %v576, %v926
      %v928 = vpop.f32.mrf.mxu0
      %v929 = vadd.f32 %v572, %v928
      %v930 = vpop.f32.mrf.mxu0
      %v931 = vadd.f32 %v576, %v930
      %932 = vmatprep.mubr.bf16.mxu0 %v741
      %933 = vmatmul.mubr.bf16.gmra.mxu0 %v542
      %v934 = vpop.f32.mrf.mxu0
      %v935 = vadd.f32 %v572, %v934
      %v936 = vpop.f32.mrf.mxu0
      %v937 = vadd.f32 %v576, %v936
      %v938 = vpop.f32.mrf.mxu0
      %v939 = vadd.f32 %v572, %v938
      %v940 = vpop.f32.mrf.mxu0
      %v941 = vadd.f32 %v576, %v940
      %942 = vdwg.mxu0
      %vm943 = vcmp.gt.f32.partialorder %v785, 0.0
      %vm944 = vcmp.gt.f32.partialorder %v787, 0.0
      %vm945 = vcmp.gt.f32.partialorder %v789, 0.0
      %vm946 = vcmp.gt.f32.partialorder %v791, 0.0
      %vm947 = vcmp.gt.f32.partialorder %v795, 0.0
      %vm948 = vcmp.gt.f32.partialorder %v797, 0.0
      %vm949 = vcmp.gt.f32.partialorder %v799, 0.0
      %vm950 = vcmp.gt.f32.partialorder %v801, 0.0
      %vm951 = vcmp.gt.f32.partialorder %v805, 0.0
      %vm952 = vcmp.gt.f32.partialorder %v807, 0.0
      %vm953 = vcmp.gt.f32.partialorder %v809, 0.0
      %vm954 = vcmp.gt.f32.partialorder %v811, 0.0
      %vm955 = vcmp.gt.f32.partialorder %v815, 0.0
      %vm956 = vcmp.gt.f32.partialorder %v817, 0.0
      %vm957 = vcmp.gt.f32.partialorder %v819, 0.0
      %vm958 = vcmp.gt.f32.partialorder %v821, 0.0
      %vm959 = vcmp.gt.f32.partialorder %v825, 0.0
      %vm960 = vcmp.gt.f32.partialorder %v827, 0.0
      %vm961 = vcmp.gt.f32.partialorder %v829, 0.0
      %vm962 = vcmp.gt.f32.partialorder %v831, 0.0
      %vm963 = vcmp.gt.f32.partialorder %v835, 0.0
      %vm964 = vcmp.gt.f32.partialorder %v837, 0.0
      %vm965 = vcmp.gt.f32.partialorder %v839, 0.0
      %vm966 = vcmp.gt.f32.partialorder %v841, 0.0
      %vm967 = vcmp.gt.f32.partialorder %v845, 0.0
      %vm968 = vcmp.gt.f32.partialorder %v847, 0.0
      %vm969 = vcmp.gt.f32.partialorder %v849, 0.0
      %vm970 = vcmp.gt.f32.partialorder %v851, 0.0
      %vm971 = vcmp.gt.f32.partialorder %v855, 0.0
      %vm972 = vcmp.gt.f32.partialorder %v857, 0.0
      %vm973 = vcmp.gt.f32.partialorder %v859, 0.0
      %vm974 = vcmp.gt.f32.partialorder %v861, 0.0
      %vm975 = vcmp.gt.f32.partialorder %v865, 0.0
      %vm976 = vcmp.gt.f32.partialorder %v867, 0.0
      %vm977 = vcmp.gt.f32.partialorder %v869, 0.0
      %vm978 = vcmp.gt.f32.partialorder %v871, 0.0
      %vm979 = vcmp.gt.f32.partialorder %v875, 0.0
      %vm980 = vcmp.gt.f32.partialorder %v877, 0.0
      %vm981 = vcmp.gt.f32.partialorder %v879, 0.0
      %vm982 = vcmp.gt.f32.partialorder %v881, 0.0
      %vm983 = vcmp.gt.f32.partialorder %v885, 0.0
      %vm984 = vcmp.gt.f32.partialorder %v887, 0.0
      %vm985 = vcmp.gt.f32.partialorder %v889, 0.0
      %vm986 = vcmp.gt.f32.partialorder %v891, 0.0
      %vm987 = vcmp.gt.f32.partialorder %v895, 0.0
      %vm988 = vcmp.gt.f32.partialorder %v897, 0.0
      %vm989 = vcmp.gt.f32.partialorder %v899, 0.0
      %vm990 = vcmp.gt.f32.partialorder %v901, 0.0
      %vm991 = vcmp.gt.f32.partialorder %v905, 0.0
      %vm992 = vcmp.gt.f32.partialorder %v907, 0.0
      %vm993 = vcmp.gt.f32.partialorder %v909, 0.0
      %vm994 = vcmp.gt.f32.partialorder %v911, 0.0
      %vm995 = vcmp.gt.f32.partialorder %v915, 0.0
      %vm996 = vcmp.gt.f32.partialorder %v917, 0.0
      %vm997 = vcmp.gt.f32.partialorder %v919, 0.0
      %vm998 = vcmp.gt.f32.partialorder %v921, 0.0
      %vm999 = vcmp.gt.f32.partialorder %v925, 0.0
      %vm1000 = vcmp.gt.f32.partialorder %v927, 0.0
      %vm1001 = vcmp.gt.f32.partialorder %v929, 0.0
      %vm1002 = vcmp.gt.f32.partialorder %v931, 0.0
      %vm1003 = vcmp.gt.f32.partialorder %v935, 0.0
      %vm1004 = vcmp.gt.f32.partialorder %v937, 0.0
      %vm1005 = vcmp.gt.f32.partialorder %v939, 0.0
      %vm1006 = vcmp.gt.f32.partialorder %v941, 0.0
      %v1007 = vmul.f32 %v785, 1.442695
      %v1008 = vpow.pop %v1007
      %v1009 = vmul.f32 %v787, 1.442695
      %v1010 = vpow.pop %v1009
      %v1011 = vmul.f32 %v789, 1.442695
      %v1012 = vpow.pop %v1011
      %v1013 = vmul.f32 %v791, 1.442695
      %v1014 = vpow.pop %v1013
      %v1015 = vmul.f32 %v795, 1.442695
      %v1016 = vpow.pop %v1015
      %v1017 = vmul.f32 %v797, 1.442695
      %v1018 = vpow.pop %v1017
      %v1019 = vmul.f32 %v799, 1.442695
      %v1020 = vpow.pop %v1019
      %v1021 = vmul.f32 %v801, 1.442695
      %v1022 = vpow.pop %v1021
      %v1023 = vmul.f32 %v805, 1.442695
      %v1024 = vpow.pop %v1023
      %v1025 = vmul.f32 %v807, 1.442695
      %v1026 = vpow.pop %v1025
      %v1027 = vmul.f32 %v809, 1.442695
      %v1028 = vpow.pop %v1027
      %v1029 = vmul.f32 %v811, 1.442695
      %v1030 = vpow.pop %v1029
      %v1031 = vmul.f32 %v815, 1.442695
      %v1032 = vpow.pop %v1031
      %v1033 = vmul.f32 %v817, 1.442695
      %v1034 = vpow.pop %v1033
      %v1035 = vmul.f32 %v819, 1.442695
      %v1036 = vpow.pop %v1035
      %v1037 = vmul.f32 %v821, 1.442695
      %v1038 = vpow.pop %v1037
      %v1039 = vmul.f32 %v825, 1.442695
      %v1040 = vpow.pop %v1039
      %v1041 = vmul.f32 %v827, 1.442695
      %v1042 = vpow.pop %v1041
      %v1043 = vmul.f32 %v829, 1.442695
      %v1044 = vpow.pop %v1043
      %v1045 = vmul.f32 %v831, 1.442695
      %v1046 = vpow.pop %v1045
      %v1047 = vmul.f32 %v835, 1.442695
      %v1048 = vpow.pop %v1047
      %v1049 = vmul.f32 %v837, 1.442695
      %v1050 = vpow.pop %v1049
      %v1051 = vmul.f32 %v839, 1.442695
      %v1052 = vpow.pop %v1051
      %v1053 = vmul.f32 %v841, 1.442695
      %v1054 = vpow.pop %v1053
      %v1055 = vmul.f32 %v845, 1.442695
      %v1056 = vpow.pop %v1055
      %v1057 = vmul.f32 %v847, 1.442695
      %v1058 = vpow.pop %v1057
      %v1059 = vmul.f32 %v849, 1.442695
      %v1060 = vpow.pop %v1059
      %v1061 = vmul.f32 %v851, 1.442695
      %v1062 = vpow.pop %v1061
      %v1063 = vmul.f32 %v855, 1.442695
      %v1064 = vpow.pop %v1063
      %v1065 = vmul.f32 %v857, 1.442695
      %v1066 = vpow.pop %v1065
      %v1067 = vmul.f32 %v859, 1.442695
      %v1068 = vpow.pop %v1067
      %v1069 = vmul.f32 %v861, 1.442695
      %v1070 = vpow.pop %v1069
      %v1071 = vmul.f32 %v865, 1.442695
      %v1072 = vpow.pop %v1071
      %v1073 = vmul.f32 %v867, 1.442695
      %v1074 = vpow.pop %v1073
      %v1075 = vmul.f32 %v869, 1.442695
      %v1076 = vpow.pop %v1075
      %v1077 = vmul.f32 %v871, 1.442695
      %v1078 = vpow.pop %v1077
      %v1079 = vmul.f32 %v875, 1.442695
      %v1080 = vpow.pop %v1079
      %v1081 = vmul.f32 %v877, 1.442695
      %v1082 = vpow.pop %v1081
      %v1083 = vmul.f32 %v879, 1.442695
      %v1084 = vpow.pop %v1083
      %v1085 = vmul.f32 %v881, 1.442695
      %v1086 = vpow.pop %v1085
      %v1087 = vmul.f32 %v885, 1.442695
      %v1088 = vpow.pop %v1087
      %v1089 = vmul.f32 %v887, 1.442695
      %v1090 = vpow.pop %v1089
      %v1091 = vmul.f32 %v889, 1.442695
      %v1092 = vpow.pop %v1091
      %v1093 = vmul.f32 %v891, 1.442695
      %v1094 = vpow.pop %v1093
      %v1095 = vmul.f32 %v895, 1.442695
      %v1096 = vpow.pop %v1095
      %v1097 = vmul.f32 %v897, 1.442695
      %v1098 = vpow.pop %v1097
      %v1099 = vmul.f32 %v899, 1.442695
      %v1100 = vpow.pop %v1099
      %v1101 = vmul.f32 %v901, 1.442695
      %v1102 = vpow.pop %v1101
      %v1103 = vmul.f32 %v905, 1.442695
      %v1104 = vpow.pop %v1103
      %v1105 = vmul.f32 %v907, 1.442695
      %v1106 = vpow.pop %v1105
      %v1107 = vmul.f32 %v909, 1.442695
      %v1108 = vpow.pop %v1107
      %v1109 = vmul.f32 %v911, 1.442695
      %v1110 = vpow.pop %v1109
      %v1111 = vmul.f32 %v915, 1.442695
      %v1112 = vpow.pop %v1111
      %v1113 = vmul.f32 %v917, 1.442695
      %v1114 = vpow.pop %v1113
      %v1115 = vmul.f32 %v919, 1.442695
      %v1116 = vpow.pop %v1115
      %v1117 = vmul.f32 %v921, 1.442695
      %v1118 = vpow.pop %v1117
      %v1119 = vmul.f32 %v925, 1.442695
      %v1120 = vpow.pop %v1119
      %v1121 = vmul.f32 %v927, 1.442695
      %v1122 = vpow.pop %v1121
      %v1123 = vmul.f32 %v929, 1.442695
      %v1124 = vpow.pop %v1123
      %v1125 = vmul.f32 %v931, 1.442695
      %v1126 = vpow.pop %v1125
      %v1127 = vmul.f32 %v935, 1.442695
      %v1128 = vpow.pop %v1127
      %v1129 = vmul.f32 %v937, 1.442695
      %v1130 = vpow.pop %v1129
      %v1131 = vmul.f32 %v939, 1.442695
      %v1132 = vpow.pop %v1131
      %v1133 = vmul.f32 %v941, 1.442695
      %v1134 = vpow.pop %v1133
      %v1135 = vsub.f32 %v1008, 1.0
      %v1136 = vsub.f32 %v1010, 1.0
      %v1137 = vsub.f32 %v1012, 1.0
      %v1138 = vsub.f32 %v1014, 1.0
      %v1139 = vsub.f32 %v1016, 1.0
      %v1140 = vsub.f32 %v1018, 1.0
      %v1141 = vsub.f32 %v1020, 1.0
      %v1142 = vsub.f32 %v1022, 1.0
      %v1143 = vsub.f32 %v1024, 1.0
      %v1144 = vsub.f32 %v1026, 1.0
      %v1145 = vsub.f32 %v1028, 1.0
      %v1146 = vsub.f32 %v1030, 1.0
      %v1147 = vsub.f32 %v1032, 1.0
      %v1148 = vsub.f32 %v1034, 1.0
      %v1149 = vsub.f32 %v1036, 1.0
      %v1150 = vsub.f32 %v1038, 1.0
      %v1151 = vsub.f32 %v1040, 1.0
      %v1152 = vsub.f32 %v1042, 1.0
      %v1153 = vsub.f32 %v1044, 1.0
      %v1154 = vsub.f32 %v1046, 1.0
      %v1155 = vsub.f32 %v1048, 1.0
      %v1156 = vsub.f32 %v1050, 1.0
      %v1157 = vsub.f32 %v1052, 1.0
      %v1158 = vsub.f32 %v1054, 1.0
      %v1159 = vsub.f32 %v1056, 1.0
      %v1160 = vsub.f32 %v1058, 1.0
      %v1161 = vsub.f32 %v1060, 1.0
      %v1162 = vsub.f32 %v1062, 1.0
      %v1163 = vsub.f32 %v1064, 1.0
      %v1164 = vsub.f32 %v1066, 1.0
      %v1165 = vsub.f32 %v1068, 1.0
      %v1166 = vsub.f32 %v1070, 1.0
      %v1167 = vsub.f32 %v1072, 1.0
      %v1168 = vsub.f32 %v1074, 1.0
      %v1169 = vsub.f32 %v1076, 1.0
      %v1170 = vsub.f32 %v1078, 1.0
      %v1171 = vsub.f32 %v1080, 1.0
      %v1172 = vsub.f32 %v1082, 1.0
      %v1173 = vsub.f32 %v1084, 1.0
      %v1174 = vsub.f32 %v1086, 1.0
      %v1175 = vsub.f32 %v1088, 1.0
      %v1176 = vsub.f32 %v1090, 1.0
      %v1177 = vsub.f32 %v1092, 1.0
      %v1178 = vsub.f32 %v1094, 1.0
      %v1179 = vsub.f32 %v1096, 1.0
      %v1180 = vsub.f32 %v1098, 1.0
      %v1181 = vsub.f32 %v1100, 1.0
      %v1182 = vsub.f32 %v1102, 1.0
      %v1183 = vsub.f32 %v1104, 1.0
      %v1184 = vsub.f32 %v1106, 1.0
      %v1185 = vsub.f32 %v1108, 1.0
      %v1186 = vsub.f32 %v1110, 1.0
      %v1187 = vsub.f32 %v1112, 1.0
      %v1188 = vsub.f32 %v1114, 1.0
      %v1189 = vsub.f32 %v1116, 1.0
      %v1190 = vsub.f32 %v1118, 1.0
      %v1191 = vsub.f32 %v1120, 1.0
      %v1192 = vsub.f32 %v1122, 1.0
      %v1193 = vsub.f32 %v1124, 1.0
      %v1194 = vsub.f32 %v1126, 1.0
      %v1195 = vsub.f32 %v1128, 1.0
      %v1196 = vsub.f32 %v1130, 1.0
      %v1197 = vsub.f32 %v1132, 1.0
      %v1198 = vsub.f32 %v1134, 1.0
      %v1199 = vsel %vm943, %v785, %v1135
      %v1200 = vsel %vm944, %v787, %v1136
      %v1201 = vsel %vm945, %v789, %v1137
      %v1202 = vsel %vm946, %v791, %v1138
      %v1203 = vsel %vm947, %v795, %v1139
      %v1204 = vsel %vm948, %v797, %v1140
      %v1205 = vsel %vm949, %v799, %v1141
      %v1206 = vsel %vm950, %v801, %v1142
      %v1207 = vsel %vm951, %v805, %v1143
      %v1208 = vsel %vm952, %v807, %v1144
      %v1209 = vsel %vm953, %v809, %v1145
      %v1210 = vsel %vm954, %v811, %v1146
      %v1211 = vsel %vm955, %v815, %v1147
      %v1212 = vsel %vm956, %v817, %v1148
      %v1213 = vsel %vm957, %v819, %v1149
      %v1214 = vsel %vm958, %v821, %v1150
      %v1215 = vsel %vm959, %v825, %v1151
      %v1216 = vsel %vm960, %v827, %v1152
      %v1217 = vsel %vm961, %v829, %v1153
      %v1218 = vsel %vm962, %v831, %v1154
      %v1219 = vsel %vm963, %v835, %v1155
      %v1220 = vsel %vm964, %v837, %v1156
      %v1221 = vsel %vm965, %v839, %v1157
      %v1222 = vsel %vm966, %v841, %v1158
      %v1223 = vsel %vm967, %v845, %v1159
      %v1224 = vsel %vm968, %v847, %v1160
      %v1225 = vsel %vm969, %v849, %v1161
      %v1226 = vsel %vm970, %v851, %v1162
      %v1227 = vsel %vm971, %v855, %v1163
      %v1228 = vsel %vm972, %v857, %v1164
      %v1229 = vsel %vm973, %v859, %v1165
      %v1230 = vsel %vm974, %v861, %v1166
      %v1231 = vsel %vm975, %v865, %v1167
      %v1232 = vsel %vm976, %v867, %v1168
      %v1233 = vsel %vm977, %v869, %v1169
      %v1234 = vsel %vm978, %v871, %v1170
      %v1235 = vsel %vm979, %v875, %v1171
      %v1236 = vsel %vm980, %v877, %v1172
      %v1237 = vsel %vm981, %v879, %v1173
      %v1238 = vsel %vm982, %v881, %v1174
      %v1239 = vsel %vm983, %v885, %v1175
      %v1240 = vsel %vm984, %v887, %v1176
      %v1241 = vsel %vm985, %v889, %v1177
      %v1242 = vsel %vm986, %v891, %v1178
      %v1243 = vsel %vm987, %v895, %v1179
      %v1244 = vsel %vm988, %v897, %v1180
      %v1245 = vsel %vm989, %v899, %v1181
      %v1246 = vsel %vm990, %v901, %v1182
      %v1247 = vsel %vm991, %v905, %v1183
      %v1248 = vsel %vm992, %v907, %v1184
      %v1249 = vsel %vm993, %v909, %v1185
      %v1250 = vsel %vm994, %v911, %v1186
      %v1251 = vsel %vm995, %v915, %v1187
      %v1252 = vsel %vm996, %v917, %v1188
      %v1253 = vsel %vm997, %v919, %v1189
      %v1254 = vsel %vm998, %v921, %v1190
      %v1255 = vsel %vm999, %v925, %v1191
      %v1256 = vsel %vm1000, %v927, %v1192
      %v1257 = vsel %vm1001, %v929, %v1193
      %v1258 = vsel %vm1002, %v931, %v1194
      %v1259 = vsel %vm1003, %v935, %v1195
      %v1260 = vsel %vm1004, %v937, %v1196
      %v1261 = vsel %vm1005, %v939, %v1197
      %v1262 = vsel %vm1006, %v941, %v1198
      %v1263 = vpack.c.bf16 %v1201, %v1199
      %v1264 = vpack.c.bf16 %v1202, %v1200
      %v1265 = vpack.c.bf16 %v1205, %v1203
      %v1266 = vpack.c.bf16 %v1206, %v1204
      %v1267 = vpack.c.bf16 %v1209, %v1207
      %v1268 = vpack.c.bf16 %v1210, %v1208
      %v1269 = vpack.c.bf16 %v1213, %v1211
      %v1270 = vpack.c.bf16 %v1214, %v1212
      %v1271 = vpack.c.bf16 %v1217, %v1215
      %v1272 = vpack.c.bf16 %v1218, %v1216
      %v1273 = vpack.c.bf16 %v1221, %v1219
      %v1274 = vpack.c.bf16 %v1222, %v1220
      %v1275 = vpack.c.bf16 %v1225, %v1223
      %v1276 = vpack.c.bf16 %v1226, %v1224
      %v1277 = vpack.c.bf16 %v1229, %v1227
      %v1278 = vpack.c.bf16 %v1230, %v1228
      %v1279 = vpack.c.bf16 %v1233, %v1231
      %v1280 = vpack.c.bf16 %v1234, %v1232
      %v1281 = vpack.c.bf16 %v1237, %v1235
      %v1282 = vpack.c.bf16 %v1238, %v1236
      %v1283 = vpack.c.bf16 %v1241, %v1239
      %v1284 = vpack.c.bf16 %v1242, %v1240
      %v1285 = vpack.c.bf16 %v1245, %v1243
      %v1286 = vpack.c.bf16 %v1246, %v1244
      %v1287 = vpack.c.bf16 %v1249, %v1247
      %v1288 = vpack.c.bf16 %v1250, %v1248
      %v1289 = vpack.c.bf16 %v1253, %v1251
      %v1290 = vpack.c.bf16 %v1254, %v1252
      %v1291 = vpack.c.bf16 %v1257, %v1255
      %v1292 = vpack.c.bf16 %v1258, %v1256
      %v1293 = vpack.c.bf16 %v1261, %v1259
      %v1294 = vpack.c.bf16 %v1262, %v1260
      %v1295 = vld [vmem:[%s2] sm:$0xff]
      %v1296 = vld [vmem:[%s2 + $0x8] sm:$0xff]
      %v1297 = vld [vmem:[%s2 + $0x10] sm:$0xff]
      %v1298 = vld [vmem:[%s2 + $0x18] sm:$0xff]
      %v1299 = vld [vmem:[%s2 + $0x20] sm:$0xff]
      %v1300 = vld [vmem:[%s2 + $0x28] sm:$0xff]
      %v1301 = vld [vmem:[%s2 + $0x30] sm:$0xff]
      %v1302 = vld [vmem:[%s2 + $0x38] sm:$0xff]
      %v1303 = vld [vmem:[%s2 + $0x40] sm:$0xff]
      %v1304 = vld [vmem:[%s2 + $0x48] sm:$0xff]
      %v1305 = vld [vmem:[%s2 + $0x50] sm:$0xff]
      %v1306 = vld [vmem:[%s2 + $0x58] sm:$0xff]
      %v1307 = vld [vmem:[%s2 + $0x60] sm:$0xff]
      %v1308 = vld [vmem:[%s2 + $0x68] sm:$0xff]
      %v1309 = vld [vmem:[%s2 + $0x70] sm:$0xff]
      %v1310 = vld [vmem:[%s2 + $0x78] sm:$0xff]
      %v1311 = vld [vmem:[%s2 + $0x80] sm:$0xff]
      %v1312 = vld [vmem:[%s2 + $0x88] sm:$0xff]
      %v1313 = vld [vmem:[%s2 + $0x90] sm:$0xff]
      %v1314 = vld [vmem:[%s2 + $0x98] sm:$0xff]
      %v1315 = vld [vmem:[%s2 + $0xa0] sm:$0xff]
      %v1316 = vld [vmem:[%s2 + $0xa8] sm:$0xff]
      %v1317 = vld [vmem:[%s2 + $0xb0] sm:$0xff]
      %v1318 = vld [vmem:[%s2 + $0xb8] sm:$0xff]
      %v1319 = vld [vmem:[%s2 + $0xc0] sm:$0xff]
      %v1320 = vld [vmem:[%s8] sm:$0x3]
      %v1322 = vlaneseq
      %v1323 = vshrl.u32 %v1322, 7
      %v1324 = vsub.s32 0, %v1323
      %v1325 = vrot.slane %v1320, %v1324
      %v1326 = vlaneseq
      %v1327 = vshrl.u32 %v1326, 7
      %v1328 = vsub.s32 1, %v1327
      %v1329 = vrot.slane %v1320, %v1328
      %v1357 = vunpack.c.l.b16 %v1295
      %v1358 = vunpack.c.h.b16 %v1295
      %v1359 = vunpack.c.l.b16 %v1296
      %v1360 = vunpack.c.h.b16 %v1296
      %v1361 = vunpack.c.l.b16 %v1297
      %v1362 = vunpack.c.h.b16 %v1297
      %v1363 = vunpack.c.l.b16 %v1298
      %v1364 = vunpack.c.h.b16 %v1298
      %v1365 = vunpack.c.l.b16 %v1299
      %v1366 = vunpack.c.h.b16 %v1299
      %v1367 = vunpack.c.l.b16 %v1300
      %v1368 = vunpack.c.h.b16 %v1300
      %v1369 = vunpack.c.l.b16 %v1301
      %v1370 = vunpack.c.h.b16 %v1301
      %v1371 = vunpack.c.l.b16 %v1302
      %v1372 = vunpack.c.h.b16 %v1302
      %v1373 = vunpack.c.l.b16 %v1303
      %v1374 = vunpack.c.h.b16 %v1303
      %v1375 = vunpack.c.l.b16 %v1304
      %v1376 = vunpack.c.h.b16 %v1304
      %v1377 = vunpack.c.l.b16 %v1305
      %v1378 = vunpack.c.h.b16 %v1305
      %v1379 = vunpack.c.l.b16 %v1306
      %v1380 = vunpack.c.h.b16 %v1306
      %v1381 = vunpack.c.l.b16 %v1307
      %v1382 = vunpack.c.h.b16 %v1307
      %v1383 = vunpack.c.l.b16 %v1308
      %v1384 = vunpack.c.h.b16 %v1308
      %v1385 = vunpack.c.l.b16 %v1309
      %v1386 = vunpack.c.h.b16 %v1309
      %v1387 = vunpack.c.l.b16 %v1310
      %v1388 = vunpack.c.h.b16 %v1310
      %v1389 = vunpack.c.l.b16 %v1311
      %v1390 = vunpack.c.h.b16 %v1311
      %v1391 = vunpack.c.l.b16 %v1312
      %v1392 = vunpack.c.h.b16 %v1312
      %v1393 = vunpack.c.l.b16 %v1313
      %v1394 = vunpack.c.h.b16 %v1313
      %v1395 = vunpack.c.l.b16 %v1314
      %v1396 = vunpack.c.h.b16 %v1314
      %v1397 = vunpack.c.l.b16 %v1315
      %v1398 = vunpack.c.h.b16 %v1315
      %v1399 = vunpack.c.l.b16 %v1316
      %v1400 = vunpack.c.h.b16 %v1316
      %v1401 = vunpack.c.l.b16 %v1317
      %v1402 = vunpack.c.h.b16 %v1317
      %v1403 = vunpack.c.l.b16 %v1318
      %v1404 = vunpack.c.h.b16 %v1318
      %v1405 = vunpack.c.l.b16 %v1319
      %v1406 = vunpack.c.h.b16 %v1319
      %v1407 = vpack.c.b16 %v1359, %v1357
      %v1408 = vpack.c.b16 %v1360, %v1358
      %v1409 = vpack.c.b16 %v1363, %v1361
      %v1410 = vpack.c.b16 %v1364, %v1362
      %v1411 = vpack.c.b16 %v1367, %v1365
      %v1412 = vpack.c.b16 %v1368, %v1366
      %v1413 = vpack.c.b16 %v1371, %v1369
      %v1414 = vpack.c.b16 %v1372, %v1370
      %v1415 = vpack.c.b16 %v1375, %v1373
      %v1416 = vpack.c.b16 %v1376, %v1374
      %v1417 = vpack.c.b16 %v1379, %v1377
      %v1418 = vpack.c.b16 %v1380, %v1378
      %v1419 = vpack.c.b16 %v1383, %v1381
      %v1420 = vpack.c.b16 %v1384, %v1382
      %v1421 = vpack.c.b16 %v1387, %v1385
      %v1422 = vpack.c.b16 %v1388, %v1386
      %v1423 = vpack.c.b16 %v1391, %v1389
      %v1424 = vpack.c.b16 %v1392, %v1390
      %v1425 = vpack.c.b16 %v1395, %v1393
      %v1426 = vpack.c.b16 %v1396, %v1394
      %v1427 = vpack.c.b16 %v1399, %v1397
      %v1428 = vpack.c.b16 %v1400, %v1398
      %v1429 = vpack.c.b16 %v1403, %v1401
      %v1430 = vpack.c.b16 %v1404, %v1402
      %v1431 = vpack.c.b16 %v1405, %v1405
      %v1432 = vpack.c.b16 %v1406, %v1406
      %vm1457 = vcmask 588800
      %v1459 = vsel %vm1457, %v1264, 0
      %v1462 = vsel %vm1457, %v1266, 0
      %v1465 = vsel %vm1457, %v1268, 0
      %v1468 = vsel %vm1457, %v1270, 0
      %v1471 = vsel %vm1457, %v1272, 0
      %v1474 = vsel %vm1457, %v1274, 0
      %v1477 = vsel %vm1457, %v1276, 0
      %v1480 = vsel %vm1457, %v1278, 0
      %v1483 = vsel %vm1457, %v1280, 0
      %v1486 = vsel %vm1457, %v1282, 0
      %v1489 = vsel %vm1457, %v1284, 0
      %v1492 = vsel %vm1457, %v1286, 0
      %v1495 = vsel %vm1457, %v1288, 0
      %v1498 = vsel %vm1457, %v1290, 0
      %v1501 = vsel %vm1457, %v1292, 0
      %v1504 = vsel %vm1457, %v1294, 0
      %vm1506 = vcmask 1043456
      %v1508 = vsel %vm1506, %v1431, 0
      %v1511 = vsel %vm1506, %v1432, 0
      %1513 = vmatprep.subr.bf16.mxu0 %v1422
      %1514 = vmatpush1.bf16.msra.mxu0 %v1421
      %1515 = vmatprep.subr.bf16.mxu0 %v1420
      %1516 = vmatpush1.bf16.msra.mxu0 %v1419
      %1517 = vmatprep.subr.bf16.mxu0 %v1418
      %1518 = vmatpush1.bf16.msra.mxu0 %v1417
      %1519 = vmatprep.subr.bf16.mxu0 %v1416
      %1520 = vmatpush1.bf16.msra.mxu0 %v1415
      %1521 = vmatprep.subr.bf16.mxu0 %v1414
      %1522 = vmatpush1.bf16.msra.mxu0 %v1413
      %1523 = vmatprep.subr.bf16.mxu0 %v1412
      %1524 = vmatpush1.bf16.msra.mxu0 %v1411
      %1525 = vmatprep.subr.bf16.mxu0 %v1410
      %1526 = vmatpush1.bf16.msra.mxu0 %v1409
      %1527 = vmatprep.subr.bf16.mxu0 %v1408
      %1528 = vmatpush1.bf16.msra.mxu0 %v1407
      %1529 = vmatprep.subr.bf16.mxu0 0
      %1530 = vmatpush2.bf16.msra.mxu0 0
      %1531 = vmatprep.subr.bf16.mxu0 0
      %1532 = vmatpush2.bf16.msra.mxu0 0
      %1533 = vmatprep.subr.bf16.mxu0 0
      %1534 = vmatpush2.bf16.msra.mxu0 0
      %1535 = vmatprep.subr.bf16.mxu0 %v1511
      %1536 = vmatpush2.bf16.msra.mxu0 %v1508
      %1537 = vmatprep.subr.bf16.mxu0 %v1430
      %1538 = vmatpush2.bf16.msra.mxu0 %v1429
      %1539 = vmatprep.subr.bf16.mxu0 %v1428
      %1540 = vmatpush2.bf16.msra.mxu0 %v1427
      %1541 = vmatprep.subr.bf16.mxu0 %v1426
      %1542 = vmatpush2.bf16.msra.mxu0 %v1425
      %1543 = vmatprep.subr.bf16.mxu0 %v1424
      %1544 = vmatpush2.bf16.msra.mxu0 %v1423
      %1545 = vmatprep.mubr.bf16.mxu0 %v1459
      %1546 = vmatmul.mubr.bf16.gmra.mxu0 %v1263
      %v1547 = vpop.f32.mrf.mxu0
      %v1548 = vadd.f32 %v1325, %v1547
      %v1549 = vpop.f32.mrf.mxu0
      %v1550 = vadd.f32 %v1329, %v1549
      %v1551 = vpop.f32.mrf.mxu0
      %v1552 = vadd.f32 %v1325, %v1551
      %v1553 = vpop.f32.mrf.mxu0
      %v1554 = vadd.f32 %v1329, %v1553
      %1555 = vmatprep.mubr.bf16.mxu0 %v1462
      %1556 = vmatmul.mubr.bf16.gmra.mxu0 %v1265
      %v1557 = vpop.f32.mrf.mxu0
      %v1558 = vadd.f32 %v1325, %v1557
      %v1559 = vpop.f32.mrf.mxu0
      %v1560 = vadd.f32 %v1329, %v1559
      %v1561 = vpop.f32.mrf.mxu0
      %v1562 = vadd.f32 %v1325, %v1561
      %v1563 = vpop.f32.mrf.mxu0
      %v1564 = vadd.f32 %v1329, %v1563
      %1565 = vmatprep.mubr.bf16.mxu0 %v1465
      %1566 = vmatmul.mubr.bf16.gmra.mxu0 %v1267
      %v1567 = vpop.f32.mrf.mxu0
      %v1568 = vadd.f32 %v1325, %v1567
      %v1569 = vpop.f32.mrf.mxu0
      %v1570 = vadd.f32 %v1329, %v1569
      %v1571 = vpop.f32.mrf.mxu0
      %v1572 = vadd.f32 %v1325, %v1571
      %v1573 = vpop.f32.mrf.mxu0
      %v1574 = vadd.f32 %v1329, %v1573
      %1575 = vmatprep.mubr.bf16.mxu0 %v1468
      %1576 = vmatmul.mubr.bf16.gmra.mxu0 %v1269
      %v1577 = vpop.f32.mrf.mxu0
      %v1578 = vadd.f32 %v1325, %v1577
      %v1579 = vpop.f32.mrf.mxu0
      %v1580 = vadd.f32 %v1329, %v1579
      %v1581 = vpop.f32.mrf.mxu0
      %v1582 = vadd.f32 %v1325, %v1581
      %v1583 = vpop.f32.mrf.mxu0
      %v1584 = vadd.f32 %v1329, %v1583
      %1585 = vmatprep.mubr.bf16.mxu0 %v1471
      %1586 = vmatmul.mubr.bf16.gmra.mxu0 %v1271
      %v1587 = vpop.f32.mrf.mxu0
      %v1588 = vadd.f32 %v1325, %v1587
      %v1589 = vpop.f32.mrf.mxu0
      %v1590 = vadd.f32 %v1329, %v1589
      %v1591 = vpop.f32.mrf.mxu0
      %v1592 = vadd.f32 %v1325, %v1591
      %v1593 = vpop.f32.mrf.mxu0
      %v1594 = vadd.f32 %v1329, %v1593
      %1595 = vmatprep.mubr.bf16.mxu0 %v1474
      %1596 = vmatmul.mubr.bf16.gmra.mxu0 %v1273
      %v1597 = vpop.f32.mrf.mxu0
      %v1598 = vadd.f32 %v1325, %v1597
      %v1599 = vpop.f32.mrf.mxu0
      %v1600 = vadd.f32 %v1329, %v1599
      %v1601 = vpop.f32.mrf.mxu0
      %v1602 = vadd.f32 %v1325, %v1601
      %v1603 = vpop.f32.mrf.mxu0
      %v1604 = vadd.f32 %v1329, %v1603
      %1605 = vmatprep.mubr.bf16.mxu0 %v1477
      %1606 = vmatmul.mubr.bf16.gmra.mxu0 %v1275
      %v1607 = vpop.f32.mrf.mxu0
      %v1608 = vadd.f32 %v1325, %v1607
      %v1609 = vpop.f32.mrf.mxu0
      %v1610 = vadd.f32 %v1329, %v1609
      %v1611 = vpop.f32.mrf.mxu0
      %v1612 = vadd.f32 %v1325, %v1611
      %v1613 = vpop.f32.mrf.mxu0
      %v1614 = vadd.f32 %v1329, %v1613
      %1615 = vmatprep.mubr.bf16.mxu0 %v1480
      %1616 = vmatmul.mubr.bf16.gmra.mxu0 %v1277
      %v1617 = vpop.f32.mrf.mxu0
      %v1618 = vadd.f32 %v1325, %v1617
      %v1619 = vpop.f32.mrf.mxu0
      %v1620 = vadd.f32 %v1329, %v1619
      %v1621 = vpop.f32.mrf.mxu0
      %v1622 = vadd.f32 %v1325, %v1621
      %v1623 = vpop.f32.mrf.mxu0
      %v1624 = vadd.f32 %v1329, %v1623
      %1625 = vmatprep.mubr.bf16.mxu0 %v1483
      %1626 = vmatmul.mubr.bf16.gmra.mxu0 %v1279
      %v1627 = vpop.f32.mrf.mxu0
      %v1628 = vadd.f32 %v1325, %v1627
      %v1629 = vpop.f32.mrf.mxu0
      %v1630 = vadd.f32 %v1329, %v1629
      %v1631 = vpop.f32.mrf.mxu0
      %v1632 = vadd.f32 %v1325, %v1631
      %v1633 = vpop.f32.mrf.mxu0
      %v1634 = vadd.f32 %v1329, %v1633
      %1635 = vmatprep.mubr.bf16.mxu0 %v1486
      %1636 = vmatmul.mubr.bf16.gmra.mxu0 %v1281
      %v1637 = vpop.f32.mrf.mxu0
      %v1638 = vadd.f32 %v1325, %v1637
      %v1639 = vpop.f32.mrf.mxu0
      %v1640 = vadd.f32 %v1329, %v1639
      %v1641 = vpop.f32.mrf.mxu0
      %v1642 = vadd.f32 %v1325, %v1641
      %v1643 = vpop.f32.mrf.mxu0
      %v1644 = vadd.f32 %v1329, %v1643
      %1645 = vmatprep.mubr.bf16.mxu0 %v1489
      %1646 = vmatmul.mubr.bf16.gmra.mxu0 %v1283
      %v1647 = vpop.f32.mrf.mxu0
      %v1648 = vadd.f32 %v1325, %v1647
      %v1649 = vpop.f32.mrf.mxu0
      %v1650 = vadd.f32 %v1329, %v1649
      %v1651 = vpop.f32.mrf.mxu0
      %v1652 = vadd.f32 %v1325, %v1651
      %v1653 = vpop.f32.mrf.mxu0
      %v1654 = vadd.f32 %v1329, %v1653
      %1655 = vmatprep.mubr.bf16.mxu0 %v1492
      %1656 = vmatmul.mubr.bf16.gmra.mxu0 %v1285
      %v1657 = vpop.f32.mrf.mxu0
      %v1658 = vadd.f32 %v1325, %v1657
      %v1659 = vpop.f32.mrf.mxu0
      %v1660 = vadd.f32 %v1329, %v1659
      %v1661 = vpop.f32.mrf.mxu0
      %v1662 = vadd.f32 %v1325, %v1661
      %v1663 = vpop.f32.mrf.mxu0
      %v1664 = vadd.f32 %v1329, %v1663
      %1665 = vmatprep.mubr.bf16.mxu0 %v1495
      %1666 = vmatmul.mubr.bf16.gmra.mxu0 %v1287
      %v1667 = vpop.f32.mrf.mxu0
      %v1668 = vadd.f32 %v1325, %v1667
      %v1669 = vpop.f32.mrf.mxu0
      %v1670 = vadd.f32 %v1329, %v1669
      %v1671 = vpop.f32.mrf.mxu0
      %v1672 = vadd.f32 %v1325, %v1671
      %v1673 = vpop.f32.mrf.mxu0
      %v1674 = vadd.f32 %v1329, %v1673
      %1675 = vmatprep.mubr.bf16.mxu0 %v1498
      %1676 = vmatmul.mubr.bf16.gmra.mxu0 %v1289
      %v1677 = vpop.f32.mrf.mxu0
      %v1678 = vadd.f32 %v1325, %v1677
      %v1679 = vpop.f32.mrf.mxu0
      %v1680 = vadd.f32 %v1329, %v1679
      %v1681 = vpop.f32.mrf.mxu0
      %v1682 = vadd.f32 %v1325, %v1681
      %v1683 = vpop.f32.mrf.mxu0
      %v1684 = vadd.f32 %v1329, %v1683
      %1685 = vmatprep.mubr.bf16.mxu0 %v1501
      %1686 = vmatmul.mubr.bf16.gmra.mxu0 %v1291
      %v1687 = vpop.f32.mrf.mxu0
      %v1688 = vadd.f32 %v1325, %v1687
      %v1689 = vpop.f32.mrf.mxu0
      %v1690 = vadd.f32 %v1329, %v1689
      %v1691 = vpop.f32.mrf.mxu0
      %v1692 = vadd.f32 %v1325, %v1691
      %v1693 = vpop.f32.mrf.mxu0
      %v1694 = vadd.f32 %v1329, %v1693
      %1695 = vmatprep.mubr.bf16.mxu0 %v1504
      %1696 = vmatmul.mubr.bf16.gmra.mxu0 %v1293
      %v1697 = vpop.f32.mrf.mxu0
      %v1698 = vadd.f32 %v1325, %v1697
      %v1699 = vpop.f32.mrf.mxu0
      %v1700 = vadd.f32 %v1329, %v1699
      %v1701 = vpop.f32.mrf.mxu0
      %v1702 = vadd.f32 %v1325, %v1701
      %v1703 = vpop.f32.mrf.mxu0
      %v1704 = vadd.f32 %v1329, %v1703
      %1705 = vdwg.mxu0
      %vm1706 = vcmp.gt.f32.partialorder %v1548, 0.0
      %vm1707 = vcmp.gt.f32.partialorder %v1550, 0.0
      %vm1708 = vcmp.gt.f32.partialorder %v1552, 0.0
      %vm1709 = vcmp.gt.f32.partialorder %v1554, 0.0
      %vm1710 = vcmp.gt.f32.partialorder %v1558, 0.0
      %vm1711 = vcmp.gt.f32.partialorder %v1560, 0.0
      %vm1712 = vcmp.gt.f32.partialorder %v1562, 0.0
      %vm1713 = vcmp.gt.f32.partialorder %v1564, 0.0
      %vm1714 = vcmp.gt.f32.partialorder %v1568, 0.0
      %vm1715 = vcmp.gt.f32.partialorder %v1570, 0.0
      %vm1716 = vcmp.gt.f32.partialorder %v1572, 0.0
      %vm1717 = vcmp.gt.f32.partialorder %v1574, 0.0
      %vm1718 = vcmp.gt.f32.partialorder %v1578, 0.0
      %vm1719 = vcmp.gt.f32.partialorder %v1580, 0.0
      %vm1720 = vcmp.gt.f32.partialorder %v1582, 0.0
      %vm1721 = vcmp.gt.f32.partialorder %v1584, 0.0
      %vm1722 = vcmp.gt.f32.partialorder %v1588, 0.0
      %vm1723 = vcmp.gt.f32.partialorder %v1590, 0.0
      %vm1724 = vcmp.gt.f32.partialorder %v1592, 0.0
      %vm1725 = vcmp.gt.f32.partialorder %v1594, 0.0
      %vm1726 = vcmp.gt.f32.partialorder %v1598, 0.0
      %vm1727 = vcmp.gt.f32.partialorder %v1600, 0.0
      %vm1728 = vcmp.gt.f32.partialorder %v1602, 0.0
      %vm1729 = vcmp.gt.f32.partialorder %v1604, 0.0
      %vm1730 = vcmp.gt.f32.partialorder %v1608, 0.0
      %vm1731 = vcmp.gt.f32.partialorder %v1610, 0.0
      %vm1732 = vcmp.gt.f32.partialorder %v1612, 0.0
      %vm1733 = vcmp.gt.f32.partialorder %v1614, 0.0
      %vm1734 = vcmp.gt.f32.partialorder %v1618, 0.0
      %vm1735 = vcmp.gt.f32.partialorder %v1620, 0.0
      %vm1736 = vcmp.gt.f32.partialorder %v1622, 0.0
      %vm1737 = vcmp.gt.f32.partialorder %v1624, 0.0
      %vm1738 = vcmp.gt.f32.partialorder %v1628, 0.0
      %vm1739 = vcmp.gt.f32.partialorder %v1630, 0.0
      %vm1740 = vcmp.gt.f32.partialorder %v1632, 0.0
      %vm1741 = vcmp.gt.f32.partialorder %v1634, 0.0
      %vm1742 = vcmp.gt.f32.partialorder %v1638, 0.0
      %vm1743 = vcmp.gt.f32.partialorder %v1640, 0.0
      %vm1744 = vcmp.gt.f32.partialorder %v1642, 0.0
      %vm1745 = vcmp.gt.f32.partialorder %v1644, 0.0
      %vm1746 = vcmp.gt.f32.partialorder %v1648, 0.0
      %vm1747 = vcmp.gt.f32.partialorder %v1650, 0.0
      %vm1748 = vcmp.gt.f32.partialorder %v1652, 0.0
      %vm1749 = vcmp.gt.f32.partialorder %v1654, 0.0
      %vm1750 = vcmp.gt.f32.partialorder %v1658, 0.0
      %vm1751 = vcmp.gt.f32.partialorder %v1660, 0.0
      %vm1752 = vcmp.gt.f32.partialorder %v1662, 0.0
      %vm1753 = vcmp.gt.f32.partialorder %v1664, 0.0
      %vm1754 = vcmp.gt.f32.partialorder %v1668, 0.0
      %vm1755 = vcmp.gt.f32.partialorder %v1670, 0.0
      %vm1756 = vcmp.gt.f32.partialorder %v1672, 0.0
      %vm1757 = vcmp.gt.f32.partialorder %v1674, 0.0
      %vm1758 = vcmp.gt.f32.partialorder %v1678, 0.0
      %vm1759 = vcmp.gt.f32.partialorder %v1680, 0.0
      %vm1760 = vcmp.gt.f32.partialorder %v1682, 0.0
      %vm1761 = vcmp.gt.f32.partialorder %v1684, 0.0
      %vm1762 = vcmp.gt.f32.partialorder %v1688, 0.0
      %vm1763 = vcmp.gt.f32.partialorder %v1690, 0.0
      %vm1764 = vcmp.gt.f32.partialorder %v1692, 0.0
      %vm1765 = vcmp.gt.f32.partialorder %v1694, 0.0
      %vm1766 = vcmp.gt.f32.partialorder %v1698, 0.0
      %vm1767 = vcmp.gt.f32.partialorder %v1700, 0.0
      %vm1768 = vcmp.gt.f32.partialorder %v1702, 0.0
      %vm1769 = vcmp.gt.f32.partialorder %v1704, 0.0
      %v1770 = vmul.f32 %v1548, 1.442695
      %v1771 = vpow.pop %v1770
      %v1772 = vmul.f32 %v1550, 1.442695
      %v1773 = vpow.pop %v1772
      %v1774 = vmul.f32 %v1552, 1.442695
      %v1775 = vpow.pop %v1774
      %v1776 = vmul.f32 %v1554, 1.442695
      %v1777 = vpow.pop %v1776
      %v1778 = vmul.f32 %v1558, 1.442695
      %v1779 = vpow.pop %v1778
      %v1780 = vmul.f32 %v1560, 1.442695
      %v1781 = vpow.pop %v1780
      %v1782 = vmul.f32 %v1562, 1.442695
      %v1783 = vpow.pop %v1782
      %v1784 = vmul.f32 %v1564, 1.442695
      %v1785 = vpow.pop %v1784
      %v1786 = vmul.f32 %v1568, 1.442695
      %v1787 = vpow.pop %v1786
      %v1788 = vmul.f32 %v1570, 1.442695
      %v1789 = vpow.pop %v1788
      %v1790 = vmul.f32 %v1572, 1.442695
      %v1791 = vpow.pop %v1790
      %v1792 = vmul.f32 %v1574, 1.442695
      %v1793 = vpow.pop %v1792
      %v1794 = vmul.f32 %v1578, 1.442695
      %v1795 = vpow.pop %v1794
      %v1796 = vmul.f32 %v1580, 1.442695
      %v1797 = vpow.pop %v1796
      %v1798 = vmul.f32 %v1582, 1.442695
      %v1799 = vpow.pop %v1798
      %v1800 = vmul.f32 %v1584, 1.442695
      %v1801 = vpow.pop %v1800
      %v1802 = vmul.f32 %v1588, 1.442695
      %v1803 = vpow.pop %v1802
      %v1804 = vmul.f32 %v1590, 1.442695
      %v1805 = vpow.pop %v1804
      %v1806 = vmul.f32 %v1592, 1.442695
      %v1807 = vpow.pop %v1806
      %v1808 = vmul.f32 %v1594, 1.442695
      %v1809 = vpow.pop %v1808
      %v1810 = vmul.f32 %v1598, 1.442695
      %v1811 = vpow.pop %v1810
      %v1812 = vmul.f32 %v1600, 1.442695
      %v1813 = vpow.pop %v1812
      %v1814 = vmul.f32 %v1602, 1.442695
      %v1815 = vpow.pop %v1814
      %v1816 = vmul.f32 %v1604, 1.442695
      %v1817 = vpow.pop %v1816
      %v1818 = vmul.f32 %v1608, 1.442695
      %v1819 = vpow.pop %v1818
      %v1820 = vmul.f32 %v1610, 1.442695
      %v1821 = vpow.pop %v1820
      %v1822 = vmul.f32 %v1612, 1.442695
      %v1823 = vpow.pop %v1822
      %v1824 = vmul.f32 %v1614, 1.442695
      %v1825 = vpow.pop %v1824
      %v1826 = vmul.f32 %v1618, 1.442695
      %v1827 = vpow.pop %v1826
      %v1828 = vmul.f32 %v1620, 1.442695
      %v1829 = vpow.pop %v1828
      %v1830 = vmul.f32 %v1622, 1.442695
      %v1831 = vpow.pop %v1830
      %v1832 = vmul.f32 %v1624, 1.442695
      %v1833 = vpow.pop %v1832
      %v1834 = vmul.f32 %v1628, 1.442695
      %v1835 = vpow.pop %v1834
      %v1836 = vmul.f32 %v1630, 1.442695
      %v1837 = vpow.pop %v1836
      %v1838 = vmul.f32 %v1632, 1.442695
      %v1839 = vpow.pop %v1838
      %v1840 = vmul.f32 %v1634, 1.442695
      %v1841 = vpow.pop %v1840
      %v1842 = vmul.f32 %v1638, 1.442695
      %v1843 = vpow.pop %v1842
      %v1844 = vmul.f32 %v1640, 1.442695
      %v1845 = vpow.pop %v1844
      %v1846 = vmul.f32 %v1642, 1.442695
      %v1847 = vpow.pop %v1846
      %v1848 = vmul.f32 %v1644, 1.442695
      %v1849 = vpow.pop %v1848
      %v1850 = vmul.f32 %v1648, 1.442695
      %v1851 = vpow.pop %v1850
      %v1852 = vmul.f32 %v1650, 1.442695
      %v1853 = vpow.pop %v1852
      %v1854 = vmul.f32 %v1652, 1.442695
      %v1855 = vpow.pop %v1854
      %v1856 = vmul.f32 %v1654, 1.442695
      %v1857 = vpow.pop %v1856
      %v1858 = vmul.f32 %v1658, 1.442695
      %v1859 = vpow.pop %v1858
      %v1860 = vmul.f32 %v1660, 1.442695
      %v1861 = vpow.pop %v1860
      %v1862 = vmul.f32 %v1662, 1.442695
      %v1863 = vpow.pop %v1862
      %v1864 = vmul.f32 %v1664, 1.442695
      %v1865 = vpow.pop %v1864
      %v1866 = vmul.f32 %v1668, 1.442695
      %v1867 = vpow.pop %v1866
      %v1868 = vmul.f32 %v1670, 1.442695
      %v1869 = vpow.pop %v1868
      %v1870 = vmul.f32 %v1672, 1.442695
      %v1871 = vpow.pop %v1870
      %v1872 = vmul.f32 %v1674, 1.442695
      %v1873 = vpow.pop %v1872
      %v1874 = vmul.f32 %v1678, 1.442695
      %v1875 = vpow.pop %v1874
      %v1876 = vmul.f32 %v1680, 1.442695
      %v1877 = vpow.pop %v1876
      %v1878 = vmul.f32 %v1682, 1.442695
      %v1879 = vpow.pop %v1878
      %v1880 = vmul.f32 %v1684, 1.442695
      %v1881 = vpow.pop %v1880
      %v1882 = vmul.f32 %v1688, 1.442695
      %v1883 = vpow.pop %v1882
      %v1884 = vmul.f32 %v1690, 1.442695
      %v1885 = vpow.pop %v1884
      %v1886 = vmul.f32 %v1692, 1.442695
      %v1887 = vpow.pop %v1886
      %v1888 = vmul.f32 %v1694, 1.442695
      %v1889 = vpow.pop %v1888
      %v1890 = vmul.f32 %v1698, 1.442695
      %v1891 = vpow.pop %v1890
      %v1892 = vmul.f32 %v1700, 1.442695
      %v1893 = vpow.pop %v1892
      %v1894 = vmul.f32 %v1702, 1.442695
      %v1895 = vpow.pop %v1894
      %v1896 = vmul.f32 %v1704, 1.442695
      %v1897 = vpow.pop %v1896
      %v1898 = vsub.f32 %v1771, 1.0
      %v1899 = vsub.f32 %v1773, 1.0
      %v1900 = vsub.f32 %v1775, 1.0
      %v1901 = vsub.f32 %v1777, 1.0
      %v1902 = vsub.f32 %v1779, 1.0
      %v1903 = vsub.f32 %v1781, 1.0
      %v1904 = vsub.f32 %v1783, 1.0
      %v1905 = vsub.f32 %v1785, 1.0
      %v1906 = vsub.f32 %v1787, 1.0
      %v1907 = vsub.f32 %v1789, 1.0
      %v1908 = vsub.f32 %v1791, 1.0
      %v1909 = vsub.f32 %v1793, 1.0
      %v1910 = vsub.f32 %v1795, 1.0
      %v1911 = vsub.f32 %v1797, 1.0
      %v1912 = vsub.f32 %v1799, 1.0
      %v1913 = vsub.f32 %v1801, 1.0
      %v1914 = vsub.f32 %v1803, 1.0
      %v1915 = vsub.f32 %v1805, 1.0
      %v1916 = vsub.f32 %v1807, 1.0
      %v1917 = vsub.f32 %v1809, 1.0
      %v1918 = vsub.f32 %v1811, 1.0
      %v1919 = vsub.f32 %v1813, 1.0
      %v1920 = vsub.f32 %v1815, 1.0
      %v1921 = vsub.f32 %v1817, 1.0
      %v1922 = vsub.f32 %v1819, 1.0
      %v1923 = vsub.f32 %v1821, 1.0
      %v1924 = vsub.f32 %v1823, 1.0
      %v1925 = vsub.f32 %v1825, 1.0
      %v1926 = vsub.f32 %v1827, 1.0
      %v1927 = vsub.f32 %v1829, 1.0
      %v1928 = vsub.f32 %v1831, 1.0
      %v1929 = vsub.f32 %v1833, 1.0
      %v1930 = vsub.f32 %v1835, 1.0
      %v1931 = vsub.f32 %v1837, 1.0
      %v1932 = vsub.f32 %v1839, 1.0
      %v1933 = vsub.f32 %v1841, 1.0
      %v1934 = vsub.f32 %v1843, 1.0
      %v1935 = vsub.f32 %v1845, 1.0
      %v1936 = vsub.f32 %v1847, 1.0
      %v1937 = vsub.f32 %v1849, 1.0
      %v1938 = vsub.f32 %v1851, 1.0
      %v1939 = vsub.f32 %v1853, 1.0
      %v1940 = vsub.f32 %v1855, 1.0
      %v1941 = vsub.f32 %v1857, 1.0
      %v1942 = vsub.f32 %v1859, 1.0
      %v1943 = vsub.f32 %v1861, 1.0
      %v1944 = vsub.f32 %v1863, 1.0
      %v1945 = vsub.f32 %v1865, 1.0
      %v1946 = vsub.f32 %v1867, 1.0
      %v1947 = vsub.f32 %v1869, 1.0
      %v1948 = vsub.f32 %v1871, 1.0
      %v1949 = vsub.f32 %v1873, 1.0
      %v1950 = vsub.f32 %v1875, 1.0
      %v1951 = vsub.f32 %v1877, 1.0
      %v1952 = vsub.f32 %v1879, 1.0
      %v1953 = vsub.f32 %v1881, 1.0
      %v1954 = vsub.f32 %v1883, 1.0
      %v1955 = vsub.f32 %v1885, 1.0
      %v1956 = vsub.f32 %v1887, 1.0
      %v1957 = vsub.f32 %v1889, 1.0
      %v1958 = vsub.f32 %v1891, 1.0
      %v1959 = vsub.f32 %v1893, 1.0
      %v1960 = vsub.f32 %v1895, 1.0
      %v1961 = vsub.f32 %v1897, 1.0
      %v1962 = vsel %vm1706, %v1548, %v1898
      %v1963 = vsel %vm1707, %v1550, %v1899
      %v1964 = vsel %vm1708, %v1552, %v1900
      %v1965 = vsel %vm1709, %v1554, %v1901
      %v1966 = vsel %vm1710, %v1558, %v1902
      %v1967 = vsel %vm1711, %v1560, %v1903
      %v1968 = vsel %vm1712, %v1562, %v1904
      %v1969 = vsel %vm1713, %v1564, %v1905
      %v1970 = vsel %vm1714, %v1568, %v1906
      %v1971 = vsel %vm1715, %v1570, %v1907
      %v1972 = vsel %vm1716, %v1572, %v1908
      %v1973 = vsel %vm1717, %v1574, %v1909
      %v1974 = vsel %vm1718, %v1578, %v1910
      %v1975 = vsel %vm1719, %v1580, %v1911
      %v1976 = vsel %vm1720, %v1582, %v1912
      %v1977 = vsel %vm1721, %v1584, %v1913
      %v1978 = vsel %vm1722, %v1588, %v1914
      %v1979 = vsel %vm1723, %v1590, %v1915
      %v1980 = vsel %vm1724, %v1592, %v1916
      %v1981 = vsel %vm1725, %v1594, %v1917
      %v1982 = vsel %vm1726, %v1598, %v1918
      %v1983 = vsel %vm1727, %v1600, %v1919
      %v1984 = vsel %vm1728, %v1602, %v1920
      %v1985 = vsel %vm1729, %v1604, %v1921
      %v1986 = vsel %vm1730, %v1608, %v1922
      %v1987 = vsel %vm1731, %v1610, %v1923
      %v1988 = vsel %vm1732, %v1612, %v1924
      %v1989 = vsel %vm1733, %v1614, %v1925
      %v1990 = vsel %vm1734, %v1618, %v1926
      %v1991 = vsel %vm1735, %v1620, %v1927
      %v1992 = vsel %vm1736, %v1622, %v1928
      %v1993 = vsel %vm1737, %v1624, %v1929
      %v1994 = vsel %vm1738, %v1628, %v1930
      %v1995 = vsel %vm1739, %v1630, %v1931
      %v1996 = vsel %vm1740, %v1632, %v1932
      %v1997 = vsel %vm1741, %v1634, %v1933
      %v1998 = vsel %vm1742, %v1638, %v1934
      %v1999 = vsel %vm1743, %v1640, %v1935
      %v2000 = vsel %vm1744, %v1642, %v1936
      %v2001 = vsel %vm1745, %v1644, %v1937
      %v2002 = vsel %vm1746, %v1648, %v1938
      %v2003 = vsel %vm1747, %v1650, %v1939
      %v2004 = vsel %vm1748, %v1652, %v1940
      %v2005 = vsel %vm1749, %v1654, %v1941
      %v2006 = vsel %vm1750, %v1658, %v1942
      %v2007 = vsel %vm1751, %v1660, %v1943
      %v2008 = vsel %vm1752, %v1662, %v1944
      %v2009 = vsel %vm1753, %v1664, %v1945
      %v2010 = vsel %vm1754, %v1668, %v1946
      %v2011 = vsel %vm1755, %v1670, %v1947
      %v2012 = vsel %vm1756, %v1672, %v1948
      %v2013 = vsel %vm1757, %v1674, %v1949
      %v2014 = vsel %vm1758, %v1678, %v1950
      %v2015 = vsel %vm1759, %v1680, %v1951
      %v2016 = vsel %vm1760, %v1682, %v1952
      %v2017 = vsel %vm1761, %v1684, %v1953
      %v2018 = vsel %vm1762, %v1688, %v1954
      %v2019 = vsel %vm1763, %v1690, %v1955
      %v2020 = vsel %vm1764, %v1692, %v1956
      %v2021 = vsel %vm1765, %v1694, %v1957
      %v2022 = vsel %vm1766, %v1698, %v1958
      %v2023 = vsel %vm1767, %v1700, %v1959
      %v2024 = vsel %vm1768, %v1702, %v1960
      %v2025 = vsel %vm1769, %v1704, %v1961
      %v2026 = vpack.c.bf16 %v1964, %v1962
      %v2027 = vpack.c.bf16 %v1965, %v1963
      %v2028 = vpack.c.bf16 %v1968, %v1966
      %v2029 = vpack.c.bf16 %v1969, %v1967
      %v2030 = vpack.c.bf16 %v1972, %v1970
      %v2031 = vpack.c.bf16 %v1973, %v1971
      %v2032 = vpack.c.bf16 %v1976, %v1974
      %v2033 = vpack.c.bf16 %v1977, %v1975
      %v2034 = vpack.c.bf16 %v1980, %v1978
      %v2035 = vpack.c.bf16 %v1981, %v1979
      %v2036 = vpack.c.bf16 %v1984, %v1982
      %v2037 = vpack.c.bf16 %v1985, %v1983
      %v2038 = vpack.c.bf16 %v1988, %v1986
      %v2039 = vpack.c.bf16 %v1989, %v1987
      %v2040 = vpack.c.bf16 %v1992, %v1990
      %v2041 = vpack.c.bf16 %v1993, %v1991
      %v2042 = vpack.c.bf16 %v1996, %v1994
      %v2043 = vpack.c.bf16 %v1997, %v1995
      %v2044 = vpack.c.bf16 %v2000, %v1998
      %v2045 = vpack.c.bf16 %v2001, %v1999
      %v2046 = vpack.c.bf16 %v2004, %v2002
      %v2047 = vpack.c.bf16 %v2005, %v2003
      %v2048 = vpack.c.bf16 %v2008, %v2006
      %v2049 = vpack.c.bf16 %v2009, %v2007
      %v2050 = vpack.c.bf16 %v2012, %v2010
      %v2051 = vpack.c.bf16 %v2013, %v2011
      %v2052 = vpack.c.bf16 %v2016, %v2014
      %v2053 = vpack.c.bf16 %v2017, %v2015
      %v2054 = vpack.c.bf16 %v2020, %v2018
      %v2055 = vpack.c.bf16 %v2021, %v2019
      %v2056 = vpack.c.bf16 %v2024, %v2022
      %v2057 = vpack.c.bf16 %v2025, %v2023
      %v2058 = vld [vmem:[%s3] sm:$0xff]
      %v2059 = vld [vmem:[%s3 + $0x8] sm:$0xff]
      %v2060 = vld [vmem:[%s3 + $0x10] sm:$0xff]
      %v2061 = vld [vmem:[%s3 + $0x18] sm:$0xff]
      %v2062 = vld [vmem:[%s3 + $0x20] sm:$0xff]
      %v2063 = vld [vmem:[%s3 + $0x28] sm:$0xff]
      %v2064 = vld [vmem:[%s3 + $0x30] sm:$0xff]
      %v2065 = vld [vmem:[%s3 + $0x38] sm:$0xff]
      %v2066 = vld [vmem:[%s3 + $0x40] sm:$0xff]
      %v2067 = vld [vmem:[%s3 + $0x48] sm:$0xff]
      %v2068 = vld [vmem:[%s3 + $0x50] sm:$0xff]
      %v2069 = vld [vmem:[%s3 + $0x58] sm:$0xff]
      %v2070 = vld [vmem:[%s3 + $0x60] sm:$0xff]
      %v2071 = vld [vmem:[%s3 + $0x68] sm:$0xff]
      %v2072 = vld [vmem:[%s3 + $0x70] sm:$0xff]
      %v2073 = vld [vmem:[%s3 + $0x78] sm:$0xff]
      %v2074 = vld [vmem:[%s3 + $0x80] sm:$0xff]
      %v2075 = vld [vmem:[%s3 + $0x88] sm:$0xff]
      %v2076 = vld [vmem:[%s3 + $0x90] sm:$0xff]
      %v2077 = vld [vmem:[%s3 + $0x98] sm:$0xff]
      %v2078 = vld [vmem:[%s3 + $0xa0] sm:$0xff]
      %v2079 = vld [vmem:[%s3 + $0xa8] sm:$0xff]
      %v2080 = vld [vmem:[%s3 + $0xb0] sm:$0xff]
      %v2081 = vld [vmem:[%s3 + $0xb8] sm:$0xff]
      %v2082 = vld [vmem:[%s3 + $0xc0] sm:$0xff]
      %v2083 = vld [vmem:[%s9] sm:$0x3]
      %v2085 = vlaneseq
      %v2086 = vshrl.u32 %v2085, 7
      %v2087 = vsub.s32 0, %v2086
      %v2088 = vrot.slane %v2083, %v2087
      %v2089 = vlaneseq
      %v2090 = vshrl.u32 %v2089, 7
      %v2091 = vsub.s32 1, %v2090
      %v2092 = vrot.slane %v2083, %v2091
      %v2120 = vunpack.c.l.b16 %v2058
      %v2121 = vunpack.c.h.b16 %v2058
      %v2122 = vunpack.c.l.b16 %v2059
      %v2123 = vunpack.c.h.b16 %v2059
      %v2124 = vunpack.c.l.b16 %v2060
      %v2125 = vunpack.c.h.b16 %v2060
      %v2126 = vunpack.c.l.b16 %v2061
      %v2127 = vunpack.c.h.b16 %v2061
      %v2128 = vunpack.c.l.b16 %v2062
      %v2129 = vunpack.c.h.b16 %v2062
      %v2130 = vunpack.c.l.b16 %v2063
      %v2131 = vunpack.c.h.b16 %v2063
      %v2132 = vunpack.c.l.b16 %v2064
      %v2133 = vunpack.c.h.b16 %v2064
      %v2134 = vunpack.c.l.b16 %v2065
      %v2135 = vunpack.c.h.b16 %v2065
      %v2136 = vunpack.c.l.b16 %v2066
      %v2137 = vunpack.c.h.b16 %v2066
      %v2138 = vunpack.c.l.b16 %v2067
      %v2139 = vunpack.c.h.b16 %v2067
      %v2140 = vunpack.c.l.b16 %v2068
      %v2141 = vunpack.c.h.b16 %v2068
      %v2142 = vunpack.c.l.b16 %v2069
      %v2143 = vunpack.c.h.b16 %v2069
      %v2144 = vunpack.c.l.b16 %v2070
      %v2145 = vunpack.c.h.b16 %v2070
      %v2146 = vunpack.c.l.b16 %v2071
      %v2147 = vunpack.c.h.b16 %v2071
      %v2148 = vunpack.c.l.b16 %v2072
      %v2149 = vunpack.c.h.b16 %v2072
      %v2150 = vunpack.c.l.b16 %v2073
      %v2151 = vunpack.c.h.b16 %v2073
      %v2152 = vunpack.c.l.b16 %v2074
      %v2153 = vunpack.c.h.b16 %v2074
      %v2154 = vunpack.c.l.b16 %v2075
      %v2155 = vunpack.c.h.b16 %v2075
      %v2156 = vunpack.c.l.b16 %v2076
      %v2157 = vunpack.c.h.b16 %v2076
      %v2158 = vunpack.c.l.b16 %v2077
      %v2159 = vunpack.c.h.b16 %v2077
      %v2160 = vunpack.c.l.b16 %v2078
      %v2161 = vunpack.c.h.b16 %v2078
      %v2162 = vunpack.c.l.b16 %v2079
      %v2163 = vunpack.c.h.b16 %v2079
      %v2164 = vunpack.c.l.b16 %v2080
      %v2165 = vunpack.c.h.b16 %v2080
      %v2166 = vunpack.c.l.b16 %v2081
      %v2167 = vunpack.c.h.b16 %v2081
      %v2168 = vunpack.c.l.b16 %v2082
      %v2169 = vunpack.c.h.b16 %v2082
      %v2170 = vpack.c.b16 %v2122, %v2120
      %v2171 = vpack.c.b16 %v2123, %v2121
      %v2172 = vpack.c.b16 %v2126, %v2124
      %v2173 = vpack.c.b16 %v2127, %v2125
      %v2174 = vpack.c.b16 %v2130, %v2128
      %v2175 = vpack.c.b16 %v2131, %v2129
      %v2176 = vpack.c.b16 %v2134, %v2132
      %v2177 = vpack.c.b16 %v2135, %v2133
      %v2178 = vpack.c.b16 %v2138, %v2136
      %v2179 = vpack.c.b16 %v2139, %v2137
      %v2180 = vpack.c.b16 %v2142, %v2140
      %v2181 = vpack.c.b16 %v2143, %v2141
      %v2182 = vpack.c.b16 %v2146, %v2144
      %v2183 = vpack.c.b16 %v2147, %v2145
      %v2184 = vpack.c.b16 %v2150, %v2148
      %v2185 = vpack.c.b16 %v2151, %v2149
      %v2186 = vpack.c.b16 %v2154, %v2152
      %v2187 = vpack.c.b16 %v2155, %v2153
      %v2188 = vpack.c.b16 %v2158, %v2156
      %v2189 = vpack.c.b16 %v2159, %v2157
      %v2190 = vpack.c.b16 %v2162, %v2160
      %v2191 = vpack.c.b16 %v2163, %v2161
      %v2192 = vpack.c.b16 %v2166, %v2164
      %v2193 = vpack.c.b16 %v2167, %v2165
      %v2194 = vpack.c.b16 %v2168, %v2168
      %v2195 = vpack.c.b16 %v2169, %v2169
      %v2221 = vsel %vm1457, %v2027, 0
      %v2224 = vsel %vm1457, %v2029, 0
      %v2227 = vsel %vm1457, %v2031, 0
      %v2230 = vsel %vm1457, %v2033, 0
      %v2233 = vsel %vm1457, %v2035, 0
      %v2236 = vsel %vm1457, %v2037, 0
      %v2239 = vsel %vm1457, %v2039, 0
      %v2242 = vsel %vm1457, %v2041, 0
      %v2245 = vsel %vm1457, %v2043, 0
      %v2248 = vsel %vm1457, %v2045, 0
      %v2251 = vsel %vm1457, %v2047, 0
      %v2254 = vsel %vm1457, %v2049, 0
      %v2257 = vsel %vm1457, %v2051, 0
      %v2260 = vsel %vm1457, %v2053, 0
      %v2263 = vsel %vm1457, %v2055, 0
      %v2266 = vsel %vm1457, %v2057, 0
      %v2269 = vsel %vm1506, %v2194, 0
      %v2272 = vsel %vm1506, %v2195, 0
      %2274 = vmatprep.subr.bf16.mxu0 %v2185
      %2275 = vmatpush1.bf16.msra.mxu0 %v2184
      %2276 = vmatprep.subr.bf16.mxu0 %v2183
      %2277 = vmatpush1.bf16.msra.mxu0 %v2182
      %2278 = vmatprep.subr.bf16.mxu0 %v2181
      %2279 = vmatpush1.bf16.msra.mxu0 %v2180
      %2280 = vmatprep.subr.bf16.mxu0 %v2179
      %2281 = vmatpush1.bf16.msra.mxu0 %v2178
      %2282 = vmatprep.subr.bf16.mxu0 %v2177
      %2283 = vmatpush1.bf16.msra.mxu0 %v2176
      %2284 = vmatprep.subr.bf16.mxu0 %v2175
      %2285 = vmatpush1.bf16.msra.mxu0 %v2174
      %2286 = vmatprep.subr.bf16.mxu0 %v2173
      %2287 = vmatpush1.bf16.msra.mxu0 %v2172
      %2288 = vmatprep.subr.bf16.mxu0 %v2171
      %2289 = vmatpush1.bf16.msra.mxu0 %v2170
      %2290 = vmatprep.subr.bf16.mxu0 0
      %2291 = vmatpush2.bf16.msra.mxu0 0
      %2292 = vmatprep.subr.bf16.mxu0 0
      %2293 = vmatpush2.bf16.msra.mxu0 0
      %2294 = vmatprep.subr.bf16.mxu0 0
      %2295 = vmatpush2.bf16.msra.mxu0 0
      %2296 = vmatprep.subr.bf16.mxu0 %v2272
      %2297 = vmatpush2.bf16.msra.mxu0 %v2269
      %2298 = vmatprep.subr.bf16.mxu0 %v2193
      %2299 = vmatpush2.bf16.msra.mxu0 %v2192
      %2300 = vmatprep.subr.bf16.mxu0 %v2191
      %2301 = vmatpush2.bf16.msra.mxu0 %v2190
      %2302 = vmatprep.subr.bf16.mxu0 %v2189
      %2303 = vmatpush2.bf16.msra.mxu0 %v2188
      %2304 = vmatprep.subr.bf16.mxu0 %v2187
      %2305 = vmatpush2.bf16.msra.mxu0 %v2186
      %2306 = vmatprep.mubr.bf16.mxu0 %v2221
      %2307 = vmatmul.mubr.bf16.gmra.mxu0 %v2026
      %v2308 = vpop.f32.mrf.mxu0
      %v2309 = vadd.f32 %v2088, %v2308
      %v2310 = vpop.f32.mrf.mxu0
      %v2311 = vadd.f32 %v2092, %v2310
      %v2312 = vpop.f32.mrf.mxu0
      %v2313 = vadd.f32 %v2088, %v2312
      %v2314 = vpop.f32.mrf.mxu0
      %v2315 = vadd.f32 %v2092, %v2314
      %2316 = vmatprep.mubr.bf16.mxu0 %v2224
      %2317 = vmatmul.mubr.bf16.gmra.mxu0 %v2028
      %v2318 = vpop.f32.mrf.mxu0
      %v2319 = vadd.f32 %v2088, %v2318
      %v2320 = vpop.f32.mrf.mxu0
      %v2321 = vadd.f32 %v2092, %v2320
      %v2322 = vpop.f32.mrf.mxu0
      %v2323 = vadd.f32 %v2088, %v2322
      %v2324 = vpop.f32.mrf.mxu0
      %v2325 = vadd.f32 %v2092, %v2324
      %2326 = vmatprep.mubr.bf16.mxu0 %v2227
      %2327 = vmatmul.mubr.bf16.gmra.mxu0 %v2030
      %v2328 = vpop.f32.mrf.mxu0
      %v2329 = vadd.f32 %v2088, %v2328
      %v2330 = vpop.f32.mrf.mxu0
      %v2331 = vadd.f32 %v2092, %v2330
      %v2332 = vpop.f32.mrf.mxu0
      %v2333 = vadd.f32 %v2088, %v2332
      %v2334 = vpop.f32.mrf.mxu0
      %v2335 = vadd.f32 %v2092, %v2334
      %2336 = vmatprep.mubr.bf16.mxu0 %v2230
      %2337 = vmatmul.mubr.bf16.gmra.mxu0 %v2032
      %v2338 = vpop.f32.mrf.mxu0
      %v2339 = vadd.f32 %v2088, %v2338
      %v2340 = vpop.f32.mrf.mxu0
      %v2341 = vadd.f32 %v2092, %v2340
      %v2342 = vpop.f32.mrf.mxu0
      %v2343 = vadd.f32 %v2088, %v2342
      %v2344 = vpop.f32.mrf.mxu0
      %v2345 = vadd.f32 %v2092, %v2344
      %2346 = vmatprep.mubr.bf16.mxu0 %v2233
      %2347 = vmatmul.mubr.bf16.gmra.mxu0 %v2034
      %v2348 = vpop.f32.mrf.mxu0
      %v2349 = vadd.f32 %v2088, %v2348
      %v2350 = vpop.f32.mrf.mxu0
      %v2351 = vadd.f32 %v2092, %v2350
      %v2352 = vpop.f32.mrf.mxu0
      %v2353 = vadd.f32 %v2088, %v2352
      %v2354 = vpop.f32.mrf.mxu0
      %v2355 = vadd.f32 %v2092, %v2354
      %2356 = vmatprep.mubr.bf16.mxu0 %v2236
      %2357 = vmatmul.mubr.bf16.gmra.mxu0 %v2036
      %v2358 = vpop.f32.mrf.mxu0
      %v2359 = vadd.f32 %v2088, %v2358
      %v2360 = vpop.f32.mrf.mxu0
      %v2361 = vadd.f32 %v2092, %v2360
      %v2362 = vpop.f32.mrf.mxu0
      %v2363 = vadd.f32 %v2088, %v2362
      %v2364 = vpop.f32.mrf.mxu0
      %v2365 = vadd.f32 %v2092, %v2364
      %2366 = vmatprep.mubr.bf16.mxu0 %v2239
      %2367 = vmatmul.mubr.bf16.gmra.mxu0 %v2038
      %v2368 = vpop.f32.mrf.mxu0
      %v2369 = vadd.f32 %v2088, %v2368
      %v2370 = vpop.f32.mrf.mxu0
      %v2371 = vadd.f32 %v2092, %v2370
      %v2372 = vpop.f32.mrf.mxu0
      %v2373 = vadd.f32 %v2088, %v2372
      %v2374 = vpop.f32.mrf.mxu0
      %v2375 = vadd.f32 %v2092, %v2374
      %2376 = vmatprep.mubr.bf16.mxu0 %v2242
      %2377 = vmatmul.mubr.bf16.gmra.mxu0 %v2040
      %v2378 = vpop.f32.mrf.mxu0
      %v2379 = vadd.f32 %v2088, %v2378
      %v2380 = vpop.f32.mrf.mxu0
      %v2381 = vadd.f32 %v2092, %v2380
      %v2382 = vpop.f32.mrf.mxu0
      %v2383 = vadd.f32 %v2088, %v2382
      %v2384 = vpop.f32.mrf.mxu0
      %v2385 = vadd.f32 %v2092, %v2384
      %2386 = vmatprep.mubr.bf16.mxu0 %v2245
      %2387 = vmatmul.mubr.bf16.gmra.mxu0 %v2042
      %v2388 = vpop.f32.mrf.mxu0
      %v2389 = vadd.f32 %v2088, %v2388
      %v2390 = vpop.f32.mrf.mxu0
      %v2391 = vadd.f32 %v2092, %v2390
      %v2392 = vpop.f32.mrf.mxu0
      %v2393 = vadd.f32 %v2088, %v2392
      %v2394 = vpop.f32.mrf.mxu0
      %v2395 = vadd.f32 %v2092, %v2394
      %2396 = vmatprep.mubr.bf16.mxu0 %v2248
      %2397 = vmatmul.mubr.bf16.gmra.mxu0 %v2044
      %v2398 = vpop.f32.mrf.mxu0
      %v2399 = vadd.f32 %v2088, %v2398
      %v2400 = vpop.f32.mrf.mxu0
      %v2401 = vadd.f32 %v2092, %v2400
      %v2402 = vpop.f32.mrf.mxu0
      %v2403 = vadd.f32 %v2088, %v2402
      %v2404 = vpop.f32.mrf.mxu0
      %v2405 = vadd.f32 %v2092, %v2404
      %2406 = vmatprep.mubr.bf16.mxu0 %v2251
      %2407 = vmatmul.mubr.bf16.gmra.mxu0 %v2046
      %v2408 = vpop.f32.mrf.mxu0
      %v2409 = vadd.f32 %v2088, %v2408
      %v2410 = vpop.f32.mrf.mxu0
      %v2411 = vadd.f32 %v2092, %v2410
      %v2412 = vpop.f32.mrf.mxu0
      %v2413 = vadd.f32 %v2088, %v2412
      %v2414 = vpop.f32.mrf.mxu0
      %v2415 = vadd.f32 %v2092, %v2414
      %2416 = vmatprep.mubr.bf16.mxu0 %v2254
      %2417 = vmatmul.mubr.bf16.gmra.mxu0 %v2048
      %v2418 = vpop.f32.mrf.mxu0
      %v2419 = vadd.f32 %v2088, %v2418
      %v2420 = vpop.f32.mrf.mxu0
      %v2421 = vadd.f32 %v2092, %v2420
      %v2422 = vpop.f32.mrf.mxu0
      %v2423 = vadd.f32 %v2088, %v2422
      %v2424 = vpop.f32.mrf.mxu0
      %v2425 = vadd.f32 %v2092, %v2424
      %2426 = vmatprep.mubr.bf16.mxu0 %v2257
      %2427 = vmatmul.mubr.bf16.gmra.mxu0 %v2050
      %v2428 = vpop.f32.mrf.mxu0
      %v2429 = vadd.f32 %v2088, %v2428
      %v2430 = vpop.f32.mrf.mxu0
      %v2431 = vadd.f32 %v2092, %v2430
      %v2432 = vpop.f32.mrf.mxu0
      %v2433 = vadd.f32 %v2088, %v2432
      %v2434 = vpop.f32.mrf.mxu0
      %v2435 = vadd.f32 %v2092, %v2434
      %2436 = vmatprep.mubr.bf16.mxu0 %v2260
      %2437 = vmatmul.mubr.bf16.gmra.mxu0 %v2052
      %v2438 = vpop.f32.mrf.mxu0
      %v2439 = vadd.f32 %v2088, %v2438
      %v2440 = vpop.f32.mrf.mxu0
      %v2441 = vadd.f32 %v2092, %v2440
      %v2442 = vpop.f32.mrf.mxu0
      %v2443 = vadd.f32 %v2088, %v2442
      %v2444 = vpop.f32.mrf.mxu0
      %v2445 = vadd.f32 %v2092, %v2444
      %2446 = vmatprep.mubr.bf16.mxu0 %v2263
      %2447 = vmatmul.mubr.bf16.gmra.mxu0 %v2054
      %v2448 = vpop.f32.mrf.mxu0
      %v2449 = vadd.f32 %v2088, %v2448
      %v2450 = vpop.f32.mrf.mxu0
      %v2451 = vadd.f32 %v2092, %v2450
      %v2452 = vpop.f32.mrf.mxu0
      %v2453 = vadd.f32 %v2088, %v2452
      %v2454 = vpop.f32.mrf.mxu0
      %v2455 = vadd.f32 %v2092, %v2454
      %2456 = vmatprep.mubr.bf16.mxu0 %v2266
      %2457 = vmatmul.mubr.bf16.gmra.mxu0 %v2056
      %v2458 = vpop.f32.mrf.mxu0
      %v2459 = vadd.f32 %v2088, %v2458
      %v2460 = vpop.f32.mrf.mxu0
      %v2461 = vadd.f32 %v2092, %v2460
      %v2462 = vpop.f32.mrf.mxu0
      %v2463 = vadd.f32 %v2088, %v2462
      %v2464 = vpop.f32.mrf.mxu0
      %v2465 = vadd.f32 %v2092, %v2464
      %2466 = vdwg.mxu0
      %vm2467 = vcmp.gt.f32.partialorder %v2309, 0.0
      %vm2468 = vcmp.gt.f32.partialorder %v2311, 0.0
      %vm2469 = vcmp.gt.f32.partialorder %v2313, 0.0
      %vm2470 = vcmp.gt.f32.partialorder %v2315, 0.0
      %vm2471 = vcmp.gt.f32.partialorder %v2319, 0.0
      %vm2472 = vcmp.gt.f32.partialorder %v2321, 0.0
      %vm2473 = vcmp.gt.f32.partialorder %v2323, 0.0
      %vm2474 = vcmp.gt.f32.partialorder %v2325, 0.0
      %vm2475 = vcmp.gt.f32.partialorder %v2329, 0.0
      %vm2476 = vcmp.gt.f32.partialorder %v2331, 0.0
      %vm2477 = vcmp.gt.f32.partialorder %v2333, 0.0
      %vm2478 = vcmp.gt.f32.partialorder %v2335, 0.0
      %vm2479 = vcmp.gt.f32.partialorder %v2339, 0.0
      %vm2480 = vcmp.gt.f32.partialorder %v2341, 0.0
      %vm2481 = vcmp.gt.f32.partialorder %v2343, 0.0
      %vm2482 = vcmp.gt.f32.partialorder %v2345, 0.0
      %vm2483 = vcmp.gt.f32.partialorder %v2349, 0.0
      %vm2484 = vcmp.gt.f32.partialorder %v2351, 0.0
      %vm2485 = vcmp.gt.f32.partialorder %v2353, 0.0
      %vm2486 = vcmp.gt.f32.partialorder %v2355, 0.0
      %vm2487 = vcmp.gt.f32.partialorder %v2359, 0.0
      %vm2488 = vcmp.gt.f32.partialorder %v2361, 0.0
      %vm2489 = vcmp.gt.f32.partialorder %v2363, 0.0
      %vm2490 = vcmp.gt.f32.partialorder %v2365, 0.0
      %vm2491 = vcmp.gt.f32.partialorder %v2369, 0.0
      %vm2492 = vcmp.gt.f32.partialorder %v2371, 0.0
      %vm2493 = vcmp.gt.f32.partialorder %v2373, 0.0
      %vm2494 = vcmp.gt.f32.partialorder %v2375, 0.0
      %vm2495 = vcmp.gt.f32.partialorder %v2379, 0.0
      %vm2496 = vcmp.gt.f32.partialorder %v2381, 0.0
      %vm2497 = vcmp.gt.f32.partialorder %v2383, 0.0
      %vm2498 = vcmp.gt.f32.partialorder %v2385, 0.0
      %vm2499 = vcmp.gt.f32.partialorder %v2389, 0.0
      %vm2500 = vcmp.gt.f32.partialorder %v2391, 0.0
      %vm2501 = vcmp.gt.f32.partialorder %v2393, 0.0
      %vm2502 = vcmp.gt.f32.partialorder %v2395, 0.0
      %vm2503 = vcmp.gt.f32.partialorder %v2399, 0.0
      %vm2504 = vcmp.gt.f32.partialorder %v2401, 0.0
      %vm2505 = vcmp.gt.f32.partialorder %v2403, 0.0
      %vm2506 = vcmp.gt.f32.partialorder %v2405, 0.0
      %vm2507 = vcmp.gt.f32.partialorder %v2409, 0.0
      %vm2508 = vcmp.gt.f32.partialorder %v2411, 0.0
      %vm2509 = vcmp.gt.f32.partialorder %v2413, 0.0
      %vm2510 = vcmp.gt.f32.partialorder %v2415, 0.0
      %vm2511 = vcmp.gt.f32.partialorder %v2419, 0.0
      %vm2512 = vcmp.gt.f32.partialorder %v2421, 0.0
      %vm2513 = vcmp.gt.f32.partialorder %v2423, 0.0
      %vm2514 = vcmp.gt.f32.partialorder %v2425, 0.0
      %vm2515 = vcmp.gt.f32.partialorder %v2429, 0.0
      %vm2516 = vcmp.gt.f32.partialorder %v2431, 0.0
      %vm2517 = vcmp.gt.f32.partialorder %v2433, 0.0
      %vm2518 = vcmp.gt.f32.partialorder %v2435, 0.0
      %vm2519 = vcmp.gt.f32.partialorder %v2439, 0.0
      %vm2520 = vcmp.gt.f32.partialorder %v2441, 0.0
      %vm2521 = vcmp.gt.f32.partialorder %v2443, 0.0
      %vm2522 = vcmp.gt.f32.partialorder %v2445, 0.0
      %vm2523 = vcmp.gt.f32.partialorder %v2449, 0.0
      %vm2524 = vcmp.gt.f32.partialorder %v2451, 0.0
      %vm2525 = vcmp.gt.f32.partialorder %v2453, 0.0
      %vm2526 = vcmp.gt.f32.partialorder %v2455, 0.0
      %vm2527 = vcmp.gt.f32.partialorder %v2459, 0.0
      %vm2528 = vcmp.gt.f32.partialorder %v2461, 0.0
      %vm2529 = vcmp.gt.f32.partialorder %v2463, 0.0
      %vm2530 = vcmp.gt.f32.partialorder %v2465, 0.0
      %v2531 = vmul.f32 %v2309, 1.442695
      %v2532 = vpow.pop %v2531
      %v2533 = vmul.f32 %v2311, 1.442695
      %v2534 = vpow.pop %v2533
      %v2535 = vmul.f32 %v2313, 1.442695
      %v2536 = vpow.pop %v2535
      %v2537 = vmul.f32 %v2315, 1.442695
      %v2538 = vpow.pop %v2537
      %v2539 = vmul.f32 %v2319, 1.442695
      %v2540 = vpow.pop %v2539
      %v2541 = vmul.f32 %v2321, 1.442695
      %v2542 = vpow.pop %v2541
      %v2543 = vmul.f32 %v2323, 1.442695
      %v2544 = vpow.pop %v2543
      %v2545 = vmul.f32 %v2325, 1.442695
      %v2546 = vpow.pop %v2545
      %v2547 = vmul.f32 %v2329, 1.442695
      %v2548 = vpow.pop %v2547
      %v2549 = vmul.f32 %v2331, 1.442695
      %v2550 = vpow.pop %v2549
      %v2551 = vmul.f32 %v2333, 1.442695
      %v2552 = vpow.pop %v2551
      %v2553 = vmul.f32 %v2335, 1.442695
      %v2554 = vpow.pop %v2553
      %v2555 = vmul.f32 %v2339, 1.442695
      %v2556 = vpow.pop %v2555
      %v2557 = vmul.f32 %v2341, 1.442695
      %v2558 = vpow.pop %v2557
      %v2559 = vmul.f32 %v2343, 1.442695
      %v2560 = vpow.pop %v2559
      %v2561 = vmul.f32 %v2345, 1.442695
      %v2562 = vpow.pop %v2561
      %v2563 = vmul.f32 %v2349, 1.442695
      %v2564 = vpow.pop %v2563
      %v2565 = vmul.f32 %v2351, 1.442695
      %v2566 = vpow.pop %v2565
      %v2567 = vmul.f32 %v2353, 1.442695
      %v2568 = vpow.pop %v2567
      %v2569 = vmul.f32 %v2355, 1.442695
      %v2570 = vpow.pop %v2569
      %v2571 = vmul.f32 %v2359, 1.442695
      %v2572 = vpow.pop %v2571
      %v2573 = vmul.f32 %v2361, 1.442695
      %v2574 = vpow.pop %v2573
      %v2575 = vmul.f32 %v2363, 1.442695
      %v2576 = vpow.pop %v2575
      %v2577 = vmul.f32 %v2365, 1.442695
      %v2578 = vpow.pop %v2577
      %v2579 = vmul.f32 %v2369, 1.442695
      %v2580 = vpow.pop %v2579
      %v2581 = vmul.f32 %v2371, 1.442695
      %v2582 = vpow.pop %v2581
      %v2583 = vmul.f32 %v2373, 1.442695
      %v2584 = vpow.pop %v2583
      %v2585 = vmul.f32 %v2375, 1.442695
      %v2586 = vpow.pop %v2585
      %v2587 = vmul.f32 %v2379, 1.442695
      %v2588 = vpow.pop %v2587
      %v2589 = vmul.f32 %v2381, 1.442695
      %v2590 = vpow.pop %v2589
      %v2591 = vmul.f32 %v2383, 1.442695
      %v2592 = vpow.pop %v2591
      %v2593 = vmul.f32 %v2385, 1.442695
      %v2594 = vpow.pop %v2593
      %v2595 = vmul.f32 %v2389, 1.442695
      %v2596 = vpow.pop %v2595
      %v2597 = vmul.f32 %v2391, 1.442695
      %v2598 = vpow.pop %v2597
      %v2599 = vmul.f32 %v2393, 1.442695
      %v2600 = vpow.pop %v2599
      %v2601 = vmul.f32 %v2395, 1.442695
      %v2602 = vpow.pop %v2601
      %v2603 = vmul.f32 %v2399, 1.442695
      %v2604 = vpow.pop %v2603
      %v2605 = vmul.f32 %v2401, 1.442695
      %v2606 = vpow.pop %v2605
      %v2607 = vmul.f32 %v2403, 1.442695
      %v2608 = vpow.pop %v2607
      %v2609 = vmul.f32 %v2405, 1.442695
      %v2610 = vpow.pop %v2609
      %v2611 = vmul.f32 %v2409, 1.442695
      %v2612 = vpow.pop %v2611
      %v2613 = vmul.f32 %v2411, 1.442695
      %v2614 = vpow.pop %v2613
      %v2615 = vmul.f32 %v2413, 1.442695
      %v2616 = vpow.pop %v2615
      %v2617 = vmul.f32 %v2415, 1.442695
      %v2618 = vpow.pop %v2617
      %v2619 = vmul.f32 %v2419, 1.442695
      %v2620 = vpow.pop %v2619
      %v2621 = vmul.f32 %v2421, 1.442695
      %v2622 = vpow.pop %v2621
      %v2623 = vmul.f32 %v2423, 1.442695
      %v2624 = vpow.pop %v2623
      %v2625 = vmul.f32 %v2425, 1.442695
      %v2626 = vpow.pop %v2625
      %v2627 = vmul.f32 %v2429, 1.442695
      %v2628 = vpow.pop %v2627
      %v2629 = vmul.f32 %v2431, 1.442695
      %v2630 = vpow.pop %v2629
      %v2631 = vmul.f32 %v2433, 1.442695
      %v2632 = vpow.pop %v2631
      %v2633 = vmul.f32 %v2435, 1.442695
      %v2634 = vpow.pop %v2633
      %v2635 = vmul.f32 %v2439, 1.442695
      %v2636 = vpow.pop %v2635
      %v2637 = vmul.f32 %v2441, 1.442695
      %v2638 = vpow.pop %v2637
      %v2639 = vmul.f32 %v2443, 1.442695
      %v2640 = vpow.pop %v2639
      %v2641 = vmul.f32 %v2445, 1.442695
      %v2642 = vpow.pop %v2641
      %v2643 = vmul.f32 %v2449, 1.442695
      %v2644 = vpow.pop %v2643
      %v2645 = vmul.f32 %v2451, 1.442695
      %v2646 = vpow.pop %v2645
      %v2647 = vmul.f32 %v2453, 1.442695
      %v2648 = vpow.pop %v2647
      %v2649 = vmul.f32 %v2455, 1.442695
      %v2650 = vpow.pop %v2649
      %v2651 = vmul.f32 %v2459, 1.442695
      %v2652 = vpow.pop %v2651
      %v2653 = vmul.f32 %v2461, 1.442695
      %v2654 = vpow.pop %v2653
      %v2655 = vmul.f32 %v2463, 1.442695
      %v2656 = vpow.pop %v2655
      %v2657 = vmul.f32 %v2465, 1.442695
      %v2658 = vpow.pop %v2657
      %v2659 = vsub.f32 %v2532, 1.0
      %v2660 = vsub.f32 %v2534, 1.0
      %v2661 = vsub.f32 %v2536, 1.0
      %v2662 = vsub.f32 %v2538, 1.0
      %v2663 = vsub.f32 %v2540, 1.0
      %v2664 = vsub.f32 %v2542, 1.0
      %v2665 = vsub.f32 %v2544, 1.0
      %v2666 = vsub.f32 %v2546, 1.0
      %v2667 = vsub.f32 %v2548, 1.0
      %v2668 = vsub.f32 %v2550, 1.0
      %v2669 = vsub.f32 %v2552, 1.0
      %v2670 = vsub.f32 %v2554, 1.0
      %v2671 = vsub.f32 %v2556, 1.0
      %v2672 = vsub.f32 %v2558, 1.0
      %v2673 = vsub.f32 %v2560, 1.0
      %v2674 = vsub.f32 %v2562, 1.0
      %v2675 = vsub.f32 %v2564, 1.0
      %v2676 = vsub.f32 %v2566, 1.0
      %v2677 = vsub.f32 %v2568, 1.0
      %v2678 = vsub.f32 %v2570, 1.0
      %v2679 = vsub.f32 %v2572, 1.0
      %v2680 = vsub.f32 %v2574, 1.0
      %v2681 = vsub.f32 %v2576, 1.0
      %v2682 = vsub.f32 %v2578, 1.0
      %v2683 = vsub.f32 %v2580, 1.0
      %v2684 = vsub.f32 %v2582, 1.0
      %v2685 = vsub.f32 %v2584, 1.0
      %v2686 = vsub.f32 %v2586, 1.0
      %v2687 = vsub.f32 %v2588, 1.0
      %v2688 = vsub.f32 %v2590, 1.0
      %v2689 = vsub.f32 %v2592, 1.0
      %v2690 = vsub.f32 %v2594, 1.0
      %v2691 = vsub.f32 %v2596, 1.0
      %v2692 = vsub.f32 %v2598, 1.0
      %v2693 = vsub.f32 %v2600, 1.0
      %v2694 = vsub.f32 %v2602, 1.0
      %v2695 = vsub.f32 %v2604, 1.0
      %v2696 = vsub.f32 %v2606, 1.0
      %v2697 = vsub.f32 %v2608, 1.0
      %v2698 = vsub.f32 %v2610, 1.0
      %v2699 = vsub.f32 %v2612, 1.0
      %v2700 = vsub.f32 %v2614, 1.0
      %v2701 = vsub.f32 %v2616, 1.0
      %v2702 = vsub.f32 %v2618, 1.0
      %v2703 = vsub.f32 %v2620, 1.0
      %v2704 = vsub.f32 %v2622, 1.0
      %v2705 = vsub.f32 %v2624, 1.0
      %v2706 = vsub.f32 %v2626, 1.0
      %v2707 = vsub.f32 %v2628, 1.0
      %v2708 = vsub.f32 %v2630, 1.0
      %v2709 = vsub.f32 %v2632, 1.0
      %v2710 = vsub.f32 %v2634, 1.0
      %v2711 = vsub.f32 %v2636, 1.0
      %v2712 = vsub.f32 %v2638, 1.0
      %v2713 = vsub.f32 %v2640, 1.0
      %v2714 = vsub.f32 %v2642, 1.0
      %v2715 = vsub.f32 %v2644, 1.0
      %v2716 = vsub.f32 %v2646, 1.0
      %v2717 = vsub.f32 %v2648, 1.0
      %v2718 = vsub.f32 %v2650, 1.0
      %v2719 = vsub.f32 %v2652, 1.0
      %v2720 = vsub.f32 %v2654, 1.0
      %v2721 = vsub.f32 %v2656, 1.0
      %v2722 = vsub.f32 %v2658, 1.0
      %v2723 = vsel %vm2467, %v2309, %v2659
      %v2724 = vsel %vm2468, %v2311, %v2660
      %v2725 = vsel %vm2469, %v2313, %v2661
      %v2726 = vsel %vm2470, %v2315, %v2662
      %v2727 = vsel %vm2471, %v2319, %v2663
      %v2728 = vsel %vm2472, %v2321, %v2664
      %v2729 = vsel %vm2473, %v2323, %v2665
      %v2730 = vsel %vm2474, %v2325, %v2666
      %v2731 = vsel %vm2475, %v2329, %v2667
      %v2732 = vsel %vm2476, %v2331, %v2668
      %v2733 = vsel %vm2477, %v2333, %v2669
      %v2734 = vsel %vm2478, %v2335, %v2670
      %v2735 = vsel %vm2479, %v2339, %v2671
      %v2736 = vsel %vm2480, %v2341, %v2672
      %v2737 = vsel %vm2481, %v2343, %v2673
      %v2738 = vsel %vm2482, %v2345, %v2674
      %v2739 = vsel %vm2483, %v2349, %v2675
      %v2740 = vsel %vm2484, %v2351, %v2676
      %v2741 = vsel %vm2485, %v2353, %v2677
      %v2742 = vsel %vm2486, %v2355, %v2678
      %v2743 = vsel %vm2487, %v2359, %v2679
      %v2744 = vsel %vm2488, %v2361, %v2680
      %v2745 = vsel %vm2489, %v2363, %v2681
      %v2746 = vsel %vm2490, %v2365, %v2682
      %v2747 = vsel %vm2491, %v2369, %v2683
      %v2748 = vsel %vm2492, %v2371, %v2684
      %v2749 = vsel %vm2493, %v2373, %v2685
      %v2750 = vsel %vm2494, %v2375, %v2686
      %v2751 = vsel %vm2495, %v2379, %v2687
      %v2752 = vsel %vm2496, %v2381, %v2688
      %v2753 = vsel %vm2497, %v2383, %v2689
      %v2754 = vsel %vm2498, %v2385, %v2690
      %v2755 = vsel %vm2499, %v2389, %v2691
      %v2756 = vsel %vm2500, %v2391, %v2692
      %v2757 = vsel %vm2501, %v2393, %v2693
      %v2758 = vsel %vm2502, %v2395, %v2694
      %v2759 = vsel %vm2503, %v2399, %v2695
      %v2760 = vsel %vm2504, %v2401, %v2696
      %v2761 = vsel %vm2505, %v2403, %v2697
      %v2762 = vsel %vm2506, %v2405, %v2698
      %v2763 = vsel %vm2507, %v2409, %v2699
      %v2764 = vsel %vm2508, %v2411, %v2700
      %v2765 = vsel %vm2509, %v2413, %v2701
      %v2766 = vsel %vm2510, %v2415, %v2702
      %v2767 = vsel %vm2511, %v2419, %v2703
      %v2768 = vsel %vm2512, %v2421, %v2704
      %v2769 = vsel %vm2513, %v2423, %v2705
      %v2770 = vsel %vm2514, %v2425, %v2706
      %v2771 = vsel %vm2515, %v2429, %v2707
      %v2772 = vsel %vm2516, %v2431, %v2708
      %v2773 = vsel %vm2517, %v2433, %v2709
      %v2774 = vsel %vm2518, %v2435, %v2710
      %v2775 = vsel %vm2519, %v2439, %v2711
      %v2776 = vsel %vm2520, %v2441, %v2712
      %v2777 = vsel %vm2521, %v2443, %v2713
      %v2778 = vsel %vm2522, %v2445, %v2714
      %v2779 = vsel %vm2523, %v2449, %v2715
      %v2780 = vsel %vm2524, %v2451, %v2716
      %v2781 = vsel %vm2525, %v2453, %v2717
      %v2782 = vsel %vm2526, %v2455, %v2718
      %v2783 = vsel %vm2527, %v2459, %v2719
      %v2784 = vsel %vm2528, %v2461, %v2720
      %v2785 = vsel %vm2529, %v2463, %v2721
      %v2786 = vsel %vm2530, %v2465, %v2722
      %v2787 = vpack.c.bf16 %v2725, %v2723
      %v2788 = vpack.c.bf16 %v2726, %v2724
      %v2789 = vpack.c.bf16 %v2729, %v2727
      %v2790 = vpack.c.bf16 %v2730, %v2728
      %v2791 = vpack.c.bf16 %v2733, %v2731
      %v2792 = vpack.c.bf16 %v2734, %v2732
      %v2793 = vpack.c.bf16 %v2737, %v2735
      %v2794 = vpack.c.bf16 %v2738, %v2736
      %v2795 = vpack.c.bf16 %v2741, %v2739
      %v2796 = vpack.c.bf16 %v2742, %v2740
      %v2797 = vpack.c.bf16 %v2745, %v2743
      %v2798 = vpack.c.bf16 %v2746, %v2744
      %v2799 = vpack.c.bf16 %v2749, %v2747
      %v2800 = vpack.c.bf16 %v2750, %v2748
      %v2801 = vpack.c.bf16 %v2753, %v2751
      %v2802 = vpack.c.bf16 %v2754, %v2752
      %v2803 = vpack.c.bf16 %v2757, %v2755
      %v2804 = vpack.c.bf16 %v2758, %v2756
      %v2805 = vpack.c.bf16 %v2761, %v2759
      %v2806 = vpack.c.bf16 %v2762, %v2760
      %v2807 = vpack.c.bf16 %v2765, %v2763
      %v2808 = vpack.c.bf16 %v2766, %v2764
      %v2809 = vpack.c.bf16 %v2769, %v2767
      %v2810 = vpack.c.bf16 %v2770, %v2768
      %v2811 = vpack.c.bf16 %v2773, %v2771
      %v2812 = vpack.c.bf16 %v2774, %v2772
      %v2813 = vpack.c.bf16 %v2777, %v2775
      %v2814 = vpack.c.bf16 %v2778, %v2776
      %v2815 = vpack.c.bf16 %v2781, %v2779
      %v2816 = vpack.c.bf16 %v2782, %v2780
      %v2817 = vpack.c.bf16 %v2785, %v2783
      %v2818 = vpack.c.bf16 %v2786, %v2784
      %v2819 = vld [vmem:[%s4] sm:$0xff]
      %v2820 = vld [vmem:[%s4 + $0x8] sm:$0xff]
      %v2821 = vld [vmem:[%s4 + $0x10] sm:$0xff]
      %v2822 = vld [vmem:[%s4 + $0x18] sm:$0xff]
      %v2823 = vld [vmem:[%s4 + $0x20] sm:$0xff]
      %v2824 = vld [vmem:[%s4 + $0x28] sm:$0xff]
      %v2825 = vld [vmem:[%s4 + $0x30] sm:$0xff]
      %v2826 = vld [vmem:[%s4 + $0x38] sm:$0xff]
      %v2827 = vld [vmem:[%s4 + $0x40] sm:$0xff]
      %v2828 = vld [vmem:[%s4 + $0x48] sm:$0xff]
      %v2829 = vld [vmem:[%s4 + $0x50] sm:$0xff]
      %v2830 = vld [vmem:[%s4 + $0x58] sm:$0xff]
      %v2831 = vld [vmem:[%s4 + $0x60] sm:$0xff]
      %v2832 = vld [vmem:[%s4 + $0x68] sm:$0xff]
      %v2833 = vld [vmem:[%s4 + $0x70] sm:$0xff]
      %v2834 = vld [vmem:[%s4 + $0x78] sm:$0xff]
      %v2835 = vld [vmem:[%s4 + $0x80] sm:$0xff]
      %v2836 = vld [vmem:[%s4 + $0x88] sm:$0xff]
      %v2837 = vld [vmem:[%s4 + $0x90] sm:$0xff]
      %v2838 = vld [vmem:[%s4 + $0x98] sm:$0xff]
      %v2839 = vld [vmem:[%s4 + $0xa0] sm:$0xff]
      %v2840 = vld [vmem:[%s4 + $0xa8] sm:$0xff]
      %v2841 = vld [vmem:[%s4 + $0xb0] sm:$0xff]
      %v2842 = vld [vmem:[%s4 + $0xb8] sm:$0xff]
      %v2843 = vld [vmem:[%s4 + $0xc0] sm:$0xff]
      %v2844 = vld [vmem:[%s10] sm:$0x3]
      %v2846 = vlaneseq
      %v2847 = vshrl.u32 %v2846, 7
      %v2848 = vsub.s32 0, %v2847
      %v2849 = vrot.slane %v2844, %v2848
      %v2850 = vlaneseq
      %v2851 = vshrl.u32 %v2850, 7
      %v2852 = vsub.s32 1, %v2851
      %v2853 = vrot.slane %v2844, %v2852
      %v2881 = vunpack.c.l.b16 %v2819
      %v2882 = vunpack.c.h.b16 %v2819
      %v2883 = vunpack.c.l.b16 %v2820
      %v2884 = vunpack.c.h.b16 %v2820
      %v2885 = vunpack.c.l.b16 %v2821
      %v2886 = vunpack.c.h.b16 %v2821
      %v2887 = vunpack.c.l.b16 %v2822
      %v2888 = vunpack.c.h.b16 %v2822
      %v2889 = vunpack.c.l.b16 %v2823
      %v2890 = vunpack.c.h.b16 %v2823
      %v2891 = vunpack.c.l.b16 %v2824
      %v2892 = vunpack.c.h.b16 %v2824
      %v2893 = vunpack.c.l.b16 %v2825
      %v2894 = vunpack.c.h.b16 %v2825
      %v2895 = vunpack.c.l.b16 %v2826
      %v2896 = vunpack.c.h.b16 %v2826
      %v2897 = vunpack.c.l.b16 %v2827
      %v2898 = vunpack.c.h.b16 %v2827
      %v2899 = vunpack.c.l.b16 %v2828
      %v2900 = vunpack.c.h.b16 %v2828
      %v2901 = vunpack.c.l.b16 %v2829
      %v2902 = vunpack.c.h.b16 %v2829
      %v2903 = vunpack.c.l.b16 %v2830
      %v2904 = vunpack.c.h.b16 %v2830
      %v2905 = vunpack.c.l.b16 %v2831
      %v2906 = vunpack.c.h.b16 %v2831
      %v2907 = vunpack.c.l.b16 %v2832
      %v2908 = vunpack.c.h.b16 %v2832
      %v2909 = vunpack.c.l.b16 %v2833
      %v2910 = vunpack.c.h.b16 %v2833
      %v2911 = vunpack.c.l.b16 %v2834
      %v2912 = vunpack.c.h.b16 %v2834
      %v2913 = vunpack.c.l.b16 %v2835
      %v2914 = vunpack.c.h.b16 %v2835
      %v2915 = vunpack.c.l.b16 %v2836
      %v2916 = vunpack.c.h.b16 %v2836
      %v2917 = vunpack.c.l.b16 %v2837
      %v2918 = vunpack.c.h.b16 %v2837
      %v2919 = vunpack.c.l.b16 %v2838
      %v2920 = vunpack.c.h.b16 %v2838
      %v2921 = vunpack.c.l.b16 %v2839
      %v2922 = vunpack.c.h.b16 %v2839
      %v2923 = vunpack.c.l.b16 %v2840
      %v2924 = vunpack.c.h.b16 %v2840
      %v2925 = vunpack.c.l.b16 %v2841
      %v2926 = vunpack.c.h.b16 %v2841
      %v2927 = vunpack.c.l.b16 %v2842
      %v2928 = vunpack.c.h.b16 %v2842
      %v2929 = vunpack.c.l.b16 %v2843
      %v2930 = vunpack.c.h.b16 %v2843
      %v2931 = vpack.c.b16 %v2883, %v2881
      %v2932 = vpack.c.b16 %v2884, %v2882
      %v2933 = vpack.c.b16 %v2887, %v2885
      %v2934 = vpack.c.b16 %v2888, %v2886
      %v2935 = vpack.c.b16 %v2891, %v2889
      %v2936 = vpack.c.b16 %v2892, %v2890
      %v2937 = vpack.c.b16 %v2895, %v2893
      %v2938 = vpack.c.b16 %v2896, %v2894
      %v2939 = vpack.c.b16 %v2899, %v2897
      %v2940 = vpack.c.b16 %v2900, %v2898
      %v2941 = vpack.c.b16 %v2903, %v2901
      %v2942 = vpack.c.b16 %v2904, %v2902
      %v2943 = vpack.c.b16 %v2907, %v2905
      %v2944 = vpack.c.b16 %v2908, %v2906
      %v2945 = vpack.c.b16 %v2911, %v2909
      %v2946 = vpack.c.b16 %v2912, %v2910
      %v2947 = vpack.c.b16 %v2915, %v2913
      %v2948 = vpack.c.b16 %v2916, %v2914
      %v2949 = vpack.c.b16 %v2919, %v2917
      %v2950 = vpack.c.b16 %v2920, %v2918
      %v2951 = vpack.c.b16 %v2923, %v2921
      %v2952 = vpack.c.b16 %v2924, %v2922
      %v2953 = vpack.c.b16 %v2927, %v2925
      %v2954 = vpack.c.b16 %v2928, %v2926
      %v2955 = vpack.c.b16 %v2929, %v2929
      %v2956 = vpack.c.b16 %v2930, %v2930
      %v2982 = vsel %vm1457, %v2788, 0
      %v2985 = vsel %vm1457, %v2790, 0
      %v2988 = vsel %vm1457, %v2792, 0
      %v2991 = vsel %vm1457, %v2794, 0
      %v2994 = vsel %vm1457, %v2796, 0
      %v2997 = vsel %vm1457, %v2798, 0
      %v3000 = vsel %vm1457, %v2800, 0
      %v3003 = vsel %vm1457, %v2802, 0
      %v3006 = vsel %vm1457, %v2804, 0
      %v3009 = vsel %vm1457, %v2806, 0
      %v3012 = vsel %vm1457, %v2808, 0
      %v3015 = vsel %vm1457, %v2810, 0
      %v3018 = vsel %vm1457, %v2812, 0
      %v3021 = vsel %vm1457, %v2814, 0
      %v3024 = vsel %vm1457, %v2816, 0
      %v3027 = vsel %vm1457, %v2818, 0
      %v3030 = vsel %vm1506, %v2955, 0
      %v3033 = vsel %vm1506, %v2956, 0
      %3035 = vmatprep.subr.bf16.mxu0 %v2946
      %3036 = vmatpush1.bf16.msra.mxu0 %v2945
      %3037 = vmatprep.subr.bf16.mxu0 %v2944
      %3038 = vmatpush1.bf16.msra.mxu0 %v2943
      %3039 = vmatprep.subr.bf16.mxu0 %v2942
      %3040 = vmatpush1.bf16.msra.mxu0 %v2941
      %3041 = vmatprep.subr.bf16.mxu0 %v2940
      %3042 = vmatpush1.bf16.msra.mxu0 %v2939
      %3043 = vmatprep.subr.bf16.mxu0 %v2938
      %3044 = vmatpush1.bf16.msra.mxu0 %v2937
      %3045 = vmatprep.subr.bf16.mxu0 %v2936
      %3046 = vmatpush1.bf16.msra.mxu0 %v2935
      %3047 = vmatprep.subr.bf16.mxu0 %v2934
      %3048 = vmatpush1.bf16.msra.mxu0 %v2933
      %3049 = vmatprep.subr.bf16.mxu0 %v2932
      %3050 = vmatpush1.bf16.msra.mxu0 %v2931
      %3051 = vmatprep.subr.bf16.mxu0 0
      %3052 = vmatpush2.bf16.msra.mxu0 0
      %3053 = vmatprep.subr.bf16.mxu0 0
      %3054 = vmatpush2.bf16.msra.mxu0 0
      %3055 = vmatprep.subr.bf16.mxu0 0
      %3056 = vmatpush2.bf16.msra.mxu0 0
      %3057 = vmatprep.subr.bf16.mxu0 %v3033
      %3058 = vmatpush2.bf16.msra.mxu0 %v3030
      %3059 = vmatprep.subr.bf16.mxu0 %v2954
      %3060 = vmatpush2.bf16.msra.mxu0 %v2953
      %3061 = vmatprep.subr.bf16.mxu0 %v2952
      %3062 = vmatpush2.bf16.msra.mxu0 %v2951
      %3063 = vmatprep.subr.bf16.mxu0 %v2950
      %3064 = vmatpush2.bf16.msra.mxu0 %v2949
      %3065 = vmatprep.subr.bf16.mxu0 %v2948
      %3066 = vmatpush2.bf16.msra.mxu0 %v2947
      %3067 = vmatprep.mubr.bf16.mxu0 %v2982
      %3068 = vmatmul.mubr.bf16.gmra.mxu0 %v2787
      %v3069 = vpop.f32.mrf.mxu0
      %v3070 = vadd.f32 %v2849, %v3069
      %v3071 = vpop.f32.mrf.mxu0
      %v3072 = vadd.f32 %v2853, %v3071
      %v3073 = vpop.f32.mrf.mxu0
      %v3074 = vadd.f32 %v2849, %v3073
      %v3075 = vpop.f32.mrf.mxu0
      %v3076 = vadd.f32 %v2853, %v3075
      %3077 = vmatprep.mubr.bf16.mxu0 %v2985
      %3078 = vmatmul.mubr.bf16.gmra.mxu0 %v2789
      %v3079 = vpop.f32.mrf.mxu0
      %v3080 = vadd.f32 %v2849, %v3079
      %v3081 = vpop.f32.mrf.mxu0
      %v3082 = vadd.f32 %v2853, %v3081
      %v3083 = vpop.f32.mrf.mxu0
      %v3084 = vadd.f32 %v2849, %v3083
      %v3085 = vpop.f32.mrf.mxu0
      %v3086 = vadd.f32 %v2853, %v3085
      %3087 = vmatprep.mubr.bf16.mxu0 %v2988
      %3088 = vmatmul.mubr.bf16.gmra.mxu0 %v2791
      %v3089 = vpop.f32.mrf.mxu0
      %v3090 = vadd.f32 %v2849, %v3089
      %v3091 = vpop.f32.mrf.mxu0
      %v3092 = vadd.f32 %v2853, %v3091
      %v3093 = vpop.f32.mrf.mxu0
      %v3094 = vadd.f32 %v2849, %v3093
      %v3095 = vpop.f32.mrf.mxu0
      %v3096 = vadd.f32 %v2853, %v3095
      %3097 = vmatprep.mubr.bf16.mxu0 %v2991
      %3098 = vmatmul.mubr.bf16.gmra.mxu0 %v2793
      %v3099 = vpop.f32.mrf.mxu0
      %v3100 = vadd.f32 %v2849, %v3099
      %v3101 = vpop.f32.mrf.mxu0
      %v3102 = vadd.f32 %v2853, %v3101
      %v3103 = vpop.f32.mrf.mxu0
      %v3104 = vadd.f32 %v2849, %v3103
      %v3105 = vpop.f32.mrf.mxu0
      %v3106 = vadd.f32 %v2853, %v3105
      %3107 = vmatprep.mubr.bf16.mxu0 %v2994
      %3108 = vmatmul.mubr.bf16.gmra.mxu0 %v2795
      %v3109 = vpop.f32.mrf.mxu0
      %v3110 = vadd.f32 %v2849, %v3109
      %v3111 = vpop.f32.mrf.mxu0
      %v3112 = vadd.f32 %v2853, %v3111
      %v3113 = vpop.f32.mrf.mxu0
      %v3114 = vadd.f32 %v2849, %v3113
      %v3115 = vpop.f32.mrf.mxu0
      %v3116 = vadd.f32 %v2853, %v3115
      %3117 = vmatprep.mubr.bf16.mxu0 %v2997
      %3118 = vmatmul.mubr.bf16.gmra.mxu0 %v2797
      %v3119 = vpop.f32.mrf.mxu0
      %v3120 = vadd.f32 %v2849, %v3119
      %v3121 = vpop.f32.mrf.mxu0
      %v3122 = vadd.f32 %v2853, %v3121
      %v3123 = vpop.f32.mrf.mxu0
      %v3124 = vadd.f32 %v2849, %v3123
      %v3125 = vpop.f32.mrf.mxu0
      %v3126 = vadd.f32 %v2853, %v3125
      %3127 = vmatprep.mubr.bf16.mxu0 %v3000
      %3128 = vmatmul.mubr.bf16.gmra.mxu0 %v2799
      %v3129 = vpop.f32.mrf.mxu0
      %v3130 = vadd.f32 %v2849, %v3129
      %v3131 = vpop.f32.mrf.mxu0
      %v3132 = vadd.f32 %v2853, %v3131
      %v3133 = vpop.f32.mrf.mxu0
      %v3134 = vadd.f32 %v2849, %v3133
      %v3135 = vpop.f32.mrf.mxu0
      %v3136 = vadd.f32 %v2853, %v3135
      %3137 = vmatprep.mubr.bf16.mxu0 %v3003
      %3138 = vmatmul.mubr.bf16.gmra.mxu0 %v2801
      %v3139 = vpop.f32.mrf.mxu0
      %v3140 = vadd.f32 %v2849, %v3139
      %v3141 = vpop.f32.mrf.mxu0
      %v3142 = vadd.f32 %v2853, %v3141
      %v3143 = vpop.f32.mrf.mxu0
      %v3144 = vadd.f32 %v2849, %v3143
      %v3145 = vpop.f32.mrf.mxu0
      %v3146 = vadd.f32 %v2853, %v3145
      %3147 = vmatprep.mubr.bf16.mxu0 %v3006
      %3148 = vmatmul.mubr.bf16.gmra.mxu0 %v2803
      %v3149 = vpop.f32.mrf.mxu0
      %v3150 = vadd.f32 %v2849, %v3149
      %v3151 = vpop.f32.mrf.mxu0
      %v3152 = vadd.f32 %v2853, %v3151
      %v3153 = vpop.f32.mrf.mxu0
      %v3154 = vadd.f32 %v2849, %v3153
      %v3155 = vpop.f32.mrf.mxu0
      %v3156 = vadd.f32 %v2853, %v3155
      %3157 = vmatprep.mubr.bf16.mxu0 %v3009
      %3158 = vmatmul.mubr.bf16.gmra.mxu0 %v2805
      %v3159 = vpop.f32.mrf.mxu0
      %v3160 = vadd.f32 %v2849, %v3159
      %v3161 = vpop.f32.mrf.mxu0
      %v3162 = vadd.f32 %v2853, %v3161
      %v3163 = vpop.f32.mrf.mxu0
      %v3164 = vadd.f32 %v2849, %v3163
      %v3165 = vpop.f32.mrf.mxu0
      %v3166 = vadd.f32 %v2853, %v3165
      %3167 = vmatprep.mubr.bf16.mxu0 %v3012
      %3168 = vmatmul.mubr.bf16.gmra.mxu0 %v2807
      %v3169 = vpop.f32.mrf.mxu0
      %v3170 = vadd.f32 %v2849, %v3169
      %v3171 = vpop.f32.mrf.mxu0
      %v3172 = vadd.f32 %v2853, %v3171
      %v3173 = vpop.f32.mrf.mxu0
      %v3174 = vadd.f32 %v2849, %v3173
      %v3175 = vpop.f32.mrf.mxu0
      %v3176 = vadd.f32 %v2853, %v3175
      %3177 = vmatprep.mubr.bf16.mxu0 %v3015
      %3178 = vmatmul.mubr.bf16.gmra.mxu0 %v2809
      %v3179 = vpop.f32.mrf.mxu0
      %v3180 = vadd.f32 %v2849, %v3179
      %v3181 = vpop.f32.mrf.mxu0
      %v3182 = vadd.f32 %v2853, %v3181
      %v3183 = vpop.f32.mrf.mxu0
      %v3184 = vadd.f32 %v2849, %v3183
      %v3185 = vpop.f32.mrf.mxu0
      %v3186 = vadd.f32 %v2853, %v3185
      %3187 = vmatprep.mubr.bf16.mxu0 %v3018
      %3188 = vmatmul.mubr.bf16.gmra.mxu0 %v2811
      %v3189 = vpop.f32.mrf.mxu0
      %v3190 = vadd.f32 %v2849, %v3189
      %v3191 = vpop.f32.mrf.mxu0
      %v3192 = vadd.f32 %v2853, %v3191
      %v3193 = vpop.f32.mrf.mxu0
      %v3194 = vadd.f32 %v2849, %v3193
      %v3195 = vpop.f32.mrf.mxu0
      %v3196 = vadd.f32 %v2853, %v3195
      %3197 = vmatprep.mubr.bf16.mxu0 %v3021
      %3198 = vmatmul.mubr.bf16.gmra.mxu0 %v2813
      %v3199 = vpop.f32.mrf.mxu0
      %v3200 = vadd.f32 %v2849, %v3199
      %v3201 = vpop.f32.mrf.mxu0
      %v3202 = vadd.f32 %v2853, %v3201
      %v3203 = vpop.f32.mrf.mxu0
      %v3204 = vadd.f32 %v2849, %v3203
      %v3205 = vpop.f32.mrf.mxu0
      %v3206 = vadd.f32 %v2853, %v3205
      %3207 = vmatprep.mubr.bf16.mxu0 %v3024
      %3208 = vmatmul.mubr.bf16.gmra.mxu0 %v2815
      %v3209 = vpop.f32.mrf.mxu0
      %v3210 = vadd.f32 %v2849, %v3209
      %v3211 = vpop.f32.mrf.mxu0
      %v3212 = vadd.f32 %v2853, %v3211
      %v3213 = vpop.f32.mrf.mxu0
      %v3214 = vadd.f32 %v2849, %v3213
      %v3215 = vpop.f32.mrf.mxu0
      %v3216 = vadd.f32 %v2853, %v3215
      %3217 = vmatprep.mubr.bf16.mxu0 %v3027
      %3218 = vmatmul.mubr.bf16.gmra.mxu0 %v2817
      %v3219 = vpop.f32.mrf.mxu0
      %v3220 = vadd.f32 %v2849, %v3219
      %v3221 = vpop.f32.mrf.mxu0
      %v3222 = vadd.f32 %v2853, %v3221
      %v3223 = vpop.f32.mrf.mxu0
      %v3224 = vadd.f32 %v2849, %v3223
      %v3225 = vpop.f32.mrf.mxu0
      %v3226 = vadd.f32 %v2853, %v3225
      %3227 = vdwg.mxu0
      %vm3228 = vcmp.gt.f32.partialorder %v3070, 0.0
      %vm3229 = vcmp.gt.f32.partialorder %v3072, 0.0
      %vm3230 = vcmp.gt.f32.partialorder %v3074, 0.0
      %vm3231 = vcmp.gt.f32.partialorder %v3076, 0.0
      %vm3232 = vcmp.gt.f32.partialorder %v3080, 0.0
      %vm3233 = vcmp.gt.f32.partialorder %v3082, 0.0
      %vm3234 = vcmp.gt.f32.partialorder %v3084, 0.0
      %vm3235 = vcmp.gt.f32.partialorder %v3086, 0.0
      %vm3236 = vcmp.gt.f32.partialorder %v3090, 0.0
      %vm3237 = vcmp.gt.f32.partialorder %v3092, 0.0
      %vm3238 = vcmp.gt.f32.partialorder %v3094, 0.0
      %vm3239 = vcmp.gt.f32.partialorder %v3096, 0.0
      %vm3240 = vcmp.gt.f32.partialorder %v3100, 0.0
      %vm3241 = vcmp.gt.f32.partialorder %v3102, 0.0
      %vm3242 = vcmp.gt.f32.partialorder %v3104, 0.0
      %vm3243 = vcmp.gt.f32.partialorder %v3106, 0.0
      %vm3244 = vcmp.gt.f32.partialorder %v3110, 0.0
      %vm3245 = vcmp.gt.f32.partialorder %v3112, 0.0
      %vm3246 = vcmp.gt.f32.partialorder %v3114, 0.0
      %vm3247 = vcmp.gt.f32.partialorder %v3116, 0.0
      %vm3248 = vcmp.gt.f32.partialorder %v3120, 0.0
      %vm3249 = vcmp.gt.f32.partialorder %v3122, 0.0
      %vm3250 = vcmp.gt.f32.partialorder %v3124, 0.0
      %vm3251 = vcmp.gt.f32.partialorder %v3126, 0.0
      %vm3252 = vcmp.gt.f32.partialorder %v3130, 0.0
      %vm3253 = vcmp.gt.f32.partialorder %v3132, 0.0
      %vm3254 = vcmp.gt.f32.partialorder %v3134, 0.0
      %vm3255 = vcmp.gt.f32.partialorder %v3136, 0.0
      %vm3256 = vcmp.gt.f32.partialorder %v3140, 0.0
      %vm3257 = vcmp.gt.f32.partialorder %v3142, 0.0
      %vm3258 = vcmp.gt.f32.partialorder %v3144, 0.0
      %vm3259 = vcmp.gt.f32.partialorder %v3146, 0.0
      %vm3260 = vcmp.gt.f32.partialorder %v3150, 0.0
      %vm3261 = vcmp.gt.f32.partialorder %v3152, 0.0
      %vm3262 = vcmp.gt.f32.partialorder %v3154, 0.0
      %vm3263 = vcmp.gt.f32.partialorder %v3156, 0.0
      %vm3264 = vcmp.gt.f32.partialorder %v3160, 0.0
      %vm3265 = vcmp.gt.f32.partialorder %v3162, 0.0
      %vm3266 = vcmp.gt.f32.partialorder %v3164, 0.0
      %vm3267 = vcmp.gt.f32.partialorder %v3166, 0.0
      %vm3268 = vcmp.gt.f32.partialorder %v3170, 0.0
      %vm3269 = vcmp.gt.f32.partialorder %v3172, 0.0
      %vm3270 = vcmp.gt.f32.partialorder %v3174, 0.0
      %vm3271 = vcmp.gt.f32.partialorder %v3176, 0.0
      %vm3272 = vcmp.gt.f32.partialorder %v3180, 0.0
      %vm3273 = vcmp.gt.f32.partialorder %v3182, 0.0
      %vm3274 = vcmp.gt.f32.partialorder %v3184, 0.0
      %vm3275 = vcmp.gt.f32.partialorder %v3186, 0.0
      %vm3276 = vcmp.gt.f32.partialorder %v3190, 0.0
      %vm3277 = vcmp.gt.f32.partialorder %v3192, 0.0
      %vm3278 = vcmp.gt.f32.partialorder %v3194, 0.0
      %vm3279 = vcmp.gt.f32.partialorder %v3196, 0.0
      %vm3280 = vcmp.gt.f32.partialorder %v3200, 0.0
      %vm3281 = vcmp.gt.f32.partialorder %v3202, 0.0
      %vm3282 = vcmp.gt.f32.partialorder %v3204, 0.0
      %vm3283 = vcmp.gt.f32.partialorder %v3206, 0.0
      %vm3284 = vcmp.gt.f32.partialorder %v3210, 0.0
      %vm3285 = vcmp.gt.f32.partialorder %v3212, 0.0
      %vm3286 = vcmp.gt.f32.partialorder %v3214, 0.0
      %vm3287 = vcmp.gt.f32.partialorder %v3216, 0.0
      %vm3288 = vcmp.gt.f32.partialorder %v3220, 0.0
      %vm3289 = vcmp.gt.f32.partialorder %v3222, 0.0
      %vm3290 = vcmp.gt.f32.partialorder %v3224, 0.0
      %vm3291 = vcmp.gt.f32.partialorder %v3226, 0.0
      %v3292 = vmul.f32 %v3070, 1.442695
      %v3293 = vpow.pop %v3292
      %v3294 = vmul.f32 %v3072, 1.442695
      %v3295 = vpow.pop %v3294
      %v3296 = vmul.f32 %v3074, 1.442695
      %v3297 = vpow.pop %v3296
      %v3298 = vmul.f32 %v3076, 1.442695
      %v3299 = vpow.pop %v3298
      %v3300 = vmul.f32 %v3080, 1.442695
      %v3301 = vpow.pop %v3300
      %v3302 = vmul.f32 %v3082, 1.442695
      %v3303 = vpow.pop %v3302
      %v3304 = vmul.f32 %v3084, 1.442695
      %v3305 = vpow.pop %v3304
      %v3306 = vmul.f32 %v3086, 1.442695
      %v3307 = vpow.pop %v3306
      %v3308 = vmul.f32 %v3090, 1.442695
      %v3309 = vpow.pop %v3308
      %v3310 = vmul.f32 %v3092, 1.442695
      %v3311 = vpow.pop %v3310
      %v3312 = vmul.f32 %v3094, 1.442695
      %v3313 = vpow.pop %v3312
      %v3314 = vmul.f32 %v3096, 1.442695
      %v3315 = vpow.pop %v3314
      %v3316 = vmul.f32 %v3100, 1.442695
      %v3317 = vpow.pop %v3316
      %v3318 = vmul.f32 %v3102, 1.442695
      %v3319 = vpow.pop %v3318
      %v3320 = vmul.f32 %v3104, 1.442695
      %v3321 = vpow.pop %v3320
      %v3322 = vmul.f32 %v3106, 1.442695
      %v3323 = vpow.pop %v3322
      %v3324 = vmul.f32 %v3110, 1.442695
      %v3325 = vpow.pop %v3324
      %v3326 = vmul.f32 %v3112, 1.442695
      %v3327 = vpow.pop %v3326
      %v3328 = vmul.f32 %v3114, 1.442695
      %v3329 = vpow.pop %v3328
      %v3330 = vmul.f32 %v3116, 1.442695
      %v3331 = vpow.pop %v3330
      %v3332 = vmul.f32 %v3120, 1.442695
      %v3333 = vpow.pop %v3332
      %v3334 = vmul.f32 %v3122, 1.442695
      %v3335 = vpow.pop %v3334
      %v3336 = vmul.f32 %v3124, 1.442695
      %v3337 = vpow.pop %v3336
      %v3338 = vmul.f32 %v3126, 1.442695
      %v3339 = vpow.pop %v3338
      %v3340 = vmul.f32 %v3130, 1.442695
      %v3341 = vpow.pop %v3340
      %v3342 = vmul.f32 %v3132, 1.442695
      %v3343 = vpow.pop %v3342
      %v3344 = vmul.f32 %v3134, 1.442695
      %v3345 = vpow.pop %v3344
      %v3346 = vmul.f32 %v3136, 1.442695
      %v3347 = vpow.pop %v3346
      %v3348 = vmul.f32 %v3140, 1.442695
      %v3349 = vpow.pop %v3348
      %v3350 = vmul.f32 %v3142, 1.442695
      %v3351 = vpow.pop %v3350
      %v3352 = vmul.f32 %v3144, 1.442695
      %v3353 = vpow.pop %v3352
      %v3354 = vmul.f32 %v3146, 1.442695
      %v3355 = vpow.pop %v3354
      %v3356 = vmul.f32 %v3150, 1.442695
      %v3357 = vpow.pop %v3356
      %v3358 = vmul.f32 %v3152, 1.442695
      %v3359 = vpow.pop %v3358
      %v3360 = vmul.f32 %v3154, 1.442695
      %v3361 = vpow.pop %v3360
      %v3362 = vmul.f32 %v3156, 1.442695
      %v3363 = vpow.pop %v3362
      %v3364 = vmul.f32 %v3160, 1.442695
      %v3365 = vpow.pop %v3364
      %v3366 = vmul.f32 %v3162, 1.442695
      %v3367 = vpow.pop %v3366
      %v3368 = vmul.f32 %v3164, 1.442695
      %v3369 = vpow.pop %v3368
      %v3370 = vmul.f32 %v3166, 1.442695
      %v3371 = vpow.pop %v3370
      %v3372 = vmul.f32 %v3170, 1.442695
      %v3373 = vpow.pop %v3372
      %v3374 = vmul.f32 %v3172, 1.442695
      %v3375 = vpow.pop %v3374
      %v3376 = vmul.f32 %v3174, 1.442695
      %v3377 = vpow.pop %v3376
      %v3378 = vmul.f32 %v3176, 1.442695
      %v3379 = vpow.pop %v3378
      %v3380 = vmul.f32 %v3180, 1.442695
      %v3381 = vpow.pop %v3380
      %v3382 = vmul.f32 %v3182, 1.442695
      %v3383 = vpow.pop %v3382
      %v3384 = vmul.f32 %v3184, 1.442695
      %v3385 = vpow.pop %v3384
      %v3386 = vmul.f32 %v3186, 1.442695
      %v3387 = vpow.pop %v3386
      %v3388 = vmul.f32 %v3190, 1.442695
      %v3389 = vpow.pop %v3388
      %v3390 = vmul.f32 %v3192, 1.442695
      %v3391 = vpow.pop %v3390
      %v3392 = vmul.f32 %v3194, 1.442695
      %v3393 = vpow.pop %v3392
      %v3394 = vmul.f32 %v3196, 1.442695
      %v3395 = vpow.pop %v3394
      %v3396 = vmul.f32 %v3200, 1.442695
      %v3397 = vpow.pop %v3396
      %v3398 = vmul.f32 %v3202, 1.442695
      %v3399 = vpow.pop %v3398
      %v3400 = vmul.f32 %v3204, 1.442695
      %v3401 = vpow.pop %v3400
      %v3402 = vmul.f32 %v3206, 1.442695
      %v3403 = vpow.pop %v3402
      %v3404 = vmul.f32 %v3210, 1.442695
      %v3405 = vpow.pop %v3404
      %v3406 = vmul.f32 %v3212, 1.442695
      %v3407 = vpow.pop %v3406
      %v3408 = vmul.f32 %v3214, 1.442695
      %v3409 = vpow.pop %v3408
      %v3410 = vmul.f32 %v3216, 1.442695
      %v3411 = vpow.pop %v3410
      %v3412 = vmul.f32 %v3220, 1.442695
      %v3413 = vpow.pop %v3412
      %v3414 = vmul.f32 %v3222, 1.442695
      %v3415 = vpow.pop %v3414
      %v3416 = vmul.f32 %v3224, 1.442695
      %v3417 = vpow.pop %v3416
      %v3418 = vmul.f32 %v3226, 1.442695
      %v3419 = vpow.pop %v3418
      %v3420 = vsub.f32 %v3293, 1.0
      %v3421 = vsub.f32 %v3295, 1.0
      %v3422 = vsub.f32 %v3297, 1.0
      %v3423 = vsub.f32 %v3299, 1.0
      %v3424 = vsub.f32 %v3301, 1.0
      %v3425 = vsub.f32 %v3303, 1.0
      %v3426 = vsub.f32 %v3305, 1.0
      %v3427 = vsub.f32 %v3307, 1.0
      %v3428 = vsub.f32 %v3309, 1.0
      %v3429 = vsub.f32 %v3311, 1.0
      %v3430 = vsub.f32 %v3313, 1.0
      %v3431 = vsub.f32 %v3315, 1.0
      %v3432 = vsub.f32 %v3317, 1.0
      %v3433 = vsub.f32 %v3319, 1.0
      %v3434 = vsub.f32 %v3321, 1.0
      %v3435 = vsub.f32 %v3323, 1.0
      %v3436 = vsub.f32 %v3325, 1.0
      %v3437 = vsub.f32 %v3327, 1.0
      %v3438 = vsub.f32 %v3329, 1.0
      %v3439 = vsub.f32 %v3331, 1.0
      %v3440 = vsub.f32 %v3333, 1.0
      %v3441 = vsub.f32 %v3335, 1.0
      %v3442 = vsub.f32 %v3337, 1.0
      %v3443 = vsub.f32 %v3339, 1.0
      %v3444 = vsub.f32 %v3341, 1.0
      %v3445 = vsub.f32 %v3343, 1.0
      %v3446 = vsub.f32 %v3345, 1.0
      %v3447 = vsub.f32 %v3347, 1.0
      %v3448 = vsub.f32 %v3349, 1.0
      %v3449 = vsub.f32 %v3351, 1.0
      %v3450 = vsub.f32 %v3353, 1.0
      %v3451 = vsub.f32 %v3355, 1.0
      %v3452 = vsub.f32 %v3357, 1.0
      %v3453 = vsub.f32 %v3359, 1.0
      %v3454 = vsub.f32 %v3361, 1.0
      %v3455 = vsub.f32 %v3363, 1.0
      %v3456 = vsub.f32 %v3365, 1.0
      %v3457 = vsub.f32 %v3367, 1.0
      %v3458 = vsub.f32 %v3369, 1.0
      %v3459 = vsub.f32 %v3371, 1.0
      %v3460 = vsub.f32 %v3373, 1.0
      %v3461 = vsub.f32 %v3375, 1.0
      %v3462 = vsub.f32 %v3377, 1.0
      %v3463 = vsub.f32 %v3379, 1.0
      %v3464 = vsub.f32 %v3381, 1.0
      %v3465 = vsub.f32 %v3383, 1.0
      %v3466 = vsub.f32 %v3385, 1.0
      %v3467 = vsub.f32 %v3387, 1.0
      %v3468 = vsub.f32 %v3389, 1.0
      %v3469 = vsub.f32 %v3391, 1.0
      %v3470 = vsub.f32 %v3393, 1.0
      %v3471 = vsub.f32 %v3395, 1.0
      %v3472 = vsub.f32 %v3397, 1.0
      %v3473 = vsub.f32 %v3399, 1.0
      %v3474 = vsub.f32 %v3401, 1.0
      %v3475 = vsub.f32 %v3403, 1.0
      %v3476 = vsub.f32 %v3405, 1.0
      %v3477 = vsub.f32 %v3407, 1.0
      %v3478 = vsub.f32 %v3409, 1.0
      %v3479 = vsub.f32 %v3411, 1.0
      %v3480 = vsub.f32 %v3413, 1.0
      %v3481 = vsub.f32 %v3415, 1.0
      %v3482 = vsub.f32 %v3417, 1.0
      %v3483 = vsub.f32 %v3419, 1.0
      %v3484 = vsel %vm3228, %v3070, %v3420
      %v3485 = vsel %vm3229, %v3072, %v3421
      %v3486 = vsel %vm3230, %v3074, %v3422
      %v3487 = vsel %vm3231, %v3076, %v3423
      %v3488 = vsel %vm3232, %v3080, %v3424
      %v3489 = vsel %vm3233, %v3082, %v3425
      %v3490 = vsel %vm3234, %v3084, %v3426
      %v3491 = vsel %vm3235, %v3086, %v3427
      %v3492 = vsel %vm3236, %v3090, %v3428
      %v3493 = vsel %vm3237, %v3092, %v3429
      %v3494 = vsel %vm3238, %v3094, %v3430
      %v3495 = vsel %vm3239, %v3096, %v3431
      %v3496 = vsel %vm3240, %v3100, %v3432
      %v3497 = vsel %vm3241, %v3102, %v3433
      %v3498 = vsel %vm3242, %v3104, %v3434
      %v3499 = vsel %vm3243, %v3106, %v3435
      %v3500 = vsel %vm3244, %v3110, %v3436
      %v3501 = vsel %vm3245, %v3112, %v3437
      %v3502 = vsel %vm3246, %v3114, %v3438
      %v3503 = vsel %vm3247, %v3116, %v3439
      %v3504 = vsel %vm3248, %v3120, %v3440
      %v3505 = vsel %vm3249, %v3122, %v3441
      %v3506 = vsel %vm3250, %v3124, %v3442
      %v3507 = vsel %vm3251, %v3126, %v3443
      %v3508 = vsel %vm3252, %v3130, %v3444
      %v3509 = vsel %vm3253, %v3132, %v3445
      %v3510 = vsel %vm3254, %v3134, %v3446
      %v3511 = vsel %vm3255, %v3136, %v3447
      %v3512 = vsel %vm3256, %v3140, %v3448
      %v3513 = vsel %vm3257, %v3142, %v3449
      %v3514 = vsel %vm3258, %v3144, %v3450
      %v3515 = vsel %vm3259, %v3146, %v3451
      %v3516 = vsel %vm3260, %v3150, %v3452
      %v3517 = vsel %vm3261, %v3152, %v3453
      %v3518 = vsel %vm3262, %v3154, %v3454
      %v3519 = vsel %vm3263, %v3156, %v3455
      %v3520 = vsel %vm3264, %v3160, %v3456
      %v3521 = vsel %vm3265, %v3162, %v3457
      %v3522 = vsel %vm3266, %v3164, %v3458
      %v3523 = vsel %vm3267, %v3166, %v3459
      %v3524 = vsel %vm3268, %v3170, %v3460
      %v3525 = vsel %vm3269, %v3172, %v3461
      %v3526 = vsel %vm3270, %v3174, %v3462
      %v3527 = vsel %vm3271, %v3176, %v3463
      %v3528 = vsel %vm3272, %v3180, %v3464
      %v3529 = vsel %vm3273, %v3182, %v3465
      %v3530 = vsel %vm3274, %v3184, %v3466
      %v3531 = vsel %vm3275, %v3186, %v3467
      %v3532 = vsel %vm3276, %v3190, %v3468
      %v3533 = vsel %vm3277, %v3192, %v3469
      %v3534 = vsel %vm3278, %v3194, %v3470
      %v3535 = vsel %vm3279, %v3196, %v3471
      %v3536 = vsel %vm3280, %v3200, %v3472
      %v3537 = vsel %vm3281, %v3202, %v3473
      %v3538 = vsel %vm3282, %v3204, %v3474
      %v3539 = vsel %vm3283, %v3206, %v3475
      %v3540 = vsel %vm3284, %v3210, %v3476
      %v3541 = vsel %vm3285, %v3212, %v3477
      %v3542 = vsel %vm3286, %v3214, %v3478
      %v3543 = vsel %vm3287, %v3216, %v3479
      %v3544 = vsel %vm3288, %v3220, %v3480
      %v3545 = vsel %vm3289, %v3222, %v3481
      %v3546 = vsel %vm3290, %v3224, %v3482
      %v3547 = vsel %vm3291, %v3226, %v3483
      %v3548 = vpack.c.bf16 %v3486, %v3484
      %v3549 = vpack.c.bf16 %v3487, %v3485
      %v3550 = vpack.c.bf16 %v3490, %v3488
      %v3551 = vpack.c.bf16 %v3491, %v3489
      %v3552 = vpack.c.bf16 %v3494, %v3492
      %v3553 = vpack.c.bf16 %v3495, %v3493
      %v3554 = vpack.c.bf16 %v3498, %v3496
      %v3555 = vpack.c.bf16 %v3499, %v3497
      %v3556 = vpack.c.bf16 %v3502, %v3500
      %v3557 = vpack.c.bf16 %v3503, %v3501
      %v3558 = vpack.c.bf16 %v3506, %v3504
      %v3559 = vpack.c.bf16 %v3507, %v3505
      %v3560 = vpack.c.bf16 %v3510, %v3508
      %v3561 = vpack.c.bf16 %v3511, %v3509
      %v3562 = vpack.c.bf16 %v3514, %v3512
      %v3563 = vpack.c.bf16 %v3515, %v3513
      %v3564 = vpack.c.bf16 %v3518, %v3516
      %v3565 = vpack.c.bf16 %v3519, %v3517
      %v3566 = vpack.c.bf16 %v3522, %v3520
      %v3567 = vpack.c.bf16 %v3523, %v3521
      %v3568 = vpack.c.bf16 %v3526, %v3524
      %v3569 = vpack.c.bf16 %v3527, %v3525
      %v3570 = vpack.c.bf16 %v3530, %v3528
      %v3571 = vpack.c.bf16 %v3531, %v3529
      %v3572 = vpack.c.bf16 %v3534, %v3532
      %v3573 = vpack.c.bf16 %v3535, %v3533
      %v3574 = vpack.c.bf16 %v3538, %v3536
      %v3575 = vpack.c.bf16 %v3539, %v3537
      %v3576 = vpack.c.bf16 %v3542, %v3540
      %v3577 = vpack.c.bf16 %v3543, %v3541
      %v3578 = vpack.c.bf16 %v3546, %v3544
      %v3579 = vpack.c.bf16 %v3547, %v3545
      %v3580 = vld [vmem:[%s5] sm:$0xff]
      %v3581 = vld [vmem:[%s5 + $0x8] sm:$0xff]
      %v3582 = vld [vmem:[%s5 + $0x10] sm:$0xff]
      %v3583 = vld [vmem:[%s5 + $0x18] sm:$0xff]
      %v3584 = vld [vmem:[%s5 + $0x20] sm:$0xff]
      %v3585 = vld [vmem:[%s5 + $0x28] sm:$0xff]
      %v3586 = vld [vmem:[%s5 + $0x30] sm:$0xff]
      %v3587 = vld [vmem:[%s5 + $0x38] sm:$0xff]
      %v3588 = vld [vmem:[%s5 + $0x40] sm:$0xff]
      %v3589 = vld [vmem:[%s5 + $0x48] sm:$0xff]
      %v3590 = vld [vmem:[%s5 + $0x50] sm:$0xff]
      %v3591 = vld [vmem:[%s5 + $0x58] sm:$0xff]
      %v3592 = vld [vmem:[%s5 + $0x60] sm:$0xff]
      %v3593 = vld [vmem:[%s5 + $0x68] sm:$0xff]
      %v3594 = vld [vmem:[%s5 + $0x70] sm:$0xff]
      %v3595 = vld [vmem:[%s5 + $0x78] sm:$0xff]
      %v3596 = vld [vmem:[%s5 + $0x80] sm:$0xff]
      %v3597 = vld [vmem:[%s5 + $0x88] sm:$0xff]
      %v3598 = vld [vmem:[%s5 + $0x90] sm:$0xff]
      %v3599 = vld [vmem:[%s5 + $0x98] sm:$0xff]
      %v3600 = vld [vmem:[%s5 + $0xa0] sm:$0xff]
      %v3601 = vld [vmem:[%s5 + $0xa8] sm:$0xff]
      %v3602 = vld [vmem:[%s5 + $0xb0] sm:$0xff]
      %v3603 = vld [vmem:[%s5 + $0xb8] sm:$0xff]
      %v3604 = vld [vmem:[%s5 + $0xc0] sm:$0xff]
      %v3605 = vld [vmem:[%s5 + $0xc8] sm:$0x11]
      %v3606 = vld [vmem:[%s11] sm:$0x3]
      %v3608 = vlaneseq
      %v3609 = vshrl.u32 %v3608, 7
      %v3610 = vsub.s32 0, %v3609
      %v3611 = vrot.slane %v3606, %v3610
      %v3612 = vlaneseq
      %v3613 = vshrl.u32 %v3612, 7
      %v3614 = vsub.s32 1, %v3613
      %v3615 = vrot.slane %v3606, %v3614
      %v3644 = vunpack.c.l.b16 %v3580
      %v3645 = vunpack.c.h.b16 %v3580
      %v3646 = vunpack.c.l.b16 %v3581
      %v3647 = vunpack.c.h.b16 %v3581
      %v3648 = vunpack.c.l.b16 %v3582
      %v3649 = vunpack.c.h.b16 %v3582
      %v3650 = vunpack.c.l.b16 %v3583
      %v3651 = vunpack.c.h.b16 %v3583
      %v3652 = vunpack.c.l.b16 %v3584
      %v3653 = vunpack.c.h.b16 %v3584
      %v3654 = vunpack.c.l.b16 %v3585
      %v3655 = vunpack.c.h.b16 %v3585
      %v3656 = vunpack.c.l.b16 %v3586
      %v3657 = vunpack.c.h.b16 %v3586
      %v3658 = vunpack.c.l.b16 %v3587
      %v3659 = vunpack.c.h.b16 %v3587
      %v3660 = vunpack.c.l.b16 %v3588
      %v3661 = vunpack.c.h.b16 %v3588
      %v3662 = vunpack.c.l.b16 %v3589
      %v3663 = vunpack.c.h.b16 %v3589
      %v3664 = vunpack.c.l.b16 %v3590
      %v3665 = vunpack.c.h.b16 %v3590
      %v3666 = vunpack.c.l.b16 %v3591
      %v3667 = vunpack.c.h.b16 %v3591
      %v3668 = vunpack.c.l.b16 %v3592
      %v3669 = vunpack.c.h.b16 %v3592
      %v3670 = vunpack.c.l.b16 %v3593
      %v3671 = vunpack.c.h.b16 %v3593
      %v3672 = vunpack.c.l.b16 %v3594
      %v3673 = vunpack.c.h.b16 %v3594
      %v3674 = vunpack.c.l.b16 %v3595
      %v3675 = vunpack.c.h.b16 %v3595
      %v3676 = vunpack.c.l.b16 %v3596
      %v3677 = vunpack.c.h.b16 %v3596
      %v3678 = vunpack.c.l.b16 %v3597
      %v3679 = vunpack.c.h.b16 %v3597
      %v3680 = vunpack.c.l.b16 %v3598
      %v3681 = vunpack.c.h.b16 %v3598
      %v3682 = vunpack.c.l.b16 %v3599
      %v3683 = vunpack.c.h.b16 %v3599
      %v3684 = vunpack.c.l.b16 %v3600
      %v3685 = vunpack.c.h.b16 %v3600
      %v3686 = vunpack.c.l.b16 %v3601
      %v3687 = vunpack.c.h.b16 %v3601
      %v3688 = vunpack.c.l.b16 %v3602
      %v3689 = vunpack.c.h.b16 %v3602
      %v3690 = vunpack.c.l.b16 %v3603
      %v3691 = vunpack.c.h.b16 %v3603
      %v3692 = vunpack.c.l.b16 %v3604
      %v3693 = vunpack.c.h.b16 %v3604
      %v3694 = vunpack.c.l.b16 %v3605
      %v3695 = vunpack.c.h.b16 %v3605
      %v3696 = vpack.c.b16 %v3646, %v3644
      %v3697 = vpack.c.b16 %v3647, %v3645
      %v3698 = vpack.c.b16 %v3650, %v3648
      %v3699 = vpack.c.b16 %v3651, %v3649
      %v3700 = vpack.c.b16 %v3654, %v3652
      %v3701 = vpack.c.b16 %v3655, %v3653
      %v3702 = vpack.c.b16 %v3658, %v3656
      %v3703 = vpack.c.b16 %v3659, %v3657
      %v3704 = vpack.c.b16 %v3662, %v3660
      %v3705 = vpack.c.b16 %v3663, %v3661
      %v3706 = vpack.c.b16 %v3666, %v3664
      %v3707 = vpack.c.b16 %v3667, %v3665
      %v3708 = vpack.c.b16 %v3670, %v3668
      %v3709 = vpack.c.b16 %v3671, %v3669
      %v3710 = vpack.c.b16 %v3674, %v3672
      %v3711 = vpack.c.b16 %v3675, %v3673
      %v3712 = vpack.c.b16 %v3678, %v3676
      %v3713 = vpack.c.b16 %v3679, %v3677
      %v3714 = vpack.c.b16 %v3682, %v3680
      %v3715 = vpack.c.b16 %v3683, %v3681
      %v3716 = vpack.c.b16 %v3686, %v3684
      %v3717 = vpack.c.b16 %v3687, %v3685
      %v3718 = vpack.c.b16 %v3690, %v3688
      %v3719 = vpack.c.b16 %v3691, %v3689
      %v3720 = vpack.c.b16 %v3694, %v3692
      %v3721 = vpack.c.b16 %v3695, %v3693
      %vm3746 = vcmask 596992
      %v3748 = vsel %vm3746, %v3549, 0
      %v3751 = vsel %vm3746, %v3551, 0
      %v3754 = vsel %vm3746, %v3553, 0
      %v3757 = vsel %vm3746, %v3555, 0
      %v3760 = vsel %vm3746, %v3557, 0
      %v3763 = vsel %vm3746, %v3559, 0
      %v3766 = vsel %vm3746, %v3561, 0
      %v3769 = vsel %vm3746, %v3563, 0
      %v3772 = vsel %vm3746, %v3565, 0
      %v3775 = vsel %vm3746, %v3567, 0
      %v3778 = vsel %vm3746, %v3569, 0
      %v3781 = vsel %vm3746, %v3571, 0
      %v3784 = vsel %vm3746, %v3573, 0
      %v3787 = vsel %vm3746, %v3575, 0
      %v3790 = vsel %vm3746, %v3577, 0
      %v3793 = vsel %vm3746, %v3579, 0
      %vm3795 = vcmask 1044480
      %v3796 = vsel %vm1506, 4294967295, 65535
      %v3797 = vsel %vm3795, %v3796, 0
      %v3799 = vand.u32 %v3720, %v3797
      %v3802 = vand.u32 %v3721, %v3797
      %3804 = vmatprep.subr.bf16.mxu0 %v3711
      %3805 = vmatpush1.bf16.msra.mxu0 %v3710
      %3806 = vmatprep.subr.bf16.mxu0 %v3709
      %3807 = vmatpush1.bf16.msra.mxu0 %v3708
      %3808 = vmatprep.subr.bf16.mxu0 %v3707
      %3809 = vmatpush1.bf16.msra.mxu0 %v3706
      %3810 = vmatprep.subr.bf16.mxu0 %v3705
      %3811 = vmatpush1.bf16.msra.mxu0 %v3704
      %3812 = vmatprep.subr.bf16.mxu0 %v3703
      %3813 = vmatpush1.bf16.msra.mxu0 %v3702
      %3814 = vmatprep.subr.bf16.mxu0 %v3701
      %3815 = vmatpush1.bf16.msra.mxu0 %v3700
      %3816 = vmatprep.subr.bf16.mxu0 %v3699
      %3817 = vmatpush1.bf16.msra.mxu0 %v3698
      %3818 = vmatprep.subr.bf16.mxu0 %v3697
      %3819 = vmatpush1.bf16.msra.mxu0 %v3696
      %3820 = vmatprep.subr.bf16.mxu0 0
      %3821 = vmatpush2.bf16.msra.mxu0 0
      %3822 = vmatprep.subr.bf16.mxu0 0
      %3823 = vmatpush2.bf16.msra.mxu0 0
      %3824 = vmatprep.subr.bf16.mxu0 0
      %3825 = vmatpush2.bf16.msra.mxu0 0
      %3826 = vmatprep.subr.bf16.mxu0 %v3802
      %3827 = vmatpush2.bf16.msra.mxu0 %v3799
      %3828 = vmatprep.subr.bf16.mxu0 %v3719
      %3829 = vmatpush2.bf16.msra.mxu0 %v3718
      %3830 = vmatprep.subr.bf16.mxu0 %v3717
      %3831 = vmatpush2.bf16.msra.mxu0 %v3716
      %3832 = vmatprep.subr.bf16.mxu0 %v3715
      %3833 = vmatpush2.bf16.msra.mxu0 %v3714
      %3834 = vmatprep.subr.bf16.mxu0 %v3713
      %3835 = vmatpush2.bf16.msra.mxu0 %v3712
      %3836 = vmatprep.mubr.bf16.mxu0 %v3748
      %3837 = vmatmul.mubr.bf16.gmra.mxu0 %v3548
      %v3838 = vpop.f32.mrf.mxu0
      %v3839 = vadd.f32 %v3611, %v3838
      %v3840 = vpop.f32.mrf.mxu0
      %v3841 = vadd.f32 %v3615, %v3840
      %v3842 = vpop.f32.mrf.mxu0
      %v3843 = vadd.f32 %v3611, %v3842
      %v3844 = vpop.f32.mrf.mxu0
      %v3845 = vadd.f32 %v3615, %v3844
      %3846 = vmatprep.mubr.bf16.mxu0 %v3751
      %3847 = vmatmul.mubr.bf16.gmra.mxu0 %v3550
      %v3848 = vpop.f32.mrf.mxu0
      %v3849 = vadd.f32 %v3611, %v3848
      %v3850 = vpop.f32.mrf.mxu0
      %v3851 = vadd.f32 %v3615, %v3850
      %v3852 = vpop.f32.mrf.mxu0
      %v3853 = vadd.f32 %v3611, %v3852
      %v3854 = vpop.f32.mrf.mxu0
      %v3855 = vadd.f32 %v3615, %v3854
      %3856 = vmatprep.mubr.bf16.mxu0 %v3754
      %3857 = vmatmul.mubr.bf16.gmra.mxu0 %v3552
      %v3858 = vpop.f32.mrf.mxu0
      %v3859 = vadd.f32 %v3611, %v3858
      %v3860 = vpop.f32.mrf.mxu0
      %v3861 = vadd.f32 %v3615, %v3860
      %v3862 = vpop.f32.mrf.mxu0
      %v3863 = vadd.f32 %v3611, %v3862
      %v3864 = vpop.f32.mrf.mxu0
      %v3865 = vadd.f32 %v3615, %v3864
      %3866 = vmatprep.mubr.bf16.mxu0 %v3757
      %3867 = vmatmul.mubr.bf16.gmra.mxu0 %v3554
      %v3868 = vpop.f32.mrf.mxu0
      %v3869 = vadd.f32 %v3611, %v3868
      %v3870 = vpop.f32.mrf.mxu0
      %v3871 = vadd.f32 %v3615, %v3870
      %v3872 = vpop.f32.mrf.mxu0
      %v3873 = vadd.f32 %v3611, %v3872
      %v3874 = vpop.f32.mrf.mxu0
      %v3875 = vadd.f32 %v3615, %v3874
      %3876 = vmatprep.mubr.bf16.mxu0 %v3760
      %3877 = vmatmul.mubr.bf16.gmra.mxu0 %v3556
      %v3878 = vpop.f32.mrf.mxu0
      %v3879 = vadd.f32 %v3611, %v3878
      %v3880 = vpop.f32.mrf.mxu0
      %v3881 = vadd.f32 %v3615, %v3880
      %v3882 = vpop.f32.mrf.mxu0
      %v3883 = vadd.f32 %v3611, %v3882
      %v3884 = vpop.f32.mrf.mxu0
      %v3885 = vadd.f32 %v3615, %v3884
      %3886 = vmatprep.mubr.bf16.mxu0 %v3763
      %3887 = vmatmul.mubr.bf16.gmra.mxu0 %v3558
      %v3888 = vpop.f32.mrf.mxu0
      %v3889 = vadd.f32 %v3611, %v3888
      %v3890 = vpop.f32.mrf.mxu0
      %v3891 = vadd.f32 %v3615, %v3890
      %v3892 = vpop.f32.mrf.mxu0
      %v3893 = vadd.f32 %v3611, %v3892
      %v3894 = vpop.f32.mrf.mxu0
      %v3895 = vadd.f32 %v3615, %v3894
      %3896 = vmatprep.mubr.bf16.mxu0 %v3766
      %3897 = vmatmul.mubr.bf16.gmra.mxu0 %v3560
      %v3898 = vpop.f32.mrf.mxu0
      %v3899 = vadd.f32 %v3611, %v3898
      %v3900 = vpop.f32.mrf.mxu0
      %v3901 = vadd.f32 %v3615, %v3900
      %v3902 = vpop.f32.mrf.mxu0
      %v3903 = vadd.f32 %v3611, %v3902
      %v3904 = vpop.f32.mrf.mxu0
      %v3905 = vadd.f32 %v3615, %v3904
      %3906 = vmatprep.mubr.bf16.mxu0 %v3769
      %3907 = vmatmul.mubr.bf16.gmra.mxu0 %v3562
      %v3908 = vpop.f32.mrf.mxu0
      %v3909 = vadd.f32 %v3611, %v3908
      %v3910 = vpop.f32.mrf.mxu0
      %v3911 = vadd.f32 %v3615, %v3910
      %v3912 = vpop.f32.mrf.mxu0
      %v3913 = vadd.f32 %v3611, %v3912
      %v3914 = vpop.f32.mrf.mxu0
      %v3915 = vadd.f32 %v3615, %v3914
      %3916 = vmatprep.mubr.bf16.mxu0 %v3772
      %3917 = vmatmul.mubr.bf16.gmra.mxu0 %v3564
      %v3918 = vpop.f32.mrf.mxu0
      %v3919 = vadd.f32 %v3611, %v3918
      %v3920 = vpop.f32.mrf.mxu0
      %v3921 = vadd.f32 %v3615, %v3920
      %v3922 = vpop.f32.mrf.mxu0
      %v3923 = vadd.f32 %v3611, %v3922
      %v3924 = vpop.f32.mrf.mxu0
      %v3925 = vadd.f32 %v3615, %v3924
      %3926 = vmatprep.mubr.bf16.mxu0 %v3775
      %3927 = vmatmul.mubr.bf16.gmra.mxu0 %v3566
      %v3928 = vpop.f32.mrf.mxu0
      %v3929 = vadd.f32 %v3611, %v3928
      %v3930 = vpop.f32.mrf.mxu0
      %v3931 = vadd.f32 %v3615, %v3930
      %v3932 = vpop.f32.mrf.mxu0
      %v3933 = vadd.f32 %v3611, %v3932
      %v3934 = vpop.f32.mrf.mxu0
      %v3935 = vadd.f32 %v3615, %v3934
      %3936 = vmatprep.mubr.bf16.mxu0 %v3778
      %3937 = vmatmul.mubr.bf16.gmra.mxu0 %v3568
      %v3938 = vpop.f32.mrf.mxu0
      %v3939 = vadd.f32 %v3611, %v3938
      %v3940 = vpop.f32.mrf.mxu0
      %v3941 = vadd.f32 %v3615, %v3940
      %v3942 = vpop.f32.mrf.mxu0
      %v3943 = vadd.f32 %v3611, %v3942
      %v3944 = vpop.f32.mrf.mxu0
      %v3945 = vadd.f32 %v3615, %v3944
      %3946 = vmatprep.mubr.bf16.mxu0 %v3781
      %3947 = vmatmul.mubr.bf16.gmra.mxu0 %v3570
      %v3948 = vpop.f32.mrf.mxu0
      %v3949 = vadd.f32 %v3611, %v3948
      %v3950 = vpop.f32.mrf.mxu0
      %v3951 = vadd.f32 %v3615, %v3950
      %v3952 = vpop.f32.mrf.mxu0
      %v3953 = vadd.f32 %v3611, %v3952
      %v3954 = vpop.f32.mrf.mxu0
      %v3955 = vadd.f32 %v3615, %v3954
      %3956 = vmatprep.mubr.bf16.mxu0 %v3784
      %3957 = vmatmul.mubr.bf16.gmra.mxu0 %v3572
      %v3958 = vpop.f32.mrf.mxu0
      %v3959 = vadd.f32 %v3611, %v3958
      %v3960 = vpop.f32.mrf.mxu0
      %v3961 = vadd.f32 %v3615, %v3960
      %v3962 = vpop.f32.mrf.mxu0
      %v3963 = vadd.f32 %v3611, %v3962
      %v3964 = vpop.f32.mrf.mxu0
      %v3965 = vadd.f32 %v3615, %v3964
      %3966 = vmatprep.mubr.bf16.mxu0 %v3787
      %3967 = vmatmul.mubr.bf16.gmra.mxu0 %v3574
      %v3968 = vpop.f32.mrf.mxu0
      %v3969 = vadd.f32 %v3611, %v3968
      %v3970 = vpop.f32.mrf.mxu0
      %v3971 = vadd.f32 %v3615, %v3970
      %v3972 = vpop.f32.mrf.mxu0
      %v3973 = vadd.f32 %v3611, %v3972
      %v3974 = vpop.f32.mrf.mxu0
      %v3975 = vadd.f32 %v3615, %v3974
      %3976 = vmatprep.mubr.bf16.mxu0 %v3790
      %3977 = vmatmul.mubr.bf16.gmra.mxu0 %v3576
      %v3978 = vpop.f32.mrf.mxu0
      %v3979 = vadd.f32 %v3611, %v3978
      %v3980 = vpop.f32.mrf.mxu0
      %v3981 = vadd.f32 %v3615, %v3980
      %v3982 = vpop.f32.mrf.mxu0
      %v3983 = vadd.f32 %v3611, %v3982
      %v3984 = vpop.f32.mrf.mxu0
      %v3985 = vadd.f32 %v3615, %v3984
      %3986 = vmatprep.mubr.bf16.mxu0 %v3793
      %3987 = vmatmul.mubr.bf16.gmra.mxu0 %v3578
      %v3988 = vpop.f32.mrf.mxu0
      %v3989 = vadd.f32 %v3611, %v3988
      %v3990 = vpop.f32.mrf.mxu0
      %v3991 = vadd.f32 %v3615, %v3990
      %v3992 = vpop.f32.mrf.mxu0
      %v3993 = vadd.f32 %v3611, %v3992
      %v3994 = vpop.f32.mrf.mxu0
      %v3995 = vadd.f32 %v3615, %v3994
      %3996 = vdwg.mxu0
      %vm3997 = vcmp.gt.f32.partialorder %v3839, 0.0
      %vm3998 = vcmp.gt.f32.partialorder %v3841, 0.0
      %vm3999 = vcmp.gt.f32.partialorder %v3843, 0.0
      %vm4000 = vcmp.gt.f32.partialorder %v3845, 0.0
      %vm4001 = vcmp.gt.f32.partialorder %v3849, 0.0
      %vm4002 = vcmp.gt.f32.partialorder %v3851, 0.0
      %vm4003 = vcmp.gt.f32.partialorder %v3853, 0.0
      %vm4004 = vcmp.gt.f32.partialorder %v3855, 0.0
      %vm4005 = vcmp.gt.f32.partialorder %v3859, 0.0
      %vm4006 = vcmp.gt.f32.partialorder %v3861, 0.0
      %vm4007 = vcmp.gt.f32.partialorder %v3863, 0.0
      %vm4008 = vcmp.gt.f32.partialorder %v3865, 0.0
      %vm4009 = vcmp.gt.f32.partialorder %v3869, 0.0
      %vm4010 = vcmp.gt.f32.partialorder %v3871, 0.0
      %vm4011 = vcmp.gt.f32.partialorder %v3873, 0.0
      %vm4012 = vcmp.gt.f32.partialorder %v3875, 0.0
      %vm4013 = vcmp.gt.f32.partialorder %v3879, 0.0
      %vm4014 = vcmp.gt.f32.partialorder %v3881, 0.0
      %vm4015 = vcmp.gt.f32.partialorder %v3883, 0.0
      %vm4016 = vcmp.gt.f32.partialorder %v3885, 0.0
      %vm4017 = vcmp.gt.f32.partialorder %v3889, 0.0
      %vm4018 = vcmp.gt.f32.partialorder %v3891, 0.0
      %vm4019 = vcmp.gt.f32.partialorder %v3893, 0.0
      %vm4020 = vcmp.gt.f32.partialorder %v3895, 0.0
      %vm4021 = vcmp.gt.f32.partialorder %v3899, 0.0
      %vm4022 = vcmp.gt.f32.partialorder %v3901, 0.0
      %vm4023 = vcmp.gt.f32.partialorder %v3903, 0.0
      %vm4024 = vcmp.gt.f32.partialorder %v3905, 0.0
      %vm4025 = vcmp.gt.f32.partialorder %v3909, 0.0
      %vm4026 = vcmp.gt.f32.partialorder %v3911, 0.0
      %vm4027 = vcmp.gt.f32.partialorder %v3913, 0.0
      %vm4028 = vcmp.gt.f32.partialorder %v3915, 0.0
      %vm4029 = vcmp.gt.f32.partialorder %v3919, 0.0
      %vm4030 = vcmp.gt.f32.partialorder %v3921, 0.0
      %vm4031 = vcmp.gt.f32.partialorder %v3923, 0.0
      %vm4032 = vcmp.gt.f32.partialorder %v3925, 0.0
      %vm4033 = vcmp.gt.f32.partialorder %v3929, 0.0
      %vm4034 = vcmp.gt.f32.partialorder %v3931, 0.0
      %vm4035 = vcmp.gt.f32.partialorder %v3933, 0.0
      %vm4036 = vcmp.gt.f32.partialorder %v3935, 0.0
      %vm4037 = vcmp.gt.f32.partialorder %v3939, 0.0
      %vm4038 = vcmp.gt.f32.partialorder %v3941, 0.0
      %vm4039 = vcmp.gt.f32.partialorder %v3943, 0.0
      %vm4040 = vcmp.gt.f32.partialorder %v3945, 0.0
      %vm4041 = vcmp.gt.f32.partialorder %v3949, 0.0
      %vm4042 = vcmp.gt.f32.partialorder %v3951, 0.0
      %vm4043 = vcmp.gt.f32.partialorder %v3953, 0.0
      %vm4044 = vcmp.gt.f32.partialorder %v3955, 0.0
      %vm4045 = vcmp.gt.f32.partialorder %v3959, 0.0
      %vm4046 = vcmp.gt.f32.partialorder %v3961, 0.0
      %vm4047 = vcmp.gt.f32.partialorder %v3963, 0.0
      %vm4048 = vcmp.gt.f32.partialorder %v3965, 0.0
      %vm4049 = vcmp.gt.f32.partialorder %v3969, 0.0
      %vm4050 = vcmp.gt.f32.partialorder %v3971, 0.0
      %vm4051 = vcmp.gt.f32.partialorder %v3973, 0.0
      %vm4052 = vcmp.gt.f32.partialorder %v3975, 0.0
      %vm4053 = vcmp.gt.f32.partialorder %v3979, 0.0
      %vm4054 = vcmp.gt.f32.partialorder %v3981, 0.0
      %vm4055 = vcmp.gt.f32.partialorder %v3983, 0.0
      %vm4056 = vcmp.gt.f32.partialorder %v3985, 0.0
      %vm4057 = vcmp.gt.f32.partialorder %v3989, 0.0
      %vm4058 = vcmp.gt.f32.partialorder %v3991, 0.0
      %vm4059 = vcmp.gt.f32.partialorder %v3993, 0.0
      %vm4060 = vcmp.gt.f32.partialorder %v3995, 0.0
      %v4061 = vmul.f32 %v3839, 1.442695
      %v4062 = vpow.pop %v4061
      %v4063 = vmul.f32 %v3841, 1.442695
      %v4064 = vpow.pop %v4063
      %v4065 = vmul.f32 %v3843, 1.442695
      %v4066 = vpow.pop %v4065
      %v4067 = vmul.f32 %v3845, 1.442695
      %v4068 = vpow.pop %v4067
      %v4069 = vmul.f32 %v3849, 1.442695
      %v4070 = vpow.pop %v4069
      %v4071 = vmul.f32 %v3851, 1.442695
      %v4072 = vpow.pop %v4071
      %v4073 = vmul.f32 %v3853, 1.442695
      %v4074 = vpow.pop %v4073
      %v4075 = vmul.f32 %v3855, 1.442695
      %v4076 = vpow.pop %v4075
      %v4077 = vmul.f32 %v3859, 1.442695
      %v4078 = vpow.pop %v4077
      %v4079 = vmul.f32 %v3861, 1.442695
      %v4080 = vpow.pop %v4079
      %v4081 = vmul.f32 %v3863, 1.442695
      %v4082 = vpow.pop %v4081
      %v4083 = vmul.f32 %v3865, 1.442695
      %v4084 = vpow.pop %v4083
      %v4085 = vmul.f32 %v3869, 1.442695
      %v4086 = vpow.pop %v4085
      %v4087 = vmul.f32 %v3871, 1.442695
      %v4088 = vpow.pop %v4087
      %v4089 = vmul.f32 %v3873, 1.442695
      %v4090 = vpow.pop %v4089
      %v4091 = vmul.f32 %v3875, 1.442695
      %v4092 = vpow.pop %v4091
      %v4093 = vmul.f32 %v3879, 1.442695
      %v4094 = vpow.pop %v4093
      %v4095 = vmul.f32 %v3881, 1.442695
      %v4096 = vpow.pop %v4095
      %v4097 = vmul.f32 %v3883, 1.442695
      %v4098 = vpow.pop %v4097
      %v4099 = vmul.f32 %v3885, 1.442695
      %v4100 = vpow.pop %v4099
      %v4101 = vmul.f32 %v3889, 1.442695
      %v4102 = vpow.pop %v4101
      %v4103 = vmul.f32 %v3891, 1.442695
      %v4104 = vpow.pop %v4103
      %v4105 = vmul.f32 %v3893, 1.442695
      %v4106 = vpow.pop %v4105
      %v4107 = vmul.f32 %v3895, 1.442695
      %v4108 = vpow.pop %v4107
      %v4109 = vmul.f32 %v3899, 1.442695
      %v4110 = vpow.pop %v4109
      %v4111 = vmul.f32 %v3901, 1.442695
      %v4112 = vpow.pop %v4111
      %v4113 = vmul.f32 %v3903, 1.442695
      %v4114 = vpow.pop %v4113
      %v4115 = vmul.f32 %v3905, 1.442695
      %v4116 = vpow.pop %v4115
      %v4117 = vmul.f32 %v3909, 1.442695
      %v4118 = vpow.pop %v4117
      %v4119 = vmul.f32 %v3911, 1.442695
      %v4120 = vpow.pop %v4119
      %v4121 = vmul.f32 %v3913, 1.442695
      %v4122 = vpow.pop %v4121
      %v4123 = vmul.f32 %v3915, 1.442695
      %v4124 = vpow.pop %v4123
      %v4125 = vmul.f32 %v3919, 1.442695
      %v4126 = vpow.pop %v4125
      %v4127 = vmul.f32 %v3921, 1.442695
      %v4128 = vpow.pop %v4127
      %v4129 = vmul.f32 %v3923, 1.442695
      %v4130 = vpow.pop %v4129
      %v4131 = vmul.f32 %v3925, 1.442695
      %v4132 = vpow.pop %v4131
      %v4133 = vmul.f32 %v3929, 1.442695
      %v4134 = vpow.pop %v4133
      %v4135 = vmul.f32 %v3931, 1.442695
      %v4136 = vpow.pop %v4135
      %v4137 = vmul.f32 %v3933, 1.442695
      %v4138 = vpow.pop %v4137
      %v4139 = vmul.f32 %v3935, 1.442695
      %v4140 = vpow.pop %v4139
      %v4141 = vmul.f32 %v3939, 1.442695
      %v4142 = vpow.pop %v4141
      %v4143 = vmul.f32 %v3941, 1.442695
      %v4144 = vpow.pop %v4143
      %v4145 = vmul.f32 %v3943, 1.442695
      %v4146 = vpow.pop %v4145
      %v4147 = vmul.f32 %v3945, 1.442695
      %v4148 = vpow.pop %v4147
      %v4149 = vmul.f32 %v3949, 1.442695
      %v4150 = vpow.pop %v4149
      %v4151 = vmul.f32 %v3951, 1.442695
      %v4152 = vpow.pop %v4151
      %v4153 = vmul.f32 %v3953, 1.442695
      %v4154 = vpow.pop %v4153
      %v4155 = vmul.f32 %v3955, 1.442695
      %v4156 = vpow.pop %v4155
      %v4157 = vmul.f32 %v3959, 1.442695
      %v4158 = vpow.pop %v4157
      %v4159 = vmul.f32 %v3961, 1.442695
      %v4160 = vpow.pop %v4159
      %v4161 = vmul.f32 %v3963, 1.442695
      %v4162 = vpow.pop %v4161
      %v4163 = vmul.f32 %v3965, 1.442695
      %v4164 = vpow.pop %v4163
      %v4165 = vmul.f32 %v3969, 1.442695
      %v4166 = vpow.pop %v4165
      %v4167 = vmul.f32 %v3971, 1.442695
      %v4168 = vpow.pop %v4167
      %v4169 = vmul.f32 %v3973, 1.442695
      %v4170 = vpow.pop %v4169
      %v4171 = vmul.f32 %v3975, 1.442695
      %v4172 = vpow.pop %v4171
      %v4173 = vmul.f32 %v3979, 1.442695
      %v4174 = vpow.pop %v4173
      %v4175 = vmul.f32 %v3981, 1.442695
      %v4176 = vpow.pop %v4175
      %v4177 = vmul.f32 %v3983, 1.442695
      %v4178 = vpow.pop %v4177
      %v4179 = vmul.f32 %v3985, 1.442695
      %v4180 = vpow.pop %v4179
      %v4181 = vmul.f32 %v3989, 1.442695
      %v4182 = vpow.pop %v4181
      %v4183 = vmul.f32 %v3991, 1.442695
      %v4184 = vpow.pop %v4183
      %v4185 = vmul.f32 %v3993, 1.442695
      %v4186 = vpow.pop %v4185
      %v4187 = vmul.f32 %v3995, 1.442695
      %v4188 = vpow.pop %v4187
      %v4189 = vsub.f32 %v4062, 1.0
      %v4190 = vsub.f32 %v4064, 1.0
      %v4191 = vsub.f32 %v4066, 1.0
      %v4192 = vsub.f32 %v4068, 1.0
      %v4193 = vsub.f32 %v4070, 1.0
      %v4194 = vsub.f32 %v4072, 1.0
      %v4195 = vsub.f32 %v4074, 1.0
      %v4196 = vsub.f32 %v4076, 1.0
      %v4197 = vsub.f32 %v4078, 1.0
      %v4198 = vsub.f32 %v4080, 1.0
      %v4199 = vsub.f32 %v4082, 1.0
      %v4200 = vsub.f32 %v4084, 1.0
      %v4201 = vsub.f32 %v4086, 1.0
      %v4202 = vsub.f32 %v4088, 1.0
      %v4203 = vsub.f32 %v4090, 1.0
      %v4204 = vsub.f32 %v4092, 1.0
      %v4205 = vsub.f32 %v4094, 1.0
      %v4206 = vsub.f32 %v4096, 1.0
      %v4207 = vsub.f32 %v4098, 1.0
      %v4208 = vsub.f32 %v4100, 1.0
      %v4209 = vsub.f32 %v4102, 1.0
      %v4210 = vsub.f32 %v4104, 1.0
      %v4211 = vsub.f32 %v4106, 1.0
      %v4212 = vsub.f32 %v4108, 1.0
      %v4213 = vsub.f32 %v4110, 1.0
      %v4214 = vsub.f32 %v4112, 1.0
      %v4215 = vsub.f32 %v4114, 1.0
      %v4216 = vsub.f32 %v4116, 1.0
      %v4217 = vsub.f32 %v4118, 1.0
      %v4218 = vsub.f32 %v4120, 1.0
      %v4219 = vsub.f32 %v4122, 1.0
      %v4220 = vsub.f32 %v4124, 1.0
      %v4221 = vsub.f32 %v4126, 1.0
      %v4222 = vsub.f32 %v4128, 1.0
      %v4223 = vsub.f32 %v4130, 1.0
      %v4224 = vsub.f32 %v4132, 1.0
      %v4225 = vsub.f32 %v4134, 1.0
      %v4226 = vsub.f32 %v4136, 1.0
      %v4227 = vsub.f32 %v4138, 1.0
      %v4228 = vsub.f32 %v4140, 1.0
      %v4229 = vsub.f32 %v4142, 1.0
      %v4230 = vsub.f32 %v4144, 1.0
      %v4231 = vsub.f32 %v4146, 1.0
      %v4232 = vsub.f32 %v4148, 1.0
      %v4233 = vsub.f32 %v4150, 1.0
      %v4234 = vsub.f32 %v4152, 1.0
      %v4235 = vsub.f32 %v4154, 1.0
      %v4236 = vsub.f32 %v4156, 1.0
      %v4237 = vsub.f32 %v4158, 1.0
      %v4238 = vsub.f32 %v4160, 1.0
      %v4239 = vsub.f32 %v4162, 1.0
      %v4240 = vsub.f32 %v4164, 1.0
      %v4241 = vsub.f32 %v4166, 1.0
      %v4242 = vsub.f32 %v4168, 1.0
      %v4243 = vsub.f32 %v4170, 1.0
      %v4244 = vsub.f32 %v4172, 1.0
      %v4245 = vsub.f32 %v4174, 1.0
      %v4246 = vsub.f32 %v4176, 1.0
      %v4247 = vsub.f32 %v4178, 1.0
      %v4248 = vsub.f32 %v4180, 1.0
      %v4249 = vsub.f32 %v4182, 1.0
      %v4250 = vsub.f32 %v4184, 1.0
      %v4251 = vsub.f32 %v4186, 1.0
      %v4252 = vsub.f32 %v4188, 1.0
      %v4253 = vsel %vm3997, %v3839, %v4189
      %v4254 = vsel %vm3998, %v3841, %v4190
      %v4255 = vsel %vm3999, %v3843, %v4191
      %v4256 = vsel %vm4000, %v3845, %v4192
      %v4257 = vsel %vm4001, %v3849, %v4193
      %v4258 = vsel %vm4002, %v3851, %v4194
      %v4259 = vsel %vm4003, %v3853, %v4195
      %v4260 = vsel %vm4004, %v3855, %v4196
      %v4261 = vsel %vm4005, %v3859, %v4197
      %v4262 = vsel %vm4006, %v3861, %v4198
      %v4263 = vsel %vm4007, %v3863, %v4199
      %v4264 = vsel %vm4008, %v3865, %v4200
      %v4265 = vsel %vm4009, %v3869, %v4201
      %v4266 = vsel %vm4010, %v3871, %v4202
      %v4267 = vsel %vm4011, %v3873, %v4203
      %v4268 = vsel %vm4012, %v3875, %v4204
      %v4269 = vsel %vm4013, %v3879, %v4205
      %v4270 = vsel %vm4014, %v3881, %v4206
      %v4271 = vsel %vm4015, %v3883, %v4207
      %v4272 = vsel %vm4016, %v3885, %v4208
      %v4273 = vsel %vm4017, %v3889, %v4209
      %v4274 = vsel %vm4018, %v3891, %v4210
      %v4275 = vsel %vm4019, %v3893, %v4211
      %v4276 = vsel %vm4020, %v3895, %v4212
      %v4277 = vsel %vm4021, %v3899, %v4213
      %v4278 = vsel %vm4022, %v3901, %v4214
      %v4279 = vsel %vm4023, %v3903, %v4215
      %v4280 = vsel %vm4024, %v3905, %v4216
      %v4281 = vsel %vm4025, %v3909, %v4217
      %v4282 = vsel %vm4026, %v3911, %v4218
      %v4283 = vsel %vm4027, %v3913, %v4219
      %v4284 = vsel %vm4028, %v3915, %v4220
      %v4285 = vsel %vm4029, %v3919, %v4221
      %v4286 = vsel %vm4030, %v3921, %v4222
      %v4287 = vsel %vm4031, %v3923, %v4223
      %v4288 = vsel %vm4032, %v3925, %v4224
      %v4289 = vsel %vm4033, %v3929, %v4225
      %v4290 = vsel %vm4034, %v3931, %v4226
      %v4291 = vsel %vm4035, %v3933, %v4227
      %v4292 = vsel %vm4036, %v3935, %v4228
      %v4293 = vsel %vm4037, %v3939, %v4229
      %v4294 = vsel %vm4038, %v3941, %v4230
      %v4295 = vsel %vm4039, %v3943, %v4231
      %v4296 = vsel %vm4040, %v3945, %v4232
      %v4297 = vsel %vm4041, %v3949, %v4233
      %v4298 = vsel %vm4042, %v3951, %v4234
      %v4299 = vsel %vm4043, %v3953, %v4235
      %v4300 = vsel %vm4044, %v3955, %v4236
      %v4301 = vsel %vm4045, %v3959, %v4237
      %v4302 = vsel %vm4046, %v3961, %v4238
      %v4303 = vsel %vm4047, %v3963, %v4239
      %v4304 = vsel %vm4048, %v3965, %v4240
      %v4305 = vsel %vm4049, %v3969, %v4241
      %v4306 = vsel %vm4050, %v3971, %v4242
      %v4307 = vsel %vm4051, %v3973, %v4243
      %v4308 = vsel %vm4052, %v3975, %v4244
      %v4309 = vsel %vm4053, %v3979, %v4245
      %v4310 = vsel %vm4054, %v3981, %v4246
      %v4311 = vsel %vm4055, %v3983, %v4247
      %v4312 = vsel %vm4056, %v3985, %v4248
      %v4313 = vsel %vm4057, %v3989, %v4249
      %v4314 = vsel %vm4058, %v3991, %v4250
      %v4315 = vsel %vm4059, %v3993, %v4251
      %v4316 = vsel %vm4060, %v3995, %v4252
      %v4317 = vpack.c.bf16 %v4255, %v4253
      %v4318 = vpack.c.bf16 %v4256, %v4254
      %v4319 = vpack.c.bf16 %v4259, %v4257
      %v4320 = vpack.c.bf16 %v4260, %v4258
      %v4321 = vpack.c.bf16 %v4263, %v4261
      %v4322 = vpack.c.bf16 %v4264, %v4262
      %v4323 = vpack.c.bf16 %v4267, %v4265
      %v4324 = vpack.c.bf16 %v4268, %v4266
      %v4325 = vpack.c.bf16 %v4271, %v4269
      %v4326 = vpack.c.bf16 %v4272, %v4270
      %v4327 = vpack.c.bf16 %v4275, %v4273
      %v4328 = vpack.c.bf16 %v4276, %v4274
      %v4329 = vpack.c.bf16 %v4279, %v4277
      %v4330 = vpack.c.bf16 %v4280, %v4278
      %v4331 = vpack.c.bf16 %v4283, %v4281
      %v4332 = vpack.c.bf16 %v4284, %v4282
      %v4333 = vpack.c.bf16 %v4287, %v4285
      %v4334 = vpack.c.bf16 %v4288, %v4286
      %v4335 = vpack.c.bf16 %v4291, %v4289
      %v4336 = vpack.c.bf16 %v4292, %v4290
      %v4337 = vpack.c.bf16 %v4295, %v4293
      %v4338 = vpack.c.bf16 %v4296, %v4294
      %v4339 = vpack.c.bf16 %v4299, %v4297
      %v4340 = vpack.c.bf16 %v4300, %v4298
      %v4341 = vpack.c.bf16 %v4303, %v4301
      %v4342 = vpack.c.bf16 %v4304, %v4302
      %v4343 = vpack.c.bf16 %v4307, %v4305
      %v4344 = vpack.c.bf16 %v4308, %v4306
      %v4345 = vpack.c.bf16 %v4311, %v4309
      %v4346 = vpack.c.bf16 %v4312, %v4310
      %v4347 = vpack.c.bf16 %v4315, %v4313
      %v4348 = vpack.c.bf16 %v4316, %v4314
      %v4349 = vld [vmem:[%s6] sm:$0xf]
      %v4350 = vld [vmem:[%s6 + $0x4] sm:$0xf]
      %v4351 = vld [vmem:[%s6 + $0x8] sm:$0xf]
      %v4352 = vld [vmem:[%s6 + $0xc] sm:$0xf]
      %v4353 = vld [vmem:[%s6 + $0x10] sm:$0xf]
      %v4354 = vld [vmem:[%s6 + $0x14] sm:$0xf]
      %v4355 = vld [vmem:[%s6 + $0x18] sm:$0xf]
      %v4356 = vld [vmem:[%s6 + $0x1c] sm:$0xf]
      %v4357 = vld [vmem:[%s6 + $0x20] sm:$0xf]
      %v4358 = vld [vmem:[%s6 + $0x24] sm:$0xf]
      %v4359 = vld [vmem:[%s6 + $0x28] sm:$0xf]
      %v4360 = vld [vmem:[%s6 + $0x2c] sm:$0xf]
      %v4361 = vld [vmem:[%s6 + $0x30] sm:$0xf]
      %v4362 = vld [vmem:[%s6 + $0x34] sm:$0xf]
      %v4363 = vld [vmem:[%s6 + $0x38] sm:$0xf]
      %v4364 = vld [vmem:[%s6 + $0x3c] sm:$0xf]
      %v4365 = vld [vmem:[%s6 + $0x40] sm:$0xf]
      %v4366 = vld [vmem:[%s6 + $0x44] sm:$0xf]
      %v4367 = vld [vmem:[%s6 + $0x48] sm:$0xf]
      %v4368 = vld [vmem:[%s6 + $0x4c] sm:$0xf]
      %v4369 = vld [vmem:[%s6 + $0x50] sm:$0xf]
      %v4370 = vld [vmem:[%s6 + $0x54] sm:$0xf]
      %v4371 = vld [vmem:[%s6 + $0x58] sm:$0xf]
      %v4372 = vld [vmem:[%s6 + $0x5c] sm:$0xf]
      %v4373 = vld [vmem:[%s6 + $0x60] sm:$0xf]
      %v4374 = vld [vmem:[%s12] sm:$0x1]
      %v4376 = vlaneseq
      %v4377 = vshrl.u32 %v4376, 7
      %v4378 = vsub.s32 0, %v4377
      %v4379 = vrot.slane %v4374, %v4378
      %v4406 = vunpack.c.l.b16 %v4349
      %v4407 = vunpack.c.l.b16 %v4350
      %v4408 = vunpack.c.l.b16 %v4351
      %v4409 = vunpack.c.l.b16 %v4352
      %v4410 = vunpack.c.l.b16 %v4353
      %v4411 = vunpack.c.l.b16 %v4354
      %v4412 = vunpack.c.l.b16 %v4355
      %v4413 = vunpack.c.l.b16 %v4356
      %v4414 = vunpack.c.l.b16 %v4357
      %v4415 = vunpack.c.l.b16 %v4358
      %v4416 = vunpack.c.l.b16 %v4359
      %v4417 = vunpack.c.l.b16 %v4360
      %v4418 = vunpack.c.l.b16 %v4361
      %v4419 = vunpack.c.l.b16 %v4362
      %v4420 = vunpack.c.l.b16 %v4363
      %v4421 = vunpack.c.l.b16 %v4364
      %v4422 = vunpack.c.l.b16 %v4365
      %v4423 = vunpack.c.l.b16 %v4366
      %v4424 = vunpack.c.l.b16 %v4367
      %v4425 = vunpack.c.l.b16 %v4368
      %v4426 = vunpack.c.l.b16 %v4369
      %v4427 = vunpack.c.l.b16 %v4370
      %v4428 = vunpack.c.l.b16 %v4371
      %v4429 = vunpack.c.l.b16 %v4372
      %v4430 = vunpack.c.l.b16 %v4373
      %v4431 = vpack.c.b16 %v4407, %v4406
      %v4432 = vpack.c.b16 %v4409, %v4408
      %v4433 = vpack.c.b16 %v4411, %v4410
      %v4434 = vpack.c.b16 %v4413, %v4412
      %v4435 = vpack.c.b16 %v4415, %v4414
      %v4436 = vpack.c.b16 %v4417, %v4416
      %v4437 = vpack.c.b16 %v4419, %v4418
      %v4438 = vpack.c.b16 %v4421, %v4420
      %v4439 = vpack.c.b16 %v4423, %v4422
      %v4440 = vpack.c.b16 %v4425, %v4424
      %v4441 = vpack.c.b16 %v4427, %v4426
      %v4442 = vpack.c.b16 %v4429, %v4428
      %v4443 = vpack.c.b16 %v4430, %v4430
      %v4457 = vsel %vm1457, %v4318, 0
      %v4460 = vsel %vm1457, %v4320, 0
      %v4463 = vsel %vm1457, %v4322, 0
      %v4466 = vsel %vm1457, %v4324, 0
      %v4469 = vsel %vm1457, %v4326, 0
      %v4472 = vsel %vm1457, %v4328, 0
      %v4475 = vsel %vm1457, %v4330, 0
      %v4478 = vsel %vm1457, %v4332, 0
      %v4481 = vsel %vm1457, %v4334, 0
      %v4484 = vsel %vm1457, %v4336, 0
      %v4487 = vsel %vm1457, %v4338, 0
      %v4490 = vsel %vm1457, %v4340, 0
      %v4493 = vsel %vm1457, %v4342, 0
      %v4496 = vsel %vm1457, %v4344, 0
      %v4499 = vsel %vm1457, %v4346, 0
      %v4502 = vsel %vm1457, %v4348, 0
      %v4505 = vsel %vm1506, %v4443, 0
      %4507 = vmatprep.subr.bf16.mxu0 0
      %4508 = vmatpush1.bf16.msra.mxu0 %v4438
      %4509 = vmatprep.subr.bf16.mxu0 0
      %4510 = vmatpush1.bf16.msra.mxu0 %v4437
      %4511 = vmatprep.subr.bf16.mxu0 0
      %4512 = vmatpush1.bf16.msra.mxu0 %v4436
      %4513 = vmatprep.subr.bf16.mxu0 0
      %4514 = vmatpush1.bf16.msra.mxu0 %v4435
      %4515 = vmatprep.subr.bf16.mxu0 0
      %4516 = vmatpush1.bf16.msra.mxu0 %v4434
      %4517 = vmatprep.subr.bf16.mxu0 0
      %4518 = vmatpush1.bf16.msra.mxu0 %v4433
      %4519 = vmatprep.subr.bf16.mxu0 0
      %4520 = vmatpush1.bf16.msra.mxu0 %v4432
      %4521 = vmatprep.subr.bf16.mxu0 0
      %4522 = vmatpush1.bf16.msra.mxu0 %v4431
      %4523 = vmatprep.subr.bf16.mxu0 0
      %4524 = vmatpush2.bf16.msra.mxu0 0
      %4525 = vmatprep.subr.bf16.mxu0 0
      %4526 = vmatpush2.bf16.msra.mxu0 0
      %4527 = vmatprep.subr.bf16.mxu0 0
      %4528 = vmatpush2.bf16.msra.mxu0 0
      %4529 = vmatprep.subr.bf16.mxu0 0
      %4530 = vmatpush2.bf16.msra.mxu0 %v4505
      %4531 = vmatprep.subr.bf16.mxu0 0
      %4532 = vmatpush2.bf16.msra.mxu0 %v4442
      %4533 = vmatprep.subr.bf16.mxu0 0
      %4534 = vmatpush2.bf16.msra.mxu0 %v4441
      %4535 = vmatprep.subr.bf16.mxu0 0
      %4536 = vmatpush2.bf16.msra.mxu0 %v4440
      %4537 = vmatprep.subr.bf16.mxu0 0
      %4538 = vmatpush2.bf16.msra.mxu0 %v4439
      %4539 = vmatprep.mubr.bf16.mxu0 %v4457
      %4540 = vmatmul.mubr.bf16.gmra.mxu0 %v4317
      %v4541 = vpop.f32.mrf.mxu0
      %v4542 = vadd.f32 %v4379, %v4541
      %v4543 = vpop.f32.mrf.mxu0
      %v4544 = vpop.f32.mrf.mxu0
      %v4545 = vadd.f32 %v4379, %v4544
      %v4546 = vpop.f32.mrf.mxu0
      %4547 = vmatprep.mubr.bf16.mxu0 %v4460
      %4548 = vmatmul.mubr.bf16.gmra.mxu0 %v4319
      %v4549 = vpop.f32.mrf.mxu0
      %v4550 = vadd.f32 %v4379, %v4549
      %v4551 = vpop.f32.mrf.mxu0
      %v4552 = vpop.f32.mrf.mxu0
      %v4553 = vadd.f32 %v4379, %v4552
      %v4554 = vpop.f32.mrf.mxu0
      %4555 = vmatprep.mubr.bf16.mxu0 %v4463
      %4556 = vmatmul.mubr.bf16.gmra.mxu0 %v4321
      %v4557 = vpop.f32.mrf.mxu0
      %v4558 = vadd.f32 %v4379, %v4557
      %v4559 = vpop.f32.mrf.mxu0
      %v4560 = vpop.f32.mrf.mxu0
      %v4561 = vadd.f32 %v4379, %v4560
      %v4562 = vpop.f32.mrf.mxu0
      %4563 = vmatprep.mubr.bf16.mxu0 %v4466
      %4564 = vmatmul.mubr.bf16.gmra.mxu0 %v4323
      %v4565 = vpop.f32.mrf.mxu0
      %v4566 = vadd.f32 %v4379, %v4565
      %v4567 = vpop.f32.mrf.mxu0
      %v4568 = vpop.f32.mrf.mxu0
      %v4569 = vadd.f32 %v4379, %v4568
      %v4570 = vpop.f32.mrf.mxu0
      %4571 = vmatprep.mubr.bf16.mxu0 %v4469
      %4572 = vmatmul.mubr.bf16.gmra.mxu0 %v4325
      %v4573 = vpop.f32.mrf.mxu0
      %v4574 = vadd.f32 %v4379, %v4573
      %v4575 = vpop.f32.mrf.mxu0
      %v4576 = vpop.f32.mrf.mxu0
      %v4577 = vadd.f32 %v4379, %v4576
      %v4578 = vpop.f32.mrf.mxu0
      %4579 = vmatprep.mubr.bf16.mxu0 %v4472
      %4580 = vmatmul.mubr.bf16.gmra.mxu0 %v4327
      %v4581 = vpop.f32.mrf.mxu0
      %v4582 = vadd.f32 %v4379, %v4581
      %v4583 = vpop.f32.mrf.mxu0
      %v4584 = vpop.f32.mrf.mxu0
      %v4585 = vadd.f32 %v4379, %v4584
      %v4586 = vpop.f32.mrf.mxu0
      %4587 = vmatprep.mubr.bf16.mxu0 %v4475
      %4588 = vmatmul.mubr.bf16.gmra.mxu0 %v4329
      %v4589 = vpop.f32.mrf.mxu0
      %v4590 = vadd.f32 %v4379, %v4589
      %v4591 = vpop.f32.mrf.mxu0
      %v4592 = vpop.f32.mrf.mxu0
      %v4593 = vadd.f32 %v4379, %v4592
      %v4594 = vpop.f32.mrf.mxu0
      %4595 = vmatprep.mubr.bf16.mxu0 %v4478
      %4596 = vmatmul.mubr.bf16.gmra.mxu0 %v4331
      %v4597 = vpop.f32.mrf.mxu0
      %v4598 = vadd.f32 %v4379, %v4597
      %v4599 = vpop.f32.mrf.mxu0
      %v4600 = vpop.f32.mrf.mxu0
      %v4601 = vadd.f32 %v4379, %v4600
      %v4602 = vpop.f32.mrf.mxu0
      %4603 = vmatprep.mubr.bf16.mxu0 %v4481
      %4604 = vmatmul.mubr.bf16.gmra.mxu0 %v4333
      %v4605 = vpop.f32.mrf.mxu0
      %v4606 = vadd.f32 %v4379, %v4605
      %v4607 = vpop.f32.mrf.mxu0
      %v4608 = vpop.f32.mrf.mxu0
      %v4609 = vadd.f32 %v4379, %v4608
      %v4610 = vpop.f32.mrf.mxu0
      %4611 = vmatprep.mubr.bf16.mxu0 %v4484
      %4612 = vmatmul.mubr.bf16.gmra.mxu0 %v4335
      %v4613 = vpop.f32.mrf.mxu0
      %v4614 = vadd.f32 %v4379, %v4613
      %v4615 = vpop.f32.mrf.mxu0
      %v4616 = vpop.f32.mrf.mxu0
      %v4617 = vadd.f32 %v4379, %v4616
      %v4618 = vpop.f32.mrf.mxu0
      %4619 = vmatprep.mubr.bf16.mxu0 %v4487
      %4620 = vmatmul.mubr.bf16.gmra.mxu0 %v4337
      %v4621 = vpop.f32.mrf.mxu0
      %v4622 = vadd.f32 %v4379, %v4621
      %v4623 = vpop.f32.mrf.mxu0
      %v4624 = vpop.f32.mrf.mxu0
      %v4625 = vadd.f32 %v4379, %v4624
      %v4626 = vpop.f32.mrf.mxu0
      %4627 = vmatprep.mubr.bf16.mxu0 %v4490
      %4628 = vmatmul.mubr.bf16.gmra.mxu0 %v4339
      %v4629 = vpop.f32.mrf.mxu0
      %v4630 = vadd.f32 %v4379, %v4629
      %v4631 = vpop.f32.mrf.mxu0
      %v4632 = vpop.f32.mrf.mxu0
      %v4633 = vadd.f32 %v4379, %v4632
      %v4634 = vpop.f32.mrf.mxu0
      %4635 = vmatprep.mubr.bf16.mxu0 %v4493
      %4636 = vmatmul.mubr.bf16.gmra.mxu0 %v4341
      %v4637 = vpop.f32.mrf.mxu0
      %v4638 = vadd.f32 %v4379, %v4637
      %v4639 = vpop.f32.mrf.mxu0
      %v4640 = vpop.f32.mrf.mxu0
      %v4641 = vadd.f32 %v4379, %v4640
      %v4642 = vpop.f32.mrf.mxu0
      %4643 = vmatprep.mubr.bf16.mxu0 %v4496
      %4644 = vmatmul.mubr.bf16.gmra.mxu0 %v4343
      %v4645 = vpop.f32.mrf.mxu0
      %v4646 = vadd.f32 %v4379, %v4645
      %v4647 = vpop.f32.mrf.mxu0
      %v4648 = vpop.f32.mrf.mxu0
      %v4649 = vadd.f32 %v4379, %v4648
      %v4650 = vpop.f32.mrf.mxu0
      %4651 = vmatprep.mubr.bf16.mxu0 %v4499
      %4652 = vmatmul.mubr.bf16.gmra.mxu0 %v4345
      %v4653 = vpop.f32.mrf.mxu0
      %v4654 = vadd.f32 %v4379, %v4653
      %v4655 = vpop.f32.mrf.mxu0
      %v4656 = vpop.f32.mrf.mxu0
      %v4657 = vadd.f32 %v4379, %v4656
      %v4658 = vpop.f32.mrf.mxu0
      %4659 = vmatprep.mubr.bf16.mxu0 %v4502
      %4660 = vmatmul.mubr.bf16.gmra.mxu0 %v4347
      %v4661 = vpop.f32.mrf.mxu0
      %v4662 = vadd.f32 %v4379, %v4661
      %v4663 = vpop.f32.mrf.mxu0
      %v4664 = vpop.f32.mrf.mxu0
      %v4665 = vadd.f32 %v4379, %v4664
      %v4666 = vpop.f32.mrf.mxu0
      %4667 = vdwg.mxu0
      %v4668 = vsub.f32 1.0, %v448
      %v4669 = vsub.f32 1.0, %v450
      %v4670 = vsub.f32 1.0, %v452
      %v4671 = vsub.f32 1.0, %v454
      %v4672 = vsub.f32 1.0, %v456
      %v4673 = vsub.f32 1.0, %v458
      %v4674 = vsub.f32 1.0, %v460
      %v4675 = vsub.f32 1.0, %v462
      %v4676 = vsub.f32 1.0, %v464
      %v4677 = vsub.f32 1.0, %v466
      %v4678 = vsub.f32 1.0, %v468
      %v4679 = vsub.f32 1.0, %v470
      %v4680 = vsub.f32 1.0, %v472
      %v4681 = vsub.f32 1.0, %v474
      %v4682 = vsub.f32 1.0, %v476
      %v4683 = vsub.f32 1.0, %v478
      %v4684 = vsub.f32 1.0, %v480
      %v4685 = vsub.f32 1.0, %v482
      %v4686 = vsub.f32 1.0, %v484
      %v4687 = vsub.f32 1.0, %v486
      %v4688 = vsub.f32 1.0, %v488
      %v4689 = vsub.f32 1.0, %v490
      %v4690 = vsub.f32 1.0, %v492
      %v4691 = vsub.f32 1.0, %v494
      %v4692 = vsub.f32 1.0, %v496
      %v4693 = vsub.f32 1.0, %v498
      %v4694 = vsub.f32 1.0, %v500
      %v4695 = vsub.f32 1.0, %v502
      %v4696 = vsub.f32 1.0, %v504
      %v4697 = vsub.f32 1.0, %v506
      %v4698 = vsub.f32 1.0, %v508
      %v4699 = vsub.f32 1.0, %v510
      %v4700 = vmul.f32 %v4542, %v4668
      %v4701 = vmul.f32 %v4545, %v4669
      %v4702 = vmul.f32 %v4550, %v4670
      %v4703 = vmul.f32 %v4553, %v4671
      %v4704 = vmul.f32 %v4558, %v4672
      %v4705 = vmul.f32 %v4561, %v4673
      %v4706 = vmul.f32 %v4566, %v4674
      %v4707 = vmul.f32 %v4569, %v4675
      %v4708 = vmul.f32 %v4574, %v4676
      %v4709 = vmul.f32 %v4577, %v4677
      %v4710 = vmul.f32 %v4582, %v4678
      %v4711 = vmul.f32 %v4585, %v4679
      %v4712 = vmul.f32 %v4590, %v4680
      %v4713 = vmul.f32 %v4593, %v4681
      %v4714 = vmul.f32 %v4598, %v4682
      %v4715 = vmul.f32 %v4601, %v4683
      %v4716 = vmul.f32 %v4606, %v4684
      %v4717 = vmul.f32 %v4609, %v4685
      %v4718 = vmul.f32 %v4614, %v4686
      %v4719 = vmul.f32 %v4617, %v4687
      %v4720 = vmul.f32 %v4622, %v4688
      %v4721 = vmul.f32 %v4625, %v4689
      %v4722 = vmul.f32 %v4630, %v4690
      %v4723 = vmul.f32 %v4633, %v4691
      %v4724 = vmul.f32 %v4638, %v4692
      %v4725 = vmul.f32 %v4641, %v4693
      %v4726 = vmul.f32 %v4646, %v4694
      %v4727 = vmul.f32 %v4649, %v4695
      %v4728 = vmul.f32 %v4654, %v4696
      %v4729 = vmul.f32 %v4657, %v4697
      %v4730 = vmul.f32 %v4662, %v4698
      %v4731 = vmul.f32 %v4665, %v4699
      %4764 = vrot.lane.b32.xlu0 %v448, 1
      %v4765 = vpop.permute.xlu0 %4764
      %4766 = vrot.lane.b32.xlu0 %v450, 1
      %v4767 = vpop.permute.xlu0 %4766
      %4768 = vrot.lane.b32.xlu0 %v452, 1
      %v4769 = vpop.permute.xlu0 %4768
      %4770 = vrot.lane.b32.xlu0 %v454, 1
      %v4771 = vpop.permute.xlu0 %4770
      %4772 = vrot.lane.b32.xlu0 %v456, 1
      %v4773 = vpop.permute.xlu0 %4772
      %4774 = vrot.lane.b32.xlu0 %v458, 1
      %v4775 = vpop.permute.xlu0 %4774
      %4776 = vrot.lane.b32.xlu0 %v460, 1
      %v4777 = vpop.permute.xlu0 %4776
      %4778 = vrot.lane.b32.xlu0 %v462, 1
      %v4779 = vpop.permute.xlu0 %4778
      %4780 = vrot.lane.b32.xlu0 %v464, 1
      %v4781 = vpop.permute.xlu0 %4780
      %4782 = vrot.lane.b32.xlu0 %v466, 1
      %v4783 = vpop.permute.xlu0 %4782
      %4784 = vrot.lane.b32.xlu0 %v468, 1
      %v4785 = vpop.permute.xlu0 %4784
      %4786 = vrot.lane.b32.xlu0 %v470, 1
      %v4787 = vpop.permute.xlu0 %4786
      %4788 = vrot.lane.b32.xlu0 %v472, 1
      %v4789 = vpop.permute.xlu0 %4788
      %4790 = vrot.lane.b32.xlu0 %v474, 1
      %v4791 = vpop.permute.xlu0 %4790
      %4792 = vrot.lane.b32.xlu0 %v476, 1
      %v4793 = vpop.permute.xlu0 %4792
      %4794 = vrot.lane.b32.xlu0 %v478, 1
      %v4795 = vpop.permute.xlu0 %4794
      %4796 = vrot.lane.b32.xlu0 %v480, 1
      %v4797 = vpop.permute.xlu0 %4796
      %4798 = vrot.lane.b32.xlu0 %v482, 1
      %v4799 = vpop.permute.xlu0 %4798
      %4800 = vrot.lane.b32.xlu0 %v484, 1
      %v4801 = vpop.permute.xlu0 %4800
      %4802 = vrot.lane.b32.xlu0 %v486, 1
      %v4803 = vpop.permute.xlu0 %4802
      %4804 = vrot.lane.b32.xlu0 %v488, 1
      %v4805 = vpop.permute.xlu0 %4804
      %4806 = vrot.lane.b32.xlu0 %v490, 1
      %v4807 = vpop.permute.xlu0 %4806
      %4808 = vrot.lane.b32.xlu0 %v492, 1
      %v4809 = vpop.permute.xlu0 %4808
      %4810 = vrot.lane.b32.xlu0 %v494, 1
      %v4811 = vpop.permute.xlu0 %4810
      %4812 = vrot.lane.b32.xlu0 %v496, 1
      %v4813 = vpop.permute.xlu0 %4812
      %4814 = vrot.lane.b32.xlu0 %v498, 1
      %v4815 = vpop.permute.xlu0 %4814
      %4816 = vrot.lane.b32.xlu0 %v500, 1
      %v4817 = vpop.permute.xlu0 %4816
      %4818 = vrot.lane.b32.xlu0 %v502, 1
      %v4819 = vpop.permute.xlu0 %4818
      %4820 = vrot.lane.b32.xlu0 %v504, 1
      %v4821 = vpop.permute.xlu0 %4820
      %4822 = vrot.lane.b32.xlu0 %v506, 1
      %v4823 = vpop.permute.xlu0 %4822
      %4824 = vrot.lane.b32.xlu0 %v508, 1
      %v4825 = vpop.permute.xlu0 %4824
      %4826 = vrot.lane.b32.xlu0 %v510, 1
      %v4827 = vpop.permute.xlu0 %4826
      %v4860 = vmul.f32 %v4542, %v4765
      %v4861 = vmul.f32 %v4545, %v4767
      %v4862 = vmul.f32 %v4550, %v4769
      %v4863 = vmul.f32 %v4553, %v4771
      %v4864 = vmul.f32 %v4558, %v4773
      %v4865 = vmul.f32 %v4561, %v4775
      %v4866 = vmul.f32 %v4566, %v4777
      %v4867 = vmul.f32 %v4569, %v4779
      %v4868 = vmul.f32 %v4574, %v4781
      %v4869 = vmul.f32 %v4577, %v4783
      %v4870 = vmul.f32 %v4582, %v4785
      %v4871 = vmul.f32 %v4585, %v4787
      %v4872 = vmul.f32 %v4590, %v4789
      %v4873 = vmul.f32 %v4593, %v4791
      %v4874 = vmul.f32 %v4598, %v4793
      %v4875 = vmul.f32 %v4601, %v4795
      %v4876 = vmul.f32 %v4606, %v4797
      %v4877 = vmul.f32 %v4609, %v4799
      %v4878 = vmul.f32 %v4614, %v4801
      %v4879 = vmul.f32 %v4617, %v4803
      %v4880 = vmul.f32 %v4622, %v4805
      %v4881 = vmul.f32 %v4625, %v4807
      %v4882 = vmul.f32 %v4630, %v4809
      %v4883 = vmul.f32 %v4633, %v4811
      %v4884 = vmul.f32 %v4638, %v4813
      %v4885 = vmul.f32 %v4641, %v4815
      %v4886 = vmul.f32 %v4646, %v4817
      %v4887 = vmul.f32 %v4649, %v4819
      %v4888 = vmul.f32 %v4654, %v4821
      %v4889 = vmul.f32 %v4657, %v4823
      %v4890 = vmul.f32 %v4662, %v4825
      %v4891 = vmul.f32 %v4665, %v4827
      %4924 = vrot.lane.b32.xlu0 %v4860, 127
      %v4925 = vpop.permute.xlu0 %4924
      %4926 = vrot.lane.b32.xlu0 %v4861, 127
      %v4927 = vpop.permute.xlu0 %4926
      %4928 = vrot.lane.b32.xlu0 %v4862, 127
      %v4929 = vpop.permute.xlu0 %4928
      %4930 = vrot.lane.b32.xlu0 %v4863, 127
      %v4931 = vpop.permute.xlu0 %4930
      %4932 = vrot.lane.b32.xlu0 %v4864, 127
      %v4933 = vpop.permute.xlu0 %4932
      %4934 = vrot.lane.b32.xlu0 %v4865, 127
      %v4935 = vpop.permute.xlu0 %4934
      %4936 = vrot.lane.b32.xlu0 %v4866, 127
      %v4937 = vpop.permute.xlu0 %4936
      %4938 = vrot.lane.b32.xlu0 %v4867, 127
      %v4939 = vpop.permute.xlu0 %4938
      %4940 = vrot.lane.b32.xlu0 %v4868, 127
      %v4941 = vpop.permute.xlu0 %4940
      %4942 = vrot.lane.b32.xlu0 %v4869, 127
      %v4943 = vpop.permute.xlu0 %4942
      %4944 = vrot.lane.b32.xlu0 %v4870, 127
      %v4945 = vpop.permute.xlu0 %4944
      %4946 = vrot.lane.b32.xlu0 %v4871, 127
      %v4947 = vpop.permute.xlu0 %4946
      %4948 = vrot.lane.b32.xlu0 %v4872, 127
      %v4949 = vpop.permute.xlu0 %4948
      %4950 = vrot.lane.b32.xlu0 %v4873, 127
      %v4951 = vpop.permute.xlu0 %4950
      %4952 = vrot.lane.b32.xlu0 %v4874, 127
      %v4953 = vpop.permute.xlu0 %4952
      %4954 = vrot.lane.b32.xlu0 %v4875, 127
      %v4955 = vpop.permute.xlu0 %4954
      %4956 = vrot.lane.b32.xlu0 %v4876, 127
      %v4957 = vpop.permute.xlu0 %4956
      %4958 = vrot.lane.b32.xlu0 %v4877, 127
      %v4959 = vpop.permute.xlu0 %4958
      %4960 = vrot.lane.b32.xlu0 %v4878, 127
      %v4961 = vpop.permute.xlu0 %4960
      %4962 = vrot.lane.b32.xlu0 %v4879, 127
      %v4963 = vpop.permute.xlu0 %4962
      %4964 = vrot.lane.b32.xlu0 %v4880, 127
      %v4965 = vpop.permute.xlu0 %4964
      %4966 = vrot.lane.b32.xlu0 %v4881, 127
      %v4967 = vpop.permute.xlu0 %4966
      %4968 = vrot.lane.b32.xlu0 %v4882, 127
      %v4969 = vpop.permute.xlu0 %4968
      %4970 = vrot.lane.b32.xlu0 %v4883, 127
      %v4971 = vpop.permute.xlu0 %4970
      %4972 = vrot.lane.b32.xlu0 %v4884, 127
      %v4973 = vpop.permute.xlu0 %4972
      %4974 = vrot.lane.b32.xlu0 %v4885, 127
      %v4975 = vpop.permute.xlu0 %4974
      %4976 = vrot.lane.b32.xlu0 %v4886, 127
      %v4977 = vpop.permute.xlu0 %4976
      %4978 = vrot.lane.b32.xlu0 %v4887, 127
      %v4979 = vpop.permute.xlu0 %4978
      %4980 = vrot.lane.b32.xlu0 %v4888, 127
      %v4981 = vpop.permute.xlu0 %4980
      %4982 = vrot.lane.b32.xlu0 %v4889, 127
      %v4983 = vpop.permute.xlu0 %4982
      %4984 = vrot.lane.b32.xlu0 %v4890, 127
      %v4985 = vpop.permute.xlu0 %4984
      %4986 = vrot.lane.b32.xlu0 %v4891, 127
      %v4987 = vpop.permute.xlu0 %4986
      %v5020 = vadd.f32 %v4700, %v4925
      %v5021 = vadd.f32 %v4701, %v4927
      %v5022 = vadd.f32 %v4702, %v4929
      %v5023 = vadd.f32 %v4703, %v4931
      %v5024 = vadd.f32 %v4704, %v4933
      %v5025 = vadd.f32 %v4705, %v4935
      %v5026 = vadd.f32 %v4706, %v4937
      %v5027 = vadd.f32 %v4707, %v4939
      %v5028 = vadd.f32 %v4708, %v4941
      %v5029 = vadd.f32 %v4709, %v4943
      %v5030 = vadd.f32 %v4710, %v4945
      %v5031 = vadd.f32 %v4711, %v4947
      %v5032 = vadd.f32 %v4712, %v4949
      %v5033 = vadd.f32 %v4713, %v4951
      %v5034 = vadd.f32 %v4714, %v4953
      %v5035 = vadd.f32 %v4715, %v4955
      %v5036 = vadd.f32 %v4716, %v4957
      %v5037 = vadd.f32 %v4717, %v4959
      %v5038 = vadd.f32 %v4718, %v4961
      %v5039 = vadd.f32 %v4719, %v4963
      %v5040 = vadd.f32 %v4720, %v4965
      %v5041 = vadd.f32 %v4721, %v4967
      %v5042 = vadd.f32 %v4722, %v4969
      %v5043 = vadd.f32 %v4723, %v4971
      %v5044 = vadd.f32 %v4724, %v4973
      %v5045 = vadd.f32 %v4725, %v4975
      %v5046 = vadd.f32 %v4726, %v4977
      %v5047 = vadd.f32 %v4727, %v4979
      %v5048 = vadd.f32 %v4728, %v4981
      %v5049 = vadd.f32 %v4729, %v4983
      %v5050 = vadd.f32 %v4730, %v4985
      %v5051 = vadd.f32 %v4731, %v4987
      %vm5052 = vcmask 7168
      %5053 = vst.msk [vmem:[%s445] sm:$0xff] %vm5052, %v5020
      %5054 = vst.msk [vmem:[%s445 + $0x8] sm:$0xff] %vm5052, %v5021
      %5055 = vst.msk [vmem:[%s445 + $0x10] sm:$0xff] %vm5052, %v5022
      %5056 = vst.msk [vmem:[%s445 + $0x18] sm:$0xff] %vm5052, %v5023
      %5057 = vst.msk [vmem:[%s445 + $0x20] sm:$0xff] %vm5052, %v5024
      %5058 = vst.msk [vmem:[%s445 + $0x28] sm:$0xff] %vm5052, %v5025
      %5059 = vst.msk [vmem:[%s445 + $0x30] sm:$0xff] %vm5052, %v5026
      %5060 = vst.msk [vmem:[%s445 + $0x38] sm:$0xff] %vm5052, %v5027
      %5061 = vst.msk [vmem:[%s445 + $0x40] sm:$0xff] %vm5052, %v5028
      %5062 = vst.msk [vmem:[%s445 + $0x48] sm:$0xff] %vm5052, %v5029
      %5063 = vst.msk [vmem:[%s445 + $0x50] sm:$0xff] %vm5052, %v5030
      %5064 = vst.msk [vmem:[%s445 + $0x58] sm:$0xff] %vm5052, %v5031
      %5065 = vst.msk [vmem:[%s445 + $0x60] sm:$0xff] %vm5052, %v5032
      %5066 = vst.msk [vmem:[%s445 + $0x68] sm:$0xff] %vm5052, %v5033
      %5067 = vst.msk [vmem:[%s445 + $0x70] sm:$0xff] %vm5052, %v5034
      %5068 = vst.msk [vmem:[%s445 + $0x78] sm:$0xff] %vm5052, %v5035
      %5069 = vst.msk [vmem:[%s445 + $0x80] sm:$0xff] %vm5052, %v5036
      %5070 = vst.msk [vmem:[%s445 + $0x88] sm:$0xff] %vm5052, %v5037
      %5071 = vst.msk [vmem:[%s445 + $0x90] sm:$0xff] %vm5052, %v5038
      %5072 = vst.msk [vmem:[%s445 + $0x98] sm:$0xff] %vm5052, %v5039
      %5073 = vst.msk [vmem:[%s445 + $0xa0] sm:$0xff] %vm5052, %v5040
      %5074 = vst.msk [vmem:[%s445 + $0xa8] sm:$0xff] %vm5052, %v5041
      %5075 = vst.msk [vmem:[%s445 + $0xb0] sm:$0xff] %vm5052, %v5042
      %5076 = vst.msk [vmem:[%s445 + $0xb8] sm:$0xff] %vm5052, %v5043
      %5077 = vst.msk [vmem:[%s445 + $0xc0] sm:$0xff] %vm5052, %v5044
      %5078 = vst.msk [vmem:[%s445 + $0xc8] sm:$0xff] %vm5052, %v5045
      %5079 = vst.msk [vmem:[%s445 + $0xd0] sm:$0xff] %vm5052, %v5046
      %5080 = vst.msk [vmem:[%s445 + $0xd8] sm:$0xff] %vm5052, %v5047
      %5081 = vst.msk [vmem:[%s445 + $0xe0] sm:$0xff] %vm5052, %v5048
      %5082 = vst.msk [vmem:[%s445 + $0xe8] sm:$0xff] %vm5052, %v5049
      %5083 = vst.msk [vmem:[%s445 + $0xf0] sm:$0xff] %vm5052, %v5050
      %5084 = vst.msk [vmem:[%s445 + $0xf8] sm:$0xff] %vm5052, %v5051
      %5117 = vrot.lane.b32.xlu0 %v3070, 1
      %v5118 = vpop.permute.xlu0 %5117
      %5119 = vrot.lane.b32.xlu0 %v3074, 1
      %v5120 = vpop.permute.xlu0 %5119
      %5121 = vrot.lane.b32.xlu0 %v3080, 1
      %v5122 = vpop.permute.xlu0 %5121
      %5123 = vrot.lane.b32.xlu0 %v3084, 1
      %v5124 = vpop.permute.xlu0 %5123
      %5125 = vrot.lane.b32.xlu0 %v3090, 1
      %v5126 = vpop.permute.xlu0 %5125
      %5127 = vrot.lane.b32.xlu0 %v3094, 1
      %v5128 = vpop.permute.xlu0 %5127
      %5129 = vrot.lane.b32.xlu0 %v3100, 1
      %v5130 = vpop.permute.xlu0 %5129
      %5131 = vrot.lane.b32.xlu0 %v3104, 1
      %v5132 = vpop.permute.xlu0 %5131
      %5133 = vrot.lane.b32.xlu0 %v3110, 1
      %v5134 = vpop.permute.xlu0 %5133
      %5135 = vrot.lane.b32.xlu0 %v3114, 1
      %v5136 = vpop.permute.xlu0 %5135
      %5137 = vrot.lane.b32.xlu0 %v3120, 1
      %v5138 = vpop.permute.xlu0 %5137
      %5139 = vrot.lane.b32.xlu0 %v3124, 1
      %v5140 = vpop.permute.xlu0 %5139
      %5141 = vrot.lane.b32.xlu0 %v3130, 1
      %v5142 = vpop.permute.xlu0 %5141
      %5143 = vrot.lane.b32.xlu0 %v3134, 1
      %v5144 = vpop.permute.xlu0 %5143
      %5145 = vrot.lane.b32.xlu0 %v3140, 1
      %v5146 = vpop.permute.xlu0 %5145
      %5147 = vrot.lane.b32.xlu0 %v3144, 1
      %v5148 = vpop.permute.xlu0 %5147
      %5149 = vrot.lane.b32.xlu0 %v3150, 1
      %v5150 = vpop.permute.xlu0 %5149
      %5151 = vrot.lane.b32.xlu0 %v3154, 1
      %v5152 = vpop.permute.xlu0 %5151
      %5153 = vrot.lane.b32.xlu0 %v3160, 1
      %v5154 = vpop.permute.xlu0 %5153
      %5155 = vrot.lane.b32.xlu0 %v3164, 1
      %v5156 = vpop.permute.xlu0 %5155
      %5157 = vrot.lane.b32.xlu0 %v3170, 1
      %v5158 = vpop.permute.xlu0 %5157
      %5159 = vrot.lane.b32.xlu0 %v3174, 1
      %v5160 = vpop.permute.xlu0 %5159
      %5161 = vrot.lane.b32.xlu0 %v3180, 1
      %v5162 = vpop.permute.xlu0 %5161
      %5163 = vrot.lane.b32.xlu0 %v3184, 1
      %v5164 = vpop.permute.xlu0 %5163
      %5165 = vrot.lane.b32.xlu0 %v3190, 1
      %v5166 = vpop.permute.xlu0 %5165
      %5167 = vrot.lane.b32.xlu0 %v3194, 1
      %v5168 = vpop.permute.xlu0 %5167
      %5169 = vrot.lane.b32.xlu0 %v3200, 1
      %v5170 = vpop.permute.xlu0 %5169
      %5171 = vrot.lane.b32.xlu0 %v3204, 1
      %v5172 = vpop.permute.xlu0 %5171
      %5173 = vrot.lane.b32.xlu0 %v3210, 1
      %v5174 = vpop.permute.xlu0 %5173
      %5175 = vrot.lane.b32.xlu0 %v3214, 1
      %v5176 = vpop.permute.xlu0 %5175
      %5177 = vrot.lane.b32.xlu0 %v3220, 1
      %v5178 = vpop.permute.xlu0 %5177
      %5179 = vrot.lane.b32.xlu0 %v3224, 1
      %v5180 = vpop.permute.xlu0 %5179
      %vm5213 = vcmask 15368
      %5214 = vst.msk [vmem:[%s445] sm:$0xff] %vm5213, %v5118
      %5215 = vst.msk [vmem:[%s445 + $0x8] sm:$0xff] %vm5213, %v5120
      %5216 = vst.msk [vmem:[%s445 + $0x10] sm:$0xff] %vm5213, %v5122
      %5217 = vst.msk [vmem:[%s445 + $0x18] sm:$0xff] %vm5213, %v5124
      %5218 = vst.msk [vmem:[%s445 + $0x20] sm:$0xff] %vm5213, %v5126
      %5219 = vst.msk [vmem:[%s445 + $0x28] sm:$0xff] %vm5213, %v5128
      %5220 = vst.msk [vmem:[%s445 + $0x30] sm:$0xff] %vm5213, %v5130
      %5221 = vst.msk [vmem:[%s445 + $0x38] sm:$0xff] %vm5213, %v5132
      %5222 = vst.msk [vmem:[%s445 + $0x40] sm:$0xff] %vm5213, %v5134
      %5223 = vst.msk [vmem:[%s445 + $0x48] sm:$0xff] %vm5213, %v5136
      %5224 = vst.msk [vmem:[%s445 + $0x50] sm:$0xff] %vm5213, %v5138
      %5225 = vst.msk [vmem:[%s445 + $0x58] sm:$0xff] %vm5213, %v5140
      %5226 = vst.msk [vmem:[%s445 + $0x60] sm:$0xff] %vm5213, %v5142
      %5227 = vst.msk [vmem:[%s445 + $0x68] sm:$0xff] %vm5213, %v5144
      %5228 = vst.msk [vmem:[%s445 + $0x70] sm:$0xff] %vm5213, %v5146
      %5229 = vst.msk [vmem:[%s445 + $0x78] sm:$0xff] %vm5213, %v5148
      %5230 = vst.msk [vmem:[%s445 + $0x80] sm:$0xff] %vm5213, %v5150
      %5231 = vst.msk [vmem:[%s445 + $0x88] sm:$0xff] %vm5213, %v5152
      %5232 = vst.msk [vmem:[%s445 + $0x90] sm:$0xff] %vm5213, %v5154
      %5233 = vst.msk [vmem:[%s445 + $0x98] sm:$0xff] %vm5213, %v5156
      %5234 = vst.msk [vmem:[%s445 + $0xa0] sm:$0xff] %vm5213, %v5158
      %5235 = vst.msk [vmem:[%s445 + $0xa8] sm:$0xff] %vm5213, %v5160
      %5236 = vst.msk [vmem:[%s445 + $0xb0] sm:$0xff] %vm5213, %v5162
      %5237 = vst.msk [vmem:[%s445 + $0xb8] sm:$0xff] %vm5213, %v5164
      %5238 = vst.msk [vmem:[%s445 + $0xc0] sm:$0xff] %vm5213, %v5166
      %5239 = vst.msk [vmem:[%s445 + $0xc8] sm:$0xff] %vm5213, %v5168
      %5240 = vst.msk [vmem:[%s445 + $0xd0] sm:$0xff] %vm5213, %v5170
      %5241 = vst.msk [vmem:[%s445 + $0xd8] sm:$0xff] %vm5213, %v5172
      %5242 = vst.msk [vmem:[%s445 + $0xe0] sm:$0xff] %vm5213, %v5174
      %5243 = vst.msk [vmem:[%s445 + $0xe8] sm:$0xff] %vm5213, %v5176
      %5244 = vst.msk [vmem:[%s445 + $0xf0] sm:$0xff] %vm5213, %v5178
      %5245 = vst.msk [vmem:[%s445 + $0xf8] sm:$0xff] %vm5213, %v5180
      %s5246 = smul.u32 32, %s24
      %p5247 = scmp.lt.s32.totalorder %s5246, 63
      %s5248 = scalar_select %p5247, %s5246, 63
      %s5249 = smul.addr %s5248, 8
      %s5250 = scalar_lea.vmem %s13, %s5249
      // Predicated region
      $region73: #{learner_forward.1} parent=71 // pred_check
        %p5251 = pneg %p320
      $region74: #{learner_forward.1} parent=71 // pred_check_branch
        %5253 = sbr.rel (%p5251) target = $region76
      $region75: #{learner_forward.1} parent=71 // pred_region
        %s5254 = smul.u32 32, %s24
      $region76: #{learner_forward.1} parent=71 // pred_fallthru
        _
    $region72: #{learner_forward.1} parent=5 // pred_fallthru
      _
    %p5255 = scmp.le.s32.totalorder 2, %s19
    // Predicated region
    $region77: #{learner_forward.1} parent=5 // pred_check
      %p5256 = pneg %p5255
    $region78: #{learner_forward.1} parent=5 // pred_check_branch
      %5258 = sbr.rel (%p5256) target = $region80
    $region79: #{learner_forward.1} parent=5 // pred_region
      %s5259 = ssub.s32 %s19, 2
      // Predicated region
      $region81: #{learner_forward.1} parent=79 // pred_check
        %p5260 = pneg %p326
      $region82: #{learner_forward.1} parent=79 // pred_check_branch
        %5262 = sbr.rel (%p5260) target = $region84
      $region83: #{learner_forward.1} parent=79 // pred_region
        %s5263 = smul.u32 32, %s25
        %p5264 = scmp.lt.s32.totalorder %s5263, 63
        %s5265 = scalar_select %p5264, %s5263, 63
        %s5266 = smul.addr %s5265, 8
        %s5267 = scalar_lea.vmem %s13, %s5266
      $region84: #{learner_forward.1} parent=79 // pred_fallthru
        _
    $region80: #{learner_forward.1} parent=5 // pred_fallthru
      _
  $region6: #{learner_forward.1} parent=0 // loop_footer
    %s23 = sadd.s32 1, %s19
  $region7: #{learner_forward.1} parent=0 // loop_footer_branch
    %18 = sbr.rel target = $region3
  $region8: #{learner_forward.1} parent=0 // loop_exit
    _

</llo_original>
